<compile_context>
chip_gen: v6e
topology: v6e:2x2x1
jax: 0.10.0
libtpu: 0.0.40
codegen_flags: <defaults>
</compile_context>

<pallas_src>
import functools

import jax
import jax.numpy as jnp
from jax.experimental import pallas as pl
from jax.experimental.pallas import tpu as pltpu


def _round_up(x, m):
    return ((x + m - 1) // m) * m


# ---------------------------------------------------------------------------
# Fused kernel: single invocation, statically unrolled over hierarchy levels.
# ---------------------------------------------------------------------------
def _hmcn_fused_kernel(image_ref, word_ref,
                       w_label_ref, s_h_ref, cmask_ref,
                       w1_img_ref, w1_word_ref, w1_h_ref, b1_ref,
                       w2_ref, b2_ref, w3_ref, b3_ref,
                       scores_ref, global_ref,
                       *, num_levels, batch, seq):
    B, S = batch, seq

    image = image_ref[...]                                             # (B, I)
    word2 = word_ref[...]                                              # (B*S, W)
    W = word2.shape[-1]
    word3 = word2.reshape(B, S, W)                                     # (B, S, W)

    last_h = None
    for lvl in range(num_levels):                                      # static unroll
        # ---------------- TCA (collapsed to 2-D matmuls) ----------------
        # o = tanh(word @ W_label^T)            -> (B*S, L)
        o = jnp.tanh(jnp.dot(word2, w_label_ref[lvl],
                             preferred_element_type=jnp.float32))
        # attn[b,s,c] = S_h[c] . o[b,s]         -> (B*S, Cpad)
        attn = jnp.dot(o, s_h_ref[lvl], preferred_element_type=jnp.float32)
        Cp = attn.shape[-1]
        attn3 = attn.reshape(B, S, Cp)

        # softmax over the sequence axis S (== softmax over dim=-1 of torch's (B,C,S))
        m = jnp.max(attn3, axis=1, keepdims=True)
        e = jnp.exp(attn3 - m)
        denom = jnp.sum(e, axis=1, keepdims=True)
        attn_w = e * pl.reciprocal(denom, approx=True)                 # (B, S, Cpad)

        # mean over classes folded into cmask (1/C for real classes, 0 for padding):
        # tca = sum_s [ (1/C) sum_c attn_w[b,c,s] ] * word[b,s,:]
        wm = jnp.sum(attn_w * cmask_ref[lvl], axis=-1, keepdims=True)  # (B, S, 1)
        tca = jnp.sum(wm * word3, axis=1)                              # (B, W)

        # ---------------- ForwardUnit linears (values stay in vregs) ----------------
        # cat([image, tca, last_h]) @ W1^T + b1 == sum of partial matmuls.
        h = (jnp.dot(image, w1_img_ref[lvl], preferred_element_type=jnp.float32)
             + jnp.dot(tca, w1_word_ref[lvl], preferred_element_type=jnp.float32)
             + b1_ref[lvl])
        if lvl > 0:
            h = h + jnp.dot(last_h, w1_h_ref[lvl],
                            preferred_element_type=jnp.float32)
        hidden = jnp.maximum(h, 0.0)                                   # (B, H)

        local_feature = jnp.maximum(
            jnp.dot(hidden, w2_ref[lvl], preferred_element_type=jnp.float32)
            + b2_ref[lvl], 0.0)                                        # (B, H)

        logits = (jnp.dot(local_feature, w3_ref[lvl],
                          preferred_element_type=jnp.float32) + b3_ref[lvl])
        scores_ref[lvl] = pl.reciprocal(1.0 + jnp.exp(-logits), approx=True)

        last_h = hidden

    global_ref[...] = last_h                                           # (B, H)


# ---------------------------------------------------------------------------
# Host-side parameter construction / packing.
# ---------------------------------------------------------------------------
def init_hmcn_params(key, image_dim, word_dim, label_dim, hidden_dim,
                     num_classes_list):
    """Deterministic synthetic parameters matching the PyTorch module's shapes."""
    def lin(k, out_dim, in_dim):
        scale = 1.0 / jnp.sqrt(jnp.float32(in_dim))
        return jax.random.normal(k, (out_dim, in_dim), jnp.float32) * scale

    params = []
    for idx, num_classes in enumerate(num_classes_list):
        keys = jax.random.split(key, 11)
        key = keys[10]
        has_prev_h = idx > 0
        xavier_std = jnp.sqrt(2.0 / (num_classes + label_dim))
        p = dict(
            # TCA
            w_label=lin(keys[0], label_dim, word_dim),                # (L, W), no bias
            s_h=jax.random.normal(keys[1], (num_classes, label_dim),
                                  jnp.float32) * xavier_std,          # (C, L)
            # linear1: in = image + word + (hidden if idx>0 else 0)
            w1_img=lin(keys[2], hidden_dim, image_dim),               # (H, I)
            w1_word=lin(keys[3], hidden_dim, word_dim),               # (H, W)
            w1_h=(lin(keys[4], hidden_dim, hidden_dim) if has_prev_h
                  else jnp.zeros((hidden_dim, hidden_dim), jnp.float32)),  # unused at idx 0
            b1=jax.random.normal(keys[5], (1, hidden_dim), jnp.float32) * 0.01,
            # linear2
            w2=lin(keys[6], hidden_dim, hidden_dim),                  # (H, H)
            b2=jax.random.normal(keys[7], (1, hidden_dim), jnp.float32) * 0.01,
            # linear3
            w3=lin(keys[8], num_classes, hidden_dim),                 # (C, H)
            b3=jax.random.normal(keys[9], (1, num_classes), jnp.float32) * 0.01,
        )
        params.append(p)
    return params


def pack_hmcn_params(params, num_classes_list):
    """Stack per-level weights (pre-transposed to (in,out)), pad class dims to 128."""
    c_pad = _round_up(max(num_classes_list), 128)

    def pad_cols(a, target):
        return jnp.pad(a, ((0, 0), (0, target - a.shape[1])))

    packed = dict(
        w_label_t=jnp.stack([p['w_label'].T for p in params]),        # (Lv, W, L)
        s_h_t=jnp.stack([pad_cols(p['s_h'].T, c_pad) for p in params]),   # (Lv, L, Cp)
        cmask=jnp.stack([
            pad_cols(jnp.full((1, c), 1.0 / c, jnp.float32), c_pad)
            for c in num_classes_list]),                              # (Lv, 1, Cp)
        w1_img_t=jnp.stack([p['w1_img'].T for p in params]),          # (Lv, I, H)
        w1_word_t=jnp.stack([p['w1_word'].T for p in params]),        # (Lv, W, H)
        w1_h_t=jnp.stack([p['w1_h'].T for p in params]),              # (Lv, H, H)
        b1=jnp.stack([p['b1'] for p in params]),                      # (Lv, 1, H)
        w2_t=jnp.stack([p['w2'].T for p in params]),                  # (Lv, H, H)
        b2=jnp.stack([p['b2'] for p in params]),                      # (Lv, 1, H)
        w3_t=jnp.stack([pad_cols(p['w3'].T, c_pad) for p in params]), # (Lv, H, Cp)
        b3=jnp.stack([pad_cols(p['b3'], c_pad) for p in params]),     # (Lv, 1, Cp)
    )
    return packed


# ---------------------------------------------------------------------------
# Forward wrapper: ONE pallas_call, no grid, everything resident in VMEM.
# ---------------------------------------------------------------------------
def hmcn_f_forward(image_x, word_x, packed, num_classes_list, hidden_dim):
    B, S, W = word_x.shape
    Cp = packed['s_h_t'].shape[-1]
    H = hidden_dim
    Lv = len(num_classes_list)

    # Pad batch to a multiple of 8 so (B, ·) tiles fill vreg sublanes / MXU rows.
    Bp = max(8, _round_up(B, 8))
    image_p = jnp.pad(image_x, ((0, Bp - B), (0, 0)))
    word_p = jnp.pad(word_x, ((0, Bp - B), (0, 0), (0, 0)))
    word2d = word_p.reshape(Bp * S, W)

    kernel = functools.partial(_hmcn_fused_kernel,
                               num_levels=Lv, batch=Bp, seq=S)

    def vmem_spec():
        return pl.BlockSpec(memory_space=pltpu.MemorySpace.VMEM)

    args = (image_p, word2d,
            packed['w_label_t'], packed['s_h_t'], packed['cmask'],
            packed['w1_img_t'], packed['w1_word_t'], packed['w1_h_t'], packed['b1'],
            packed['w2_t'], packed['b2'], packed['w3_t'], packed['b3'])

    scores_pad, global_pad = pl.pallas_call(
        kernel,
        out_shape=(
            jax.ShapeDtypeStruct((Lv, Bp, Cp), jnp.float32),   # padded, lane-dense scores
            jax.ShapeDtypeStruct((Bp, H), jnp.float32),        # global feature (last hidden)
        ),
        in_specs=[vmem_spec() for _ in args],
        out_specs=(vmem_spec(), vmem_spec()),
    )(*args)

    global_feature = global_pad[:B]
    local_scores_list = [scores_pad[i, :B, :c]
                         for i, c in enumerate(num_classes_list)]
    return global_feature, local_scores_list


# ---------------------------------------------------------------------------
# Pure-JAX reference (mirrors the PyTorch module) for a correctness check.
# ---------------------------------------------------------------------------
def hmcn_f_reference(image_x, word_x, params):
    last_h = None
    scores_list = []
    for idx, p in enumerate(params):
        o = jnp.tanh(jnp.einsum('bsw,lw->bsl', word_x, p['w_label']))
        attn = jnp.einsum('cl,bsl->bcs', p['s_h'], o)
        w = jax.nn.softmax(attn, axis=-1)
        out = jnp.einsum('bcs,bsw->bcw', w, word_x)
        tca = jnp.mean(out, axis=1)
        pieces_x = [image_x, tca] + ([last_h] if idx > 0 else [])
        pieces_w = [p['w1_img'], p['w1_word']] + ([p['w1_h']] if idx > 0 else [])
        x = jnp.concatenate(pieces_x, axis=-1)
        w1 = jnp.concatenate(pieces_w, axis=1)
        h = jax.nn.relu(x @ w1.T + p['b1'])
        lf = jax.nn.relu(h @ p['w2'].T + p['b2'])
        sc = jax.nn.sigmoid(lf @ p['w3'].T + p['b3'])
        scores_list.append(sc)
        last_h = h
    return last_h, scores_list


if __name__ == "__main__":
    key = jax.random.PRNGKey(0)
    k_params, k_img, k_word = jax.random.split(key, 3)

    # Small shapes consistent with the module's forward.
    B, S = 2, 8                      # batch, word-sequence length
    IMAGE_DIM, WORD_DIM = 16, 32     # image_feature_dim, word_feature_dim
    LABEL_DIM, HIDDEN_DIM = 16, 32   # label_feature_dim, hidden_dim
    NUM_CLASSES_LIST = [8, 16, 24]   # per-level class counts

    params = init_hmcn_params(k_params, IMAGE_DIM, WORD_DIM, LABEL_DIM,
                              HIDDEN_DIM, NUM_CLASSES_LIST)
    packed = pack_hmcn_params(params, NUM_CLASSES_LIST)

    image_x = jax.random.normal(k_img, (B, IMAGE_DIM), jnp.float32)
    word_x = jax.random.normal(k_word, (B, S, WORD_DIM), jnp.float32)

    global_feature, local_scores_list = hmcn_f_forward(
        image_x, word_x, packed, NUM_CLASSES_LIST, HIDDEN_DIM)

    jax.block_until_ready(global_feature)
    for s in local_scores_list:
        jax.block_until_ready(s)

    assert global_feature.shape == (B, HIDDEN_DIM)
    for s, c in zip(local_scores_list, NUM_CLASSES_LIST):
        assert s.shape == (B, c)

    # Correctness check against the pure-JAX reference.
    # Tolerance 2e-2 intentionally covers the approx (EUP) reciprocals used for the
    # softmax denominator and the sigmoid (~1e-3 relative error) plus MXU rounding.
    ref_global, ref_scores = hmcn_f_reference(image_x, word_x, params)
    assert jnp.allclose(global_feature, ref_global, rtol=2e-2, atol=2e-2)
    for got, want in zip(local_scores_list, ref_scores):
        assert jnp.allclose(got, want, rtol=2e-2, atol=2e-2)

    print("KERNEL_OK")
</pallas_src>

<mosaic_0001>
module attributes {stable_mosaic.version = 11 : i64} {
  func.func @_hmcn_fused_kernel(%arg0: memref<8x16xf32, #tpu.memory_space<vmem>>, %arg1: memref<64x32xf32, #tpu.memory_space<vmem>>, %arg2: memref<3x32x16xf32, #tpu.memory_space<vmem>>, %arg3: memref<3x16x128xf32, #tpu.memory_space<vmem>>, %arg4: memref<3x1x128xf32, #tpu.memory_space<vmem>>, %arg5: memref<3x16x32xf32, #tpu.memory_space<vmem>>, %arg6: memref<3x32x32xf32, #tpu.memory_space<vmem>>, %arg7: memref<3x32x32xf32, #tpu.memory_space<vmem>>, %arg8: memref<3x1x32xf32, #tpu.memory_space<vmem>>, %arg9: memref<3x32x32xf32, #tpu.memory_space<vmem>>, %arg10: memref<3x1x32xf32, #tpu.memory_space<vmem>>, %arg11: memref<3x32x128xf32, #tpu.memory_space<vmem>>, %arg12: memref<3x1x128xf32, #tpu.memory_space<vmem>>, %arg13: memref<3x8x128xf32, #tpu.memory_space<vmem>>, %arg14: memref<8x32xf32, #tpu.memory_space<vmem>>) attributes {dimension_semantics = [], scalar_prefetch = 0 : i64, scratch_operands = 0 : i64, tpu.core_type = #tpu.core_type<tc>} {
    %c0 = arith.constant 0 : index
    %c0_0 = arith.constant 0 : index
    %0 = vector.load %arg0[%c0, %c0_0] : memref<8x16xf32, #tpu.memory_space<vmem>>, vector<8x16xf32>
    %c0_1 = arith.constant 0 : index
    %c0_2 = arith.constant 0 : index
    %1 = vector.load %arg1[%c0_1, %c0_2] : memref<64x32xf32, #tpu.memory_space<vmem>>, vector<64x32xf32>
    %2 = vector.shape_cast %1 : vector<64x32xf32> to vector<8x8x32xf32>
    %c0_3 = arith.constant 0 : index
    %c0_4 = arith.constant 0 : index
    %c0_5 = arith.constant 0 : index
    %3 = vector.load %arg2[%c0_3, %c0_4, %c0_5] : memref<3x32x16xf32, #tpu.memory_space<vmem>>, vector<1x32x16xf32>
    %4 = vector.shape_cast %3 : vector<1x32x16xf32> to vector<32x16xf32>
    %cst = arith.constant dense<0.000000e+00> : vector<64x16xf32>
    %5 = tpu.matmul %1, %4, %cst {dimension_numbers = #tpu.dot_dimension_numbers<[1], [0], [0], [1], [0, 0, 1, 1], [], []>} : vector<64x32xf32>, vector<32x16xf32>, vector<64x16xf32> -> vector<64x16xf32>
    %6 = math.tanh %5 : vector<64x16xf32>
    %c0_6 = arith.constant 0 : index
    %c0_7 = arith.constant 0 : index
    %c0_8 = arith.constant 0 : index
    %7 = vector.load %arg3[%c0_6, %c0_7, %c0_8] : memref<3x16x128xf32, #tpu.memory_space<vmem>>, vector<1x16x128xf32>
    %8 = vector.shape_cast %7 : vector<1x16x128xf32> to vector<16x128xf32>
    %cst_9 = arith.constant dense<0.000000e+00> : vector<64x128xf32>
    %9 = tpu.matmul %6, %8, %cst_9 {dimension_numbers = #tpu.dot_dimension_numbers<[1], [0], [0], [1], [0, 0, 1, 1], [], []>} : vector<64x16xf32>, vector<16x128xf32>, vector<64x128xf32> -> vector<64x128xf32>
    %10 = vector.shape_cast %9 : vector<64x128xf32> to vector<8x8x128xf32>
    %cst_10 = arith.constant dense<0xFF800000> : vector<8x128xf32>
    %11 = vector.multi_reduction <maximumf>, %10, %cst_10 [1] : vector<8x8x128xf32> to vector<8x128xf32>
    %12 = vector.shape_cast %11 : vector<8x128xf32> to vector<8x1x128xf32>
    %13 = vector.broadcast %12 : vector<8x1x128xf32> to vector<8x8x128xf32>
    %14 = arith.subf %10, %13 : vector<8x8x128xf32>
    %15 = math.exp %14 : vector<8x8x128xf32>
    %cst_11 = arith.constant dense<0.000000e+00> : vector<8x128xf32>
    %16 = vector.multi_reduction <add>, %15, %cst_11 [1] : vector<8x8x128xf32> to vector<8x128xf32>
    %17 = vector.shape_cast %16 : vector<8x128xf32> to vector<8x1x128xf32>
    %18 = tpu.reciprocal %17 {approx = true} : vector<8x1x128xf32> -> vector<8x1x128xf32>
    %19 = vector.broadcast %18 : vector<8x1x128xf32> to vector<8x8x128xf32>
    %20 = arith.mulf %15, %19 : vector<8x8x128xf32>
    %c0_12 = arith.constant 0 : index
    %c0_13 = arith.constant 0 : index
    %c0_14 = arith.constant 0 : index
    %21 = vector.load %arg4[%c0_12, %c0_13, %c0_14] : memref<3x1x128xf32, #tpu.memory_space<vmem>>, vector<1x1x128xf32>
    %22 = vector.shape_cast %21 : vector<1x1x128xf32> to vector<1x128xf32>
    %23 = vector.shape_cast %22 : vector<1x128xf32> to vector<1x1x128xf32>
    %24 = vector.broadcast %23 : vector<1x1x128xf32> to vector<8x8x128xf32>
    %25 = arith.mulf %20, %24 : vector<8x8x128xf32>
    %cst_15 = arith.constant dense<0.000000e+00> : vector<8x8xf32>
    %26 = vector.multi_reduction <add>, %25, %cst_15 [2] : vector<8x8x128xf32> to vector<8x8xf32>
    %27 = vector.shape_cast %26 : vector<8x8xf32> to vector<8x8x1xf32>
    %28 = vector.broadcast %27 : vector<8x8x1xf32> to vector<8x8x32xf32>
    %29 = arith.mulf %28, %2 : vector<8x8x32xf32>
    %cst_16 = arith.constant dense<0.000000e+00> : vector<8x32xf32>
    %30 = vector.multi_reduction <add>, %29, %cst_16 [1] : vector<8x8x32xf32> to vector<8x32xf32>
    %c0_17 = arith.constant 0 : index
    %c0_18 = arith.constant 0 : index
    %c0_19 = arith.constant 0 : index
    %31 = vector.load %arg5[%c0_17, %c0_18, %c0_19] : memref<3x16x32xf32, #tpu.memory_space<vmem>>, vector<1x16x32xf32>
    %32 = vector.shape_cast %31 : vector<1x16x32xf32> to vector<16x32xf32>
    %cst_20 = arith.constant dense<0.000000e+00> : vector<8x32xf32>
    %33 = tpu.matmul %0, %32, %cst_20 {dimension_numbers = #tpu.dot_dimension_numbers<[1], [0], [0], [1], [0, 0, 1, 1], [], []>} : vector<8x16xf32>, vector<16x32xf32>, vector<8x32xf32> -> vector<8x32xf32>
    %c0_21 = arith.constant 0 : index
    %c0_22 = arith.constant 0 : index
    %c0_23 = arith.constant 0 : index
    %34 = vector.load %arg6[%c0_21, %c0_22, %c0_23] : memref<3x32x32xf32, #tpu.memory_space<vmem>>, vector<1x32x32xf32>
    %35 = vector.shape_cast %34 : vector<1x32x32xf32> to vector<32x32xf32>
    %cst_24 = arith.constant dense<0.000000e+00> : vector<8x32xf32>
    %36 = tpu.matmul %30, %35, %cst_24 {dimension_numbers = #tpu.dot_dimension_numbers<[1], [0], [0], [1], [0, 0, 1, 1], [], []>} : vector<8x32xf32>, vector<32x32xf32>, vector<8x32xf32> -> vector<8x32xf32>
    %37 = arith.addf %33, %36 : vector<8x32xf32>
    %c0_25 = arith.constant 0 : index
    %c0_26 = arith.constant 0 : index
    %c0_27 = arith.constant 0 : index
    %38 = vector.load %arg8[%c0_25, %c0_26, %c0_27] : memref<3x1x32xf32, #tpu.memory_space<vmem>>, vector<1x1x32xf32>
    %39 = vector.shape_cast %38 : vector<1x1x32xf32> to vector<1x32xf32>
    %40 = vector.broadcast %39 : vector<1x32xf32> to vector<8x32xf32>
    %41 = arith.addf %37, %40 : vector<8x32xf32>
    %cst_28 = arith.constant 0.000000e+00 : f32
    %42 = vector.broadcast %cst_28 : f32 to vector<8x32xf32>
    %43 = arith.maximumf %41, %42 : vector<8x32xf32>
    %c0_29 = arith.constant 0 : index
    %c0_30 = arith.constant 0 : index
    %c0_31 = arith.constant 0 : index
    %44 = vector.load %arg9[%c0_29, %c0_30, %c0_31] : memref<3x32x32xf32, #tpu.memory_space<vmem>>, vector<1x32x32xf32>
    %45 = vector.shape_cast %44 : vector<1x32x32xf32> to vector<32x32xf32>
    %cst_32 = arith.constant dense<0.000000e+00> : vector<8x32xf32>
    %46 = tpu.matmul %43, %45, %cst_32 {dimension_numbers = #tpu.dot_dimension_numbers<[1], [0], [0], [1], [0, 0, 1, 1], [], []>} : vector<8x32xf32>, vector<32x32xf32>, vector<8x32xf32> -> vector<8x32xf32>
    %c0_33 = arith.constant 0 : index
    %c0_34 = arith.constant 0 : index
    %c0_35 = arith.constant 0 : index
    %47 = vector.load %arg10[%c0_33, %c0_34, %c0_35] : memref<3x1x32xf32, #tpu.memory_space<vmem>>, vector<1x1x32xf32>
    %48 = vector.shape_cast %47 : vector<1x1x32xf32> to vector<1x32xf32>
    %49 = vector.broadcast %48 : vector<1x32xf32> to vector<8x32xf32>
    %50 = arith.addf %46, %49 : vector<8x32xf32>
    %cst_36 = arith.constant 0.000000e+00 : f32
    %51 = vector.broadcast %cst_36 : f32 to vector<8x32xf32>
    %52 = arith.maximumf %50, %51 : vector<8x32xf32>
    %c0_37 = arith.constant 0 : index
    %c0_38 = arith.constant 0 : index
    %c0_39 = arith.constant 0 : index
    %53 = vector.load %arg11[%c0_37, %c0_38, %c0_39] : memref<3x32x128xf32, #tpu.memory_space<vmem>>, vector<1x32x128xf32>
    %54 = vector.shape_cast %53 : vector<1x32x128xf32> to vector<32x128xf32>
    %cst_40 = arith.constant dense<0.000000e+00> : vector<8x128xf32>
    %55 = tpu.matmul %52, %54, %cst_40 {dimension_numbers = #tpu.dot_dimension_numbers<[1], [0], [0], [1], [0, 0, 1, 1], [], []>} : vector<8x32xf32>, vector<32x128xf32>, vector<8x128xf32> -> vector<8x128xf32>
    %c0_41 = arith.constant 0 : index
    %c0_42 = arith.constant 0 : index
    %c0_43 = arith.constant 0 : index
    %56 = vector.load %arg12[%c0_41, %c0_42, %c0_43] : memref<3x1x128xf32, #tpu.memory_space<vmem>>, vector<1x1x128xf32>
    %57 = vector.shape_cast %56 : vector<1x1x128xf32> to vector<1x128xf32>
    %58 = vector.broadcast %57 : vector<1x128xf32> to vector<8x128xf32>
    %59 = arith.addf %55, %58 : vector<8x128xf32>
    %cst_44 = arith.constant 0.000000e+00 : f32
    %60 = vector.broadcast %cst_44 : f32 to vector<8x128xf32>
    %61 = arith.subf %60, %59 : vector<8x128xf32>
    %62 = math.exp %61 : vector<8x128xf32>
    %cst_45 = arith.constant 1.000000e+00 : f32
    %63 = vector.broadcast %cst_45 : f32 to vector<8x128xf32>
    %64 = arith.addf %63, %62 : vector<8x128xf32>
    %65 = tpu.reciprocal %64 {approx = true} : vector<8x128xf32> -> vector<8x128xf32>
    %c0_46 = arith.constant 0 : index
    %c0_47 = arith.constant 0 : index
    %c0_48 = arith.constant 0 : index
    %66 = vector.load %arg13[%c0_46, %c0_47, %c0_48] : memref<3x8x128xf32, #tpu.memory_space<vmem>>, vector<1x8x128xf32>
    %67 = vector.shape_cast %66 : vector<1x8x128xf32> to vector<8x128xf32>
    %68 = vector.shape_cast %65 : vector<8x128xf32> to vector<1x8x128xf32>
    tpu.vector_store %arg13[%c0_46, %c0_47, %c0_48], %68 {strides = array<i32>} : memref<3x8x128xf32, #tpu.memory_space<vmem>>, vector<1x8x128xf32>,
    %c1 = arith.constant 1 : index
    %c0_49 = arith.constant 0 : index
    %c0_50 = arith.constant 0 : index
    %69 = vector.load %arg2[%c1, %c0_49, %c0_50] : memref<3x32x16xf32, #tpu.memory_space<vmem>>, vector<1x32x16xf32>
    %70 = vector.shape_cast %69 : vector<1x32x16xf32> to vector<32x16xf32>
    %cst_51 = arith.constant dense<0.000000e+00> : vector<64x16xf32>
    %71 = tpu.matmul %1, %70, %cst_51 {dimension_numbers = #tpu.dot_dimension_numbers<[1], [0], [0], [1], [0, 0, 1, 1], [], []>} : vector<64x32xf32>, vector<32x16xf32>, vector<64x16xf32> -> vector<64x16xf32>
    %72 = math.tanh %71 : vector<64x16xf32>
    %c1_52 = arith.constant 1 : index
    %c0_53 = arith.constant 0 : index
    %c0_54 = arith.constant 0 : index
    %73 = vector.load %arg3[%c1_52, %c0_53, %c0_54] : memref<3x16x128xf32, #tpu.memory_space<vmem>>, vector<1x16x128xf32>
    %74 = vector.shape_cast %73 : vector<1x16x128xf32> to vector<16x128xf32>
    %cst_55 = arith.constant dense<0.000000e+00> : vector<64x128xf32>
    %75 = tpu.matmul %72, %74, %cst_55 {dimension_numbers = #tpu.dot_dimension_numbers<[1], [0], [0], [1], [0, 0, 1, 1], [], []>} : vector<64x16xf32>, vector<16x128xf32>, vector<64x128xf32> -> vector<64x128xf32>
    %76 = vector.shape_cast %75 : vector<64x128xf32> to vector<8x8x128xf32>
    %cst_56 = arith.constant dense<0xFF800000> : vector<8x128xf32>
    %77 = vector.multi_reduction <maximumf>, %76, %cst_56 [1] : vector<8x8x128xf32> to vector<8x128xf32>
    %78 = vector.shape_cast %77 : vector<8x128xf32> to vector<8x1x128xf32>
    %79 = vector.broadcast %78 : vector<8x1x128xf32> to vector<8x8x128xf32>
    %80 = arith.subf %76, %79 : vector<8x8x128xf32>
    %81 = math.exp %80 : vector<8x8x128xf32>
    %cst_57 = arith.constant dense<0.000000e+00> : vector<8x128xf32>
    %82 = vector.multi_reduction <add>, %81, %cst_57 [1] : vector<8x8x128xf32> to vector<8x128xf32>
    %83 = vector.shape_cast %82 : vector<8x128xf32> to vector<8x1x128xf32>
    %84 = tpu.reciprocal %83 {approx = true} : vector<8x1x128xf32> -> vector<8x1x128xf32>
    %85 = vector.broadcast %84 : vector<8x1x128xf32> to vector<8x8x128xf32>
    %86 = arith.mulf %81, %85 : vector<8x8x128xf32>
    %c1_58 = arith.constant 1 : index
    %c0_59 = arith.constant 0 : index
    %c0_60 = arith.constant 0 : index
    %87 = vector.load %arg4[%c1_58, %c0_59, %c0_60] : memref<3x1x128xf32, #tpu.memory_space<vmem>>, vector<1x1x128xf32>
    %88 = vector.shape_cast %87 : vector<1x1x128xf32> to vector<1x128xf32>
    %89 = vector.shape_cast %88 : vector<1x128xf32> to vector<1x1x128xf32>
    %90 = vector.broadcast %89 : vector<1x1x128xf32> to vector<8x8x128xf32>
    %91 = arith.mulf %86, %90 : vector<8x8x128xf32>
    %cst_61 = arith.constant dense<0.000000e+00> : vector<8x8xf32>
    %92 = vector.multi_reduction <add>, %91, %cst_61 [2] : vector<8x8x128xf32> to vector<8x8xf32>
    %93 = vector.shape_cast %92 : vector<8x8xf32> to vector<8x8x1xf32>
    %94 = vector.broadcast %93 : vector<8x8x1xf32> to vector<8x8x32xf32>
    %95 = arith.mulf %94, %2 : vector<8x8x32xf32>
    %cst_62 = arith.constant dense<0.000000e+00> : vector<8x32xf32>
    %96 = vector.multi_reduction <add>, %95, %cst_62 [1] : vector<8x8x32xf32> to vector<8x32xf32>
    %c1_63 = arith.constant 1 : index
    %c0_64 = arith.constant 0 : index
    %c0_65 = arith.constant 0 : index
    %97 = vector.load %arg5[%c1_63, %c0_64, %c0_65] : memref<3x16x32xf32, #tpu.memory_space<vmem>>, vector<1x16x32xf32>
    %98 = vector.shape_cast %97 : vector<1x16x32xf32> to vector<16x32xf32>
    %cst_66 = arith.constant dense<0.000000e+00> : vector<8x32xf32>
    %99 = tpu.matmul %0, %98, %cst_66 {dimension_numbers = #tpu.dot_dimension_numbers<[1], [0], [0], [1], [0, 0, 1, 1], [], []>} : vector<8x16xf32>, vector<16x32xf32>, vector<8x32xf32> -> vector<8x32xf32>
    %c1_67 = arith.constant 1 : index
    %c0_68 = arith.constant 0 : index
    %c0_69 = arith.constant 0 : index
    %100 = vector.load %arg6[%c1_67, %c0_68, %c0_69] : memref<3x32x32xf32, #tpu.memory_space<vmem>>, vector<1x32x32xf32>
    %101 = vector.shape_cast %100 : vector<1x32x32xf32> to vector<32x32xf32>
    %cst_70 = arith.constant dense<0.000000e+00> : vector<8x32xf32>
    %102 = tpu.matmul %96, %101, %cst_70 {dimension_numbers = #tpu.dot_dimension_numbers<[1], [0], [0], [1], [0, 0, 1, 1], [], []>} : vector<8x32xf32>, vector<32x32xf32>, vector<8x32xf32> -> vector<8x32xf32>
    %103 = arith.addf %99, %102 : vector<8x32xf32>
    %c1_71 = arith.constant 1 : index
    %c0_72 = arith.constant 0 : index
    %c0_73 = arith.constant 0 : index
    %104 = vector.load %arg8[%c1_71, %c0_72, %c0_73] : memref<3x1x32xf32, #tpu.memory_space<vmem>>, vector<1x1x32xf32>
    %105 = vector.shape_cast %104 : vector<1x1x32xf32> to vector<1x32xf32>
    %106 = vector.broadcast %105 : vector<1x32xf32> to vector<8x32xf32>
    %107 = arith.addf %103, %106 : vector<8x32xf32>
    %c1_74 = arith.constant 1 : index
    %c0_75 = arith.constant 0 : index
    %c0_76 = arith.constant 0 : index
    %108 = vector.load %arg7[%c1_74, %c0_75, %c0_76] : memref<3x32x32xf32, #tpu.memory_space<vmem>>, vector<1x32x32xf32>
    %109 = vector.shape_cast %108 : vector<1x32x32xf32> to vector<32x32xf32>
    %cst_77 = arith.constant dense<0.000000e+00> : vector<8x32xf32>
    %110 = tpu.matmul %43, %109, %cst_77 {dimension_numbers = #tpu.dot_dimension_numbers<[1], [0], [0], [1], [0, 0, 1, 1], [], []>} : vector<8x32xf32>, vector<32x32xf32>, vector<8x32xf32> -> vector<8x32xf32>
    %111 = arith.addf %107, %110 : vector<8x32xf32>
    %cst_78 = arith.constant 0.000000e+00 : f32
    %112 = vector.broadcast %cst_78 : f32 to vector<8x32xf32>
    %113 = arith.maximumf %111, %112 : vector<8x32xf32>
    %c1_79 = arith.constant 1 : index
    %c0_80 = arith.constant 0 : index
    %c0_81 = arith.constant 0 : index
    %114 = vector.load %arg9[%c1_79, %c0_80, %c0_81] : memref<3x32x32xf32, #tpu.memory_space<vmem>>, vector<1x32x32xf32>
    %115 = vector.shape_cast %114 : vector<1x32x32xf32> to vector<32x32xf32>
    %cst_82 = arith.constant dense<0.000000e+00> : vector<8x32xf32>
    %116 = tpu.matmul %113, %115, %cst_82 {dimension_numbers = #tpu.dot_dimension_numbers<[1], [0], [0], [1], [0, 0, 1, 1], [], []>} : vector<8x32xf32>, vector<32x32xf32>, vector<8x32xf32> -> vector<8x32xf32>
    %c1_83 = arith.constant 1 : index
    %c0_84 = arith.constant 0 : index
    %c0_85 = arith.constant 0 : index
    %117 = vector.load %arg10[%c1_83, %c0_84, %c0_85] : memref<3x1x32xf32, #tpu.memory_space<vmem>>, vector<1x1x32xf32>
    %118 = vector.shape_cast %117 : vector<1x1x32xf32> to vector<1x32xf32>
    %119 = vector.broadcast %118 : vector<1x32xf32> to vector<8x32xf32>
    %120 = arith.addf %116, %119 : vector<8x32xf32>
    %cst_86 = arith.constant 0.000000e+00 : f32
    %121 = vector.broadcast %cst_86 : f32 to vector<8x32xf32>
    %122 = arith.maximumf %120, %121 : vector<8x32xf32>
    %c1_87 = arith.constant 1 : index
    %c0_88 = arith.constant 0 : index
    %c0_89 = arith.constant 0 : index
    %123 = vector.load %arg11[%c1_87, %c0_88, %c0_89] : memref<3x32x128xf32, #tpu.memory_space<vmem>>, vector<1x32x128xf32>
    %124 = vector.shape_cast %123 : vector<1x32x128xf32> to vector<32x128xf32>
    %cst_90 = arith.constant dense<0.000000e+00> : vector<8x128xf32>
    %125 = tpu.matmul %122, %124, %cst_90 {dimension_numbers = #tpu.dot_dimension_numbers<[1], [0], [0], [1], [0, 0, 1, 1], [], []>} : vector<8x32xf32>, vector<32x128xf32>, vector<8x128xf32> -> vector<8x128xf32>
    %c1_91 = arith.constant 1 : index
    %c0_92 = arith.constant 0 : index
    %c0_93 = arith.constant 0 : index
    %126 = vector.load %arg12[%c1_91, %c0_92, %c0_93] : memref<3x1x128xf32, #tpu.memory_space<vmem>>, vector<1x1x128xf32>
    %127 = vector.shape_cast %126 : vector<1x1x128xf32> to vector<1x128xf32>
    %128 = vector.broadcast %127 : vector<1x128xf32> to vector<8x128xf32>
    %129 = arith.addf %125, %128 : vector<8x128xf32>
    %cst_94 = arith.constant 0.000000e+00 : f32
    %130 = vector.broadcast %cst_94 : f32 to vector<8x128xf32>
    %131 = arith.subf %130, %129 : vector<8x128xf32>
    %132 = math.exp %131 : vector<8x128xf32>
    %cst_95 = arith.constant 1.000000e+00 : f32
    %133 = vector.broadcast %cst_95 : f32 to vector<8x128xf32>
    %134 = arith.addf %133, %132 : vector<8x128xf32>
    %135 = tpu.reciprocal %134 {approx = true} : vector<8x128xf32> -> vector<8x128xf32>
    %c1_96 = arith.constant 1 : index
    %c0_97 = arith.constant 0 : index
    %c0_98 = arith.constant 0 : index
    %136 = vector.load %arg13[%c1_96, %c0_97, %c0_98] : memref<3x8x128xf32, #tpu.memory_space<vmem>>, vector<1x8x128xf32>
    %137 = vector.shape_cast %136 : vector<1x8x128xf32> to vector<8x128xf32>
    %138 = vector.shape_cast %135 : vector<8x128xf32> to vector<1x8x128xf32>
    tpu.vector_store %arg13[%c1_96, %c0_97, %c0_98], %138 {strides = array<i32>} : memref<3x8x128xf32, #tpu.memory_space<vmem>>, vector<1x8x128xf32>,
    %c2 = arith.constant 2 : index
    %c0_99 = arith.constant 0 : index
    %c0_100 = arith.constant 0 : index
    %139 = vector.load %arg2[%c2, %c0_99, %c0_100] : memref<3x32x16xf32, #tpu.memory_space<vmem>>, vector<1x32x16xf32>
    %140 = vector.shape_cast %139 : vector<1x32x16xf32> to vector<32x16xf32>
    %cst_101 = arith.constant dense<0.000000e+00> : vector<64x16xf32>
    %141 = tpu.matmul %1, %140, %cst_101 {dimension_numbers = #tpu.dot_dimension_numbers<[1], [0], [0], [1], [0, 0, 1, 1], [], []>} : vector<64x32xf32>, vector<32x16xf32>, vector<64x16xf32> -> vector<64x16xf32>
    %142 = math.tanh %141 : vector<64x16xf32>
    %c2_102 = arith.constant 2 : index
    %c0_103 = arith.constant 0 : index
    %c0_104 = arith.constant 0 : index
    %143 = vector.load %arg3[%c2_102, %c0_103, %c0_104] : memref<3x16x128xf32, #tpu.memory_space<vmem>>, vector<1x16x128xf32>
    %144 = vector.shape_cast %143 : vector<1x16x128xf32> to vector<16x128xf32>
    %cst_105 = arith.constant dense<0.000000e+00> : vector<64x128xf32>
    %145 = tpu.matmul %142, %144, %cst_105 {dimension_numbers = #tpu.dot_dimension_numbers<[1], [0], [0], [1], [0, 0, 1, 1], [], []>} : vector<64x16xf32>, vector<16x128xf32>, vector<64x128xf32> -> vector<64x128xf32>
    %146 = vector.shape_cast %145 : vector<64x128xf32> to vector<8x8x128xf32>
    %cst_106 = arith.constant dense<0xFF800000> : vector<8x128xf32>
    %147 = vector.multi_reduction <maximumf>, %146, %cst_106 [1] : vector<8x8x128xf32> to vector<8x128xf32>
    %148 = vector.shape_cast %147 : vector<8x128xf32> to vector<8x1x128xf32>
    %149 = vector.broadcast %148 : vector<8x1x128xf32> to vector<8x8x128xf32>
    %150 = arith.subf %146, %149 : vector<8x8x128xf32>
    %151 = math.exp %150 : vector<8x8x128xf32>
    %cst_107 = arith.constant dense<0.000000e+00> : vector<8x128xf32>
    %152 = vector.multi_reduction <add>, %151, %cst_107 [1] : vector<8x8x128xf32> to vector<8x128xf32>
    %153 = vector.shape_cast %152 : vector<8x128xf32> to vector<8x1x128xf32>
    %154 = tpu.reciprocal %153 {approx = true} : vector<8x1x128xf32> -> vector<8x1x128xf32>
    %155 = vector.broadcast %154 : vector<8x1x128xf32> to vector<8x8x128xf32>
    %156 = arith.mulf %151, %155 : vector<8x8x128xf32>
    %c2_108 = arith.constant 2 : index
    %c0_109 = arith.constant 0 : index
    %c0_110 = arith.constant 0 : index
    %157 = vector.load %arg4[%c2_108, %c0_109, %c0_110] : memref<3x1x128xf32, #tpu.memory_space<vmem>>, vector<1x1x128xf32>
    %158 = vector.shape_cast %157 : vector<1x1x128xf32> to vector<1x128xf32>
    %159 = vector.shape_cast %158 : vector<1x128xf32> to vector<1x1x128xf32>
    %160 = vector.broadcast %159 : vector<1x1x128xf32> to vector<8x8x128xf32>
    %161 = arith.mulf %156, %160 : vector<8x8x128xf32>
    %cst_111 = arith.constant dense<0.000000e+00> : vector<8x8xf32>
    %162 = vector.multi_reduction <add>, %161, %cst_111 [2] : vector<8x8x128xf32> to vector<8x8xf32>
    %163 = vector.shape_cast %162 : vector<8x8xf32> to vector<8x8x1xf32>
    %164 = vector.broadcast %163 : vector<8x8x1xf32> to vector<8x8x32xf32>
    %165 = arith.mulf %164, %2 : vector<8x8x32xf32>
    %cst_112 = arith.constant dense<0.000000e+00> : vector<8x32xf32>
    %166 = vector.multi_reduction <add>, %165, %cst_112 [1] : vector<8x8x32xf32> to vector<8x32xf32>
    %c2_113 = arith.constant 2 : index
    %c0_114 = arith.constant 0 : index
    %c0_115 = arith.constant 0 : index
    %167 = vector.load %arg5[%c2_113, %c0_114, %c0_115] : memref<3x16x32xf32, #tpu.memory_space<vmem>>, vector<1x16x32xf32>
    %168 = vector.shape_cast %167 : vector<1x16x32xf32> to vector<16x32xf32>
    %cst_116 = arith.constant dense<0.000000e+00> : vector<8x32xf32>
    %169 = tpu.matmul %0, %168, %cst_116 {dimension_numbers = #tpu.dot_dimension_numbers<[1], [0], [0], [1], [0, 0, 1, 1], [], []>} : vector<8x16xf32>, vector<16x32xf32>, vector<8x32xf32> -> vector<8x32xf32>
    %c2_117 = arith.constant 2 : index
    %c0_118 = arith.constant 0 : index
    %c0_119 = arith.constant 0 : index
    %170 = vector.load %arg6[%c2_117, %c0_118, %c0_119] : memref<3x32x32xf32, #tpu.memory_space<vmem>>, vector<1x32x32xf32>
    %171 = vector.shape_cast %170 : vector<1x32x32xf32> to vector<32x32xf32>
    %cst_120 = arith.constant dense<0.000000e+00> : vector<8x32xf32>
    %172 = tpu.matmul %166, %171, %cst_120 {dimension_numbers = #tpu.dot_dimension_numbers<[1], [0], [0], [1], [0, 0, 1, 1], [], []>} : vector<8x32xf32>, vector<32x32xf32>, vector<8x32xf32> -> vector<8x32xf32>
    %173 = arith.addf %169, %172 : vector<8x32xf32>
    %c2_121 = arith.constant 2 : index
    %c0_122 = arith.constant 0 : index
    %c0_123 = arith.constant 0 : index
    %174 = vector.load %arg8[%c2_121, %c0_122, %c0_123] : memref<3x1x32xf32, #tpu.memory_space<vmem>>, vector<1x1x32xf32>
    %175 = vector.shape_cast %174 : vector<1x1x32xf32> to vector<1x32xf32>
    %176 = vector.broadcast %175 : vector<1x32xf32> to vector<8x32xf32>
    %177 = arith.addf %173, %176 : vector<8x32xf32>
    %c2_124 = arith.constant 2 : index
    %c0_125 = arith.constant 0 : index
    %c0_126 = arith.constant 0 : index
    %178 = vector.load %arg7[%c2_124, %c0_125, %c0_126] : memref<3x32x32xf32, #tpu.memory_space<vmem>>, vector<1x32x32xf32>
    %179 = vector.shape_cast %178 : vector<1x32x32xf32> to vector<32x32xf32>
    %cst_127 = arith.constant dense<0.000000e+00> : vector<8x32xf32>
    %180 = tpu.matmul %113, %179, %cst_127 {dimension_numbers = #tpu.dot_dimension_numbers<[1], [0], [0], [1], [0, 0, 1, 1], [], []>} : vector<8x32xf32>, vector<32x32xf32>, vector<8x32xf32> -> vector<8x32xf32>
    %181 = arith.addf %177, %180 : vector<8x32xf32>
    %cst_128 = arith.constant 0.000000e+00 : f32
    %182 = vector.broadcast %cst_128 : f32 to vector<8x32xf32>
    %183 = arith.maximumf %181, %182 : vector<8x32xf32>
    %c2_129 = arith.constant 2 : index
    %c0_130 = arith.constant 0 : index
    %c0_131 = arith.constant 0 : index
    %184 = vector.load %arg9[%c2_129, %c0_130, %c0_131] : memref<3x32x32xf32, #tpu.memory_space<vmem>>, vector<1x32x32xf32>
    %185 = vector.shape_cast %184 : vector<1x32x32xf32> to vector<32x32xf32>
    %cst_132 = arith.constant dense<0.000000e+00> : vector<8x32xf32>
    %186 = tpu.matmul %183, %185, %cst_132 {dimension_numbers = #tpu.dot_dimension_numbers<[1], [0], [0], [1], [0, 0, 1, 1], [], []>} : vector<8x32xf32>, vector<32x32xf32>, vector<8x32xf32> -> vector<8x32xf32>
    %c2_133 = arith.constant 2 : index
    %c0_134 = arith.constant 0 : index
    %c0_135 = arith.constant 0 : index
    %187 = vector.load %arg10[%c2_133, %c0_134, %c0_135] : memref<3x1x32xf32, #tpu.memory_space<vmem>>, vector<1x1x32xf32>
    %188 = vector.shape_cast %187 : vector<1x1x32xf32> to vector<1x32xf32>
    %189 = vector.broadcast %188 : vector<1x32xf32> to vector<8x32xf32>
    %190 = arith.addf %186, %189 : vector<8x32xf32>
    %cst_136 = arith.constant 0.000000e+00 : f32
    %191 = vector.broadcast %cst_136 : f32 to vector<8x32xf32>
    %192 = arith.maximumf %190, %191 : vector<8x32xf32>
    %c2_137 = arith.constant 2 : index
    %c0_138 = arith.constant 0 : index
    %c0_139 = arith.constant 0 : index
    %193 = vector.load %arg11[%c2_137, %c0_138, %c0_139] : memref<3x32x128xf32, #tpu.memory_space<vmem>>, vector<1x32x128xf32>
    %194 = vector.shape_cast %193 : vector<1x32x128xf32> to vector<32x128xf32>
    %cst_140 = arith.constant dense<0.000000e+00> : vector<8x128xf32>
    %195 = tpu.matmul %192, %194, %cst_140 {dimension_numbers = #tpu.dot_dimension_numbers<[1], [0], [0], [1], [0, 0, 1, 1], [], []>} : vector<8x32xf32>, vector<32x128xf32>, vector<8x128xf32> -> vector<8x128xf32>
    %c2_141 = arith.constant 2 : index
    %c0_142 = arith.constant 0 : index
    %c0_143 = arith.constant 0 : index
    %196 = vector.load %arg12[%c2_141, %c0_142, %c0_143] : memref<3x1x128xf32, #tpu.memory_space<vmem>>, vector<1x1x128xf32>
    %197 = vector.shape_cast %196 : vector<1x1x128xf32> to vector<1x128xf32>
    %198 = vector.broadcast %197 : vector<1x128xf32> to vector<8x128xf32>
    %199 = arith.addf %195, %198 : vector<8x128xf32>
    %cst_144 = arith.constant 0.000000e+00 : f32
    %200 = vector.broadcast %cst_144 : f32 to vector<8x128xf32>
    %201 = arith.subf %200, %199 : vector<8x128xf32>
    %202 = math.exp %201 : vector<8x128xf32>
    %cst_145 = arith.constant 1.000000e+00 : f32
    %203 = vector.broadcast %cst_145 : f32 to vector<8x128xf32>
    %204 = arith.addf %203, %202 : vector<8x128xf32>
    %205 = tpu.reciprocal %204 {approx = true} : vector<8x128xf32> -> vector<8x128xf32>
    %c2_146 = arith.constant 2 : index
    %c0_147 = arith.constant 0 : index
    %c0_148 = arith.constant 0 : index
    %206 = vector.load %arg13[%c2_146, %c0_147, %c0_148] : memref<3x8x128xf32, #tpu.memory_space<vmem>>, vector<1x8x128xf32>
    %207 = vector.shape_cast %206 : vector<1x8x128xf32> to vector<8x128xf32>
    %208 = vector.shape_cast %205 : vector<8x128xf32> to vector<1x8x128xf32>
    tpu.vector_store %arg13[%c2_146, %c0_147, %c0_148], %208 {strides = array<i32>} : memref<3x8x128xf32, #tpu.memory_space<vmem>>, vector<1x8x128xf32>,
    %c0_149 = arith.constant 0 : index
    %c0_150 = arith.constant 0 : index
    %209 = vector.load %arg14[%c0_149, %c0_150] : memref<8x32xf32, #tpu.memory_space<vmem>>, vector<8x32xf32>
    tpu.vector_store %arg14[%c0_149, %c0_150], %183 {strides = array<i32>} : memref<8x32xf32, #tpu.memory_space<vmem>>, vector<8x32xf32>,
    return
  }
}

</mosaic_0001>

<llo_original>
// kernel: tpu_custom_call.1
$region0: #{tpu_custom_call.1}
  #allocation0 [shape = 'u32[]', space=smem, size = 0x4, offset = 0x4, fixed_abs, tag = 'smem constant byte address 0x4 - core index']
  #allocation1 [shape = 'u32[144,128]{1,0:T(1,128)}', space=vmem, size = 0x12000, scoped, tag = 'internal scratch']
  %s0 = inlined_call_operand.hbm [shape: f32[8,16], index: 0, kind: input, shape index: {}]
  %s1 = inlined_call_operand.vmem [shape: f32[64,32], index: 1, kind: input, shape index: {}]
  %s2 = inlined_call_operand.vmem [shape: f32[3,32,16], index: 2, kind: input, shape index: {}]
  %s3 = inlined_call_operand.hbm [shape: f32[3,16,128], index: 3, kind: input, shape index: {}]
  %s4 = inlined_call_operand.vmem [shape: f32[3,1,128], index: 4, kind: input, shape index: {}]
  %s5 = inlined_call_operand.hbm [shape: f32[3,16,32], index: 5, kind: input, shape index: {}]
  %s6 = inlined_call_operand.vmem [shape: f32[3,32,32], index: 6, kind: input, shape index: {}]
  %s7 = inlined_call_operand.vmem [shape: f32[3,32,32], index: 7, kind: input, shape index: {}]
  %s8 = inlined_call_operand.vmem [shape: f32[3,1,32], index: 8, kind: input, shape index: {}]
  %s9 = inlined_call_operand.hbm [shape: f32[3,32,32], index: 9, kind: input, shape index: {}]
  %s10 = inlined_call_operand.vmem [shape: f32[3,1,32], index: 10, kind: input, shape index: {}]
  %s11 = inlined_call_operand.hbm [shape: f32[3,32,128], index: 11, kind: input, shape index: {}]
  %s12 = inlined_call_operand.vmem [shape: f32[3,1,128], index: 12, kind: input, shape index: {}]
  %s13 = inlined_call_operand.hbm [shape: f32[3,8,128], index: 13, kind: output, shape index: {0}]
  %s14 = inlined_call_operand.hbm [shape: f32[8,32], index: 14, kind: output, shape index: {1}]
  %15 = xla_tuple %s13, %s14
  %s16 = sld [smem:[#allocation0]]
  $region90: #{tpu_custom_call.1} parent=0
    _
  %s18 = ssub.s32 1, %s16
  %s19 = scalar_select 0, %s18, %s16
  $region1: #{tpu_custom_call.1} parent=0
    #allocation2 [shape = 'u8[4096]{0}', space=vmem, size = 0x1000, scoped, tag = 'input window, operand 0, single buffered']
    #allocation3 [shape = 's32[1]{0}', space=sflag, size = 0x4, scoped, tag = 'scoped memory for tpu_custom_call.1']
    #allocation4 [shape = 's32[1]{0}', space=sflag, size = 0x4, scoped, tag = 'scoped memory for tpu_custom_call.1']
    #allocation5 [shape = 'u8[24576]{0}', space=vmem, size = 0x6000, scoped, tag = 'input window, operand 3, single buffered']
    #allocation6 [shape = 's32[1]{0}', space=sflag, size = 0x4, scoped, tag = 'scoped memory for tpu_custom_call.1']
    #allocation7 [shape = 'u8[24576]{0}', space=vmem, size = 0x6000, scoped, tag = 'input window, operand 5, single buffered']
    #allocation8 [shape = 'u8[49152]{0}', space=vmem, size = 0xc000, scoped, tag = 'input window, operand 9, single buffered']
    #allocation9 [shape = 's32[1]{0}', space=sflag, size = 0x4, scoped, tag = 'scoped memory for tpu_custom_call.1']
    #allocation10 [shape = 'u8[49152]{0}', space=vmem, size = 0xc000, scoped, tag = 'input window, operand 11, single buffered']
    #allocation11 [shape = 'u8[12288]{0}', space=vmem, size = 0x3000, scoped, tag = 'output window, operand 0, single buffered']
    #allocation12 [shape = 'u8[4096]{0}', space=vmem, size = 0x1000, scoped, tag = 'output window, operand 1, single buffered']
    #allocation13 [shape = 's32[1]{0}', space=sflag, size = 0x4, scoped, tag = 'scoped memory for tpu_custom_call.1']
    %20 = vsyncpa [#allocation3], 0
    %21 = vsyncpa [#allocation6], 0
    %22 = vsyncpa [#allocation9], 0
    %23 = vsyncpa [#allocation4], 0
    %24 = vsyncpa [#allocation13], 0
    // Predicated region
    $region2: #{tpu_custom_call.1} parent=1 // pred_check
      _
    $region3: #{tpu_custom_call.1} parent=1 // pred_check_branch
      %26 = sbr.rel (0) target = $region5
    $region4: #{tpu_custom_call.1} parent=1 // pred_region
      %s28 = ssub.s32 128, 128
      %29 = vsyncadd [#allocation3], %s28
      %s31 = sshll.u32 [#allocation2], 4
      %s32 = int_to_ptr.vmem [resolvable:$true] %s31
      %34 = dma.hbm_to_vmem [thread:$0]  %s0, 128, %s32, [#allocation3]
    $region5: #{tpu_custom_call.1} parent=1 // pred_fallthru
      _
    // Predicated region
    $region6: #{tpu_custom_call.1} parent=1 // pred_check
      _
    $region7: #{tpu_custom_call.1} parent=1 // pred_check_branch
      %36 = sbr.rel (0) target = $region9
    $region8: #{tpu_custom_call.1} parent=1 // pred_region
      _
    $region9: #{tpu_custom_call.1} parent=1 // pred_fallthru
      _
    // Predicated region
    $region10: #{tpu_custom_call.1} parent=1 // pred_check
      _
    $region11: #{tpu_custom_call.1} parent=1 // pred_check_branch
      %38 = sbr.rel (0) target = $region13
    $region12: #{tpu_custom_call.1} parent=1 // pred_region
      _
    $region13: #{tpu_custom_call.1} parent=1 // pred_fallthru
      _
    // Predicated region
    $region14: #{tpu_custom_call.1} parent=1 // pred_check
      _
    $region15: #{tpu_custom_call.1} parent=1 // pred_check_branch
      %40 = sbr.rel (0) target = $region17
    $region16: #{tpu_custom_call.1} parent=1 // pred_region
      %s42 = ssub.s32 768, 768
      %43 = vsyncadd [#allocation6], %s42
      %s44 = sshll.u32 [#allocation5], 4
      %s45 = int_to_ptr.vmem [resolvable:$true] %s44
      %50 = dma.hbm_to_vmem [thread:$0]  %s3, 768, %s45, [#allocation6], 128, 128, 8
    $region17: #{tpu_custom_call.1} parent=1 // pred_fallthru
      _
    // Predicated region
    $region18: #{tpu_custom_call.1} parent=1 // pred_check
      _
    $region19: #{tpu_custom_call.1} parent=1 // pred_check_branch
      %52 = sbr.rel (0) target = $region21
    $region20: #{tpu_custom_call.1} parent=1 // pred_region
      _
    $region21: #{tpu_custom_call.1} parent=1 // pred_fallthru
      _
    // Predicated region
    $region22: #{tpu_custom_call.1} parent=1 // pred_check
      _
    $region23: #{tpu_custom_call.1} parent=1 // pred_check_branch
      %54 = sbr.rel (0) target = $region25
    $region24: #{tpu_custom_call.1} parent=1 // pred_region
      %s56 = ssub.s32 768, 768
      %57 = vsyncadd [#allocation6], %s56
      %s58 = sshll.u32 [#allocation7], 4
      %s59 = int_to_ptr.vmem [resolvable:$true] %s58
      %64 = dma.hbm_to_vmem [thread:$0]  %s5, 768, %s59, [#allocation6], 128, 128, 8
    $region25: #{tpu_custom_call.1} parent=1 // pred_fallthru
      _
    // Predicated region
    $region26: #{tpu_custom_call.1} parent=1 // pred_check
      _
    $region27: #{tpu_custom_call.1} parent=1 // pred_check_branch
      %66 = sbr.rel (0) target = $region29
    $region28: #{tpu_custom_call.1} parent=1 // pred_region
      _
    $region29: #{tpu_custom_call.1} parent=1 // pred_fallthru
      _
    // Predicated region
    $region30: #{tpu_custom_call.1} parent=1 // pred_check
      _
    $region31: #{tpu_custom_call.1} parent=1 // pred_check_branch
      %68 = sbr.rel (0) target = $region33
    $region32: #{tpu_custom_call.1} parent=1 // pred_region
      _
    $region33: #{tpu_custom_call.1} parent=1 // pred_fallthru
      _
    // Predicated region
    $region34: #{tpu_custom_call.1} parent=1 // pred_check
      _
    $region35: #{tpu_custom_call.1} parent=1 // pred_check_branch
      %70 = sbr.rel (0) target = $region37
    $region36: #{tpu_custom_call.1} parent=1 // pred_region
      _
    $region37: #{tpu_custom_call.1} parent=1 // pred_fallthru
      _
    // Predicated region
    $region38: #{tpu_custom_call.1} parent=1 // pred_check
      _
    $region39: #{tpu_custom_call.1} parent=1 // pred_check_branch
      %72 = sbr.rel (0) target = $region41
    $region40: #{tpu_custom_call.1} parent=1 // pred_region
      %s74 = ssub.s32 1536, 1536
      %75 = vsyncadd [#allocation9], %s74
      %s76 = sshll.u32 [#allocation8], 4
      %s77 = int_to_ptr.vmem [resolvable:$true] %s76
      %82 = dma.hbm_to_vmem [thread:$0]  %s9, 1536, %s77, [#allocation9], 128, 128, 8
    $region41: #{tpu_custom_call.1} parent=1 // pred_fallthru
      _
    // Predicated region
    $region42: #{tpu_custom_call.1} parent=1 // pred_check
      _
    $region43: #{tpu_custom_call.1} parent=1 // pred_check_branch
      %84 = sbr.rel (0) target = $region45
    $region44: #{tpu_custom_call.1} parent=1 // pred_region
      _
    $region45: #{tpu_custom_call.1} parent=1 // pred_fallthru
      _
    // Predicated region
    $region46: #{tpu_custom_call.1} parent=1 // pred_check
      _
    $region47: #{tpu_custom_call.1} parent=1 // pred_check_branch
      %86 = sbr.rel (0) target = $region49
    $region48: #{tpu_custom_call.1} parent=1 // pred_region
      %s88 = ssub.s32 1536, 1536
      %89 = vsyncadd [#allocation9], %s88
      %s90 = sshll.u32 [#allocation10], 4
      %s91 = int_to_ptr.vmem [resolvable:$true] %s90
      %96 = dma.hbm_to_vmem [thread:$0]  %s11, 1536, %s91, [#allocation9], 128, 128, 8
    $region49: #{tpu_custom_call.1} parent=1 // pred_fallthru
      _
    // Predicated region
    $region50: #{tpu_custom_call.1} parent=1 // pred_check
      _
    $region51: #{tpu_custom_call.1} parent=1 // pred_check_branch
      %98 = sbr.rel (0) target = $region53
    $region52: #{tpu_custom_call.1} parent=1 // pred_region
      _
    $region53: #{tpu_custom_call.1} parent=1 // pred_fallthru
      _
    // Predicated region
    $region54: #{tpu_custom_call.1} parent=1 // pred_check
      _
    $region55: #{tpu_custom_call.1} parent=1 // pred_check_branch
      %100 = sbr.rel (0) target = $region57
    $region56: #{tpu_custom_call.1} parent=1 // pred_region
      %101 = dma.done [#allocation3], 128
    $region57: #{tpu_custom_call.1} parent=1 // pred_fallthru
      _
    // Predicated region
    $region58: #{tpu_custom_call.1} parent=1 // pred_check
      _
    $region59: #{tpu_custom_call.1} parent=1 // pred_check_branch
      %103 = sbr.rel (0) target = $region61
    $region60: #{tpu_custom_call.1} parent=1 // pred_region
      %104 = dma.done [#allocation6], 768
    $region61: #{tpu_custom_call.1} parent=1 // pred_fallthru
      _
    // Predicated region
    $region62: #{tpu_custom_call.1} parent=1 // pred_check
      _
    $region63: #{tpu_custom_call.1} parent=1 // pred_check_branch
      %106 = sbr.rel (0) target = $region65
    $region64: #{tpu_custom_call.1} parent=1 // pred_region
      %107 = dma.done [#allocation6], 768
    $region65: #{tpu_custom_call.1} parent=1 // pred_fallthru
      _
    // Predicated region
    $region66: #{tpu_custom_call.1} parent=1 // pred_check
      _
    $region67: #{tpu_custom_call.1} parent=1 // pred_check_branch
      %109 = sbr.rel (0) target = $region69
    $region68: #{tpu_custom_call.1} parent=1 // pred_region
      %110 = dma.done [#allocation9], 1536
    $region69: #{tpu_custom_call.1} parent=1 // pred_fallthru
      _
    // Predicated region
    $region70: #{tpu_custom_call.1} parent=1 // pred_check
      _
    $region71: #{tpu_custom_call.1} parent=1 // pred_check_branch
      %112 = sbr.rel (0) target = $region73
    $region72: #{tpu_custom_call.1} parent=1 // pred_region
      %113 = dma.done [#allocation9], 1536
    $region73: #{tpu_custom_call.1} parent=1 // pred_fallthru
      _
    %v114 = vld [vmem:[#allocation2] sm:$0xff]
    %v115 = vld [vmem:[%s1] sm:$0xff]
    %v116 = vld [vmem:[%s1 + $0x8] sm:$0xff]
    %v117 = vld [vmem:[%s1 + $0x10] sm:$0xff]
    %v118 = vld [vmem:[%s1 + $0x18] sm:$0xff]
    %v119 = vld [vmem:[%s1 + $0x20] sm:$0xff]
    %v120 = vld [vmem:[%s1 + $0x28] sm:$0xff]
    %v121 = vld [vmem:[%s1 + $0x30] sm:$0xff]
    %v122 = vld [vmem:[%s1 + $0x38] sm:$0xff]
    %v123 = vld [vmem:[%s2] sm:$0xff]
    %v124 = vld [vmem:[%s2 + $0x8] sm:$0xff]
    %v125 = vld [vmem:[%s2 + $0x10] sm:$0xff]
    %v126 = vld [vmem:[%s2 + $0x18] sm:$0xff]
    %vm127 = vcmask 261120
    %v129 = vsel %vm127, %v115, 0
    %v132 = vsel %vm127, %v116, 0
    %v135 = vsel %vm127, %v117, 0
    %v138 = vsel %vm127, %v118, 0
    %v141 = vsel %vm127, %v119, 0
    %v144 = vsel %vm127, %v120, 0
    %v147 = vsel %vm127, %v121, 0
    %v150 = vsel %vm127, %v122, 0
    %152 = vmatprep.subr.mxu0 0.0
    %153 = vmatpush1.msra.mxu0 0.0
    %154 = vmatprep.subr.mxu0 0.0
    %155 = vmatpush1.msra.mxu0 0.0
    %156 = vmatprep.subr.mxu0 0.0
    %157 = vmatpush1.msra.mxu0 0.0
    %158 = vmatprep.subr.mxu0 0.0
    %159 = vmatpush1.msra.mxu0 0.0
    %160 = vmatprep.subr.mxu0 0.0
    %161 = vmatpush1.msra.mxu0 0.0
    %162 = vmatprep.subr.mxu0 0.0
    %163 = vmatpush1.msra.mxu0 0.0
    %164 = vmatprep.subr.mxu0 0.0
    %165 = vmatpush1.msra.mxu0 0.0
    %166 = vmatprep.subr.mxu0 0.0
    %167 = vmatpush1.msra.mxu0 0.0
    %168 = vmatprep.subr.mxu0 0.0
    %169 = vmatpush1.msra.mxu0 0.0
    %170 = vmatprep.subr.mxu0 0.0
    %171 = vmatpush1.msra.mxu0 0.0
    %172 = vmatprep.subr.mxu0 0.0
    %173 = vmatpush1.msra.mxu0 0.0
    %174 = vmatprep.subr.mxu0 0.0
    %175 = vmatpush1.msra.mxu0 0.0
    %176 = vmatprep.subr.mxu0 0.0
    %177 = vmatpush1.msra.mxu0 %v126
    %178 = vmatprep.subr.mxu0 0.0
    %179 = vmatpush1.msra.mxu0 %v125
    %180 = vmatprep.subr.mxu0 0.0
    %181 = vmatpush1.msra.mxu0 %v124
    %182 = vmatprep.subr.mxu0 0.0
    %183 = vmatpush1.msra.mxu0 %v123
    %184 = vmatprep.subr.mxu0 0.0
    %185 = vmatpush2.msra.mxu0 0.0
    %186 = vmatprep.subr.mxu0 0.0
    %187 = vmatpush2.msra.mxu0 0.0
    %188 = vmatprep.subr.mxu0 0.0
    %189 = vmatpush2.msra.mxu0 0.0
    %190 = vmatprep.subr.mxu0 0.0
    %191 = vmatpush2.msra.mxu0 0.0
    %192 = vmatprep.subr.mxu0 0.0
    %193 = vmatpush2.msra.mxu0 0.0
    %194 = vmatprep.subr.mxu0 0.0
    %195 = vmatpush2.msra.mxu0 0.0
    %196 = vmatprep.subr.mxu0 0.0
    %197 = vmatpush2.msra.mxu0 0.0
    %198 = vmatprep.subr.mxu0 0.0
    %199 = vmatpush2.msra.mxu0 0.0
    %200 = vmatprep.subr.mxu0 0.0
    %201 = vmatpush2.msra.mxu0 0.0
    %202 = vmatprep.subr.mxu0 0.0
    %203 = vmatpush2.msra.mxu0 0.0
    %204 = vmatprep.subr.mxu0 0.0
    %205 = vmatpush2.msra.mxu0 0.0
    %206 = vmatprep.subr.mxu0 0.0
    %207 = vmatpush2.msra.mxu0 0.0
    %208 = vmatprep.subr.mxu0 0.0
    %209 = vmatpush2.msra.mxu0 0.0
    %210 = vmatprep.subr.mxu0 0.0
    %211 = vmatpush2.msra.mxu0 0.0
    %212 = vmatprep.subr.mxu0 0.0
    %213 = vmatpush2.msra.mxu0 0.0
    %214 = vmatprep.subr.mxu0 0.0
    %215 = vmatpush2.msra.mxu0 0.0
    %216 = vmatprep.mubr.f32.mxu0 0.0
    %217 = vmatmul.mubr.f32.gmra.mxu0 %v129
    %v218 = vpop.f32.mrf.mxu0
    %v219 = vadd.f32 0.0, %v218
    %v220 = vpop.f32.mrf.mxu0
    %221 = vmatprep.mubr.f32.mxu0 0.0
    %222 = vmatmul.mubr.f32.gmra.mxu0 %v132
    %v223 = vpop.f32.mrf.mxu0
    %v224 = vadd.f32 0.0, %v223
    %v225 = vpop.f32.mrf.mxu0
    %226 = vmatprep.mubr.f32.mxu0 0.0
    %227 = vmatmul.mubr.f32.gmra.mxu0 %v135
    %v228 = vpop.f32.mrf.mxu0
    %v229 = vadd.f32 0.0, %v228
    %v230 = vpop.f32.mrf.mxu0
    %231 = vmatprep.mubr.f32.mxu0 0.0
    %232 = vmatmul.mubr.f32.gmra.mxu0 %v138
    %v233 = vpop.f32.mrf.mxu0
    %v234 = vadd.f32 0.0, %v233
    %v235 = vpop.f32.mrf.mxu0
    %236 = vmatprep.mubr.f32.mxu0 0.0
    %237 = vmatmul.mubr.f32.gmra.mxu0 %v141
    %v238 = vpop.f32.mrf.mxu0
    %v239 = vadd.f32 0.0, %v238
    %v240 = vpop.f32.mrf.mxu0
    %241 = vmatprep.mubr.f32.mxu0 0.0
    %242 = vmatmul.mubr.f32.gmra.mxu0 %v144
    %v243 = vpop.f32.mrf.mxu0
    %v244 = vadd.f32 0.0, %v243
    %v245 = vpop.f32.mrf.mxu0
    %246 = vmatprep.mubr.f32.mxu0 0.0
    %247 = vmatmul.mubr.f32.gmra.mxu0 %v147
    %v248 = vpop.f32.mrf.mxu0
    %v249 = vadd.f32 0.0, %v248
    %v250 = vpop.f32.mrf.mxu0
    %251 = vmatprep.mubr.f32.mxu0 0.0
    %252 = vmatmul.mubr.f32.gmra.mxu0 %v150
    %v253 = vpop.f32.mrf.mxu0
    %v254 = vadd.f32 0.0, %v253
    %v255 = vpop.f32.mrf.mxu0
    %256 = vdwg.mxu0
    %v257 = vtanh.pop %v219
    %v258 = vtanh.pop %v224
    %v259 = vtanh.pop %v229
    %v260 = vtanh.pop %v234
    %v261 = vtanh.pop %v239
    %v262 = vtanh.pop %v244
    %v263 = vtanh.pop %v249
    %v264 = vtanh.pop %v254
    %v265 = vld [vmem:[#allocation5] sm:$0xff]
    %v266 = vld [vmem:[#allocation5 + $0x8] sm:$0xff]
    %vm267 = vcmask 130048
    %v269 = vsel %vm267, %v257, 0
    %v272 = vsel %vm267, %v258, 0
    %v275 = vsel %vm267, %v259, 0
    %v278 = vsel %vm267, %v260, 0
    %v281 = vsel %vm267, %v261, 0
    %v284 = vsel %vm267, %v262, 0
    %v287 = vsel %vm267, %v263, 0
    %v290 = vsel %vm267, %v264, 0
    %292 = vmatprep.subr.mxu0 0.0
    %293 = vmatpush1.msra.mxu0 0.0
    %294 = vmatprep.subr.mxu0 0.0
    %295 = vmatpush1.msra.mxu0 0.0
    %296 = vmatprep.subr.mxu0 0.0
    %297 = vmatpush1.msra.mxu0 0.0
    %298 = vmatprep.subr.mxu0 0.0
    %299 = vmatpush1.msra.mxu0 0.0
    %300 = vmatprep.subr.mxu0 0.0
    %301 = vmatpush1.msra.mxu0 0.0
    %302 = vmatprep.subr.mxu0 0.0
    %303 = vmatpush1.msra.mxu0 0.0
    %304 = vmatprep.subr.mxu0 0.0
    %305 = vmatpush1.msra.mxu0 0.0
    %306 = vmatprep.subr.mxu0 0.0
    %307 = vmatpush1.msra.mxu0 0.0
    %308 = vmatprep.subr.mxu0 0.0
    %309 = vmatpush1.msra.mxu0 0.0
    %310 = vmatprep.subr.mxu0 0.0
    %311 = vmatpush1.msra.mxu0 0.0
    %312 = vmatprep.subr.mxu0 0.0
    %313 = vmatpush1.msra.mxu0 0.0
    %314 = vmatprep.subr.mxu0 0.0
    %315 = vmatpush1.msra.mxu0 0.0
    %316 = vmatprep.subr.mxu0 0.0
    %317 = vmatpush1.msra.mxu0 0.0
    %318 = vmatprep.subr.mxu0 0.0
    %319 = vmatpush1.msra.mxu0 0.0
    %320 = vmatprep.subr.mxu0 0.0
    %321 = vmatpush1.msra.mxu0 %v266
    %322 = vmatprep.subr.mxu0 0.0
    %323 = vmatpush1.msra.mxu0 %v265
    %324 = vmatprep.subr.mxu0 0.0
    %325 = vmatpush2.msra.mxu0 0.0
    %326 = vmatprep.subr.mxu0 0.0
    %327 = vmatpush2.msra.mxu0 0.0
    %328 = vmatprep.subr.mxu0 0.0
    %329 = vmatpush2.msra.mxu0 0.0
    %330 = vmatprep.subr.mxu0 0.0
    %331 = vmatpush2.msra.mxu0 0.0
    %332 = vmatprep.subr.mxu0 0.0
    %333 = vmatpush2.msra.mxu0 0.0
    %334 = vmatprep.subr.mxu0 0.0
    %335 = vmatpush2.msra.mxu0 0.0
    %336 = vmatprep.subr.mxu0 0.0
    %337 = vmatpush2.msra.mxu0 0.0
    %338 = vmatprep.subr.mxu0 0.0
    %339 = vmatpush2.msra.mxu0 0.0
    %340 = vmatprep.subr.mxu0 0.0
    %341 = vmatpush2.msra.mxu0 0.0
    %342 = vmatprep.subr.mxu0 0.0
    %343 = vmatpush2.msra.mxu0 0.0
    %344 = vmatprep.subr.mxu0 0.0
    %345 = vmatpush2.msra.mxu0 0.0
    %346 = vmatprep.subr.mxu0 0.0
    %347 = vmatpush2.msra.mxu0 0.0
    %348 = vmatprep.subr.mxu0 0.0
    %349 = vmatpush2.msra.mxu0 0.0
    %350 = vmatprep.subr.mxu0 0.0
    %351 = vmatpush2.msra.mxu0 0.0
    %352 = vmatprep.subr.mxu0 0.0
    %353 = vmatpush2.msra.mxu0 0.0
    %354 = vmatprep.subr.mxu0 0.0
    %355 = vmatpush2.msra.mxu0 0.0
    %356 = vmatprep.mubr.f32.mxu0 0.0
    %357 = vmatmul.mubr.f32.gmra.mxu0 %v269
    %v358 = vpop.f32.mrf.mxu0
    %v359 = vadd.f32 0.0, %v358
    %v360 = vpop.f32.mrf.mxu0
    %361 = vmatprep.mubr.f32.mxu0 0.0
    %362 = vmatmul.mubr.f32.gmra.mxu0 %v272
    %v363 = vpop.f32.mrf.mxu0
    %v364 = vadd.f32 0.0, %v363
    %v365 = vpop.f32.mrf.mxu0
    %366 = vmatprep.mubr.f32.mxu0 0.0
    %367 = vmatmul.mubr.f32.gmra.mxu0 %v275
    %v368 = vpop.f32.mrf.mxu0
    %v369 = vadd.f32 0.0, %v368
    %v370 = vpop.f32.mrf.mxu0
    %371 = vmatprep.mubr.f32.mxu0 0.0
    %372 = vmatmul.mubr.f32.gmra.mxu0 %v278
    %v373 = vpop.f32.mrf.mxu0
    %v374 = vadd.f32 0.0, %v373
    %v375 = vpop.f32.mrf.mxu0
    %376 = vmatprep.mubr.f32.mxu0 0.0
    %377 = vmatmul.mubr.f32.gmra.mxu0 %v281
    %v378 = vpop.f32.mrf.mxu0
    %v379 = vadd.f32 0.0, %v378
    %v380 = vpop.f32.mrf.mxu0
    %381 = vmatprep.mubr.f32.mxu0 0.0
    %382 = vmatmul.mubr.f32.gmra.mxu0 %v284
    %v383 = vpop.f32.mrf.mxu0
    %v384 = vadd.f32 0.0, %v383
    %v385 = vpop.f32.mrf.mxu0
    %386 = vmatprep.mubr.f32.mxu0 0.0
    %387 = vmatmul.mubr.f32.gmra.mxu0 %v287
    %v388 = vpop.f32.mrf.mxu0
    %v389 = vadd.f32 0.0, %v388
    %v390 = vpop.f32.mrf.mxu0
    %391 = vmatprep.mubr.f32.mxu0 0.0
    %392 = vmatmul.mubr.f32.gmra.mxu0 %v290
    %v393 = vpop.f32.mrf.mxu0
    %v394 = vadd.f32 0.0, %v393
    %v395 = vpop.f32.mrf.mxu0
    %396 = vdwg.mxu0
    %v397 = vrot.slane %v359, 4
    %v398 = vmax.f32 %v359, %v397
    %v399 = vrot.slane %v398, 2
    %v400 = vmax.f32 %v398, %v399
    %v401 = vrot.slane %v400, 1
    %v402 = vmax.f32 %v400, %v401
    %v403 = vrot.slane %v364, 4
    %v404 = vmax.f32 %v364, %v403
    %v405 = vrot.slane %v404, 2
    %v406 = vmax.f32 %v404, %v405
    %v407 = vrot.slane %v406, 1
    %v408 = vmax.f32 %v406, %v407
    %v409 = vrot.slane %v369, 4
    %v410 = vmax.f32 %v369, %v409
    %v411 = vrot.slane %v410, 2
    %v412 = vmax.f32 %v410, %v411
    %v413 = vrot.slane %v412, 1
    %v414 = vmax.f32 %v412, %v413
    %v415 = vrot.slane %v374, 4
    %v416 = vmax.f32 %v374, %v415
    %v417 = vrot.slane %v416, 2
    %v418 = vmax.f32 %v416, %v417
    %v419 = vrot.slane %v418, 1
    %v420 = vmax.f32 %v418, %v419
    %v421 = vrot.slane %v379, 4
    %v422 = vmax.f32 %v379, %v421
    %v423 = vrot.slane %v422, 2
    %v424 = vmax.f32 %v422, %v423
    %v425 = vrot.slane %v424, 1
    %v426 = vmax.f32 %v424, %v425
    %v427 = vrot.slane %v384, 4
    %v428 = vmax.f32 %v384, %v427
    %v429 = vrot.slane %v428, 2
    %v430 = vmax.f32 %v428, %v429
    %v431 = vrot.slane %v430, 1
    %v432 = vmax.f32 %v430, %v431
    %v433 = vrot.slane %v389, 4
    %v434 = vmax.f32 %v389, %v433
    %v435 = vrot.slane %v434, 2
    %v436 = vmax.f32 %v434, %v435
    %v437 = vrot.slane %v436, 1
    %v438 = vmax.f32 %v436, %v437
    %v439 = vrot.slane %v394, 4
    %v440 = vmax.f32 %v394, %v439
    %v441 = vrot.slane %v440, 2
    %v442 = vmax.f32 %v440, %v441
    %v443 = vrot.slane %v442, 1
    %v444 = vmax.f32 %v442, %v443
    %v445 = vsub.f32 %v359, %v402
    %v446 = vsub.f32 %v364, %v408
    %v447 = vsub.f32 %v369, %v414
    %v448 = vsub.f32 %v374, %v420
    %v449 = vsub.f32 %v379, %v426
    %v450 = vsub.f32 %v384, %v432
    %v451 = vsub.f32 %v389, %v438
    %v452 = vsub.f32 %v394, %v444
    %v453 = vmul.f32 %v445, 1.442695
    %v454 = vpow.pop %v453
    %v455 = vmul.f32 %v446, 1.442695
    %v456 = vpow.pop %v455
    %v457 = vmul.f32 %v447, 1.442695
    %v458 = vpow.pop %v457
    %v459 = vmul.f32 %v448, 1.442695
    %v460 = vpow.pop %v459
    %v461 = vmul.f32 %v449, 1.442695
    %v462 = vpow.pop %v461
    %v463 = vmul.f32 %v450, 1.442695
    %v464 = vpow.pop %v463
    %v465 = vmul.f32 %v451, 1.442695
    %v466 = vpow.pop %v465
    %v467 = vmul.f32 %v452, 1.442695
    %v468 = vpow.pop %v467
    %v469 = vrot.slane %v454, 4
    %v470 = vadd.f32 %v454, %v469
    %v471 = vrot.slane %v470, 2
    %v472 = vadd.f32 %v470, %v471
    %v473 = vrot.slane %v472, 1
    %v474 = vadd.f32 %v472, %v473
    %v475 = vrot.slane %v456, 4
    %v476 = vadd.f32 %v456, %v475
    %v477 = vrot.slane %v476, 2
    %v478 = vadd.f32 %v476, %v477
    %v479 = vrot.slane %v478, 1
    %v480 = vadd.f32 %v478, %v479
    %v481 = vrot.slane %v458, 4
    %v482 = vadd.f32 %v458, %v481
    %v483 = vrot.slane %v482, 2
    %v484 = vadd.f32 %v482, %v483
    %v485 = vrot.slane %v484, 1
    %v486 = vadd.f32 %v484, %v485
    %v487 = vrot.slane %v460, 4
    %v488 = vadd.f32 %v460, %v487
    %v489 = vrot.slane %v488, 2
    %v490 = vadd.f32 %v488, %v489
    %v491 = vrot.slane %v490, 1
    %v492 = vadd.f32 %v490, %v491
    %v493 = vrot.slane %v462, 4
    %v494 = vadd.f32 %v462, %v493
    %v495 = vrot.slane %v494, 2
    %v496 = vadd.f32 %v494, %v495
    %v497 = vrot.slane %v496, 1
    %v498 = vadd.f32 %v496, %v497
    %v499 = vrot.slane %v464, 4
    %v500 = vadd.f32 %v464, %v499
    %v501 = vrot.slane %v500, 2
    %v502 = vadd.f32 %v500, %v501
    %v503 = vrot.slane %v502, 1
    %v504 = vadd.f32 %v502, %v503
    %v505 = vrot.slane %v466, 4
    %v506 = vadd.f32 %v466, %v505
    %v507 = vrot.slane %v506, 2
    %v508 = vadd.f32 %v506, %v507
    %v509 = vrot.slane %v508, 1
    %v510 = vadd.f32 %v508, %v509
    %v511 = vrot.slane %v468, 4
    %v512 = vadd.f32 %v468, %v511
    %v513 = vrot.slane %v512, 2
    %v514 = vadd.f32 %v512, %v513
    %v515 = vrot.slane %v514, 1
    %v516 = vadd.f32 %v514, %v515
    %v517 = vrcp.pop %v474
    %v518 = vrcp.pop %v480
    %v519 = vrcp.pop %v486
    %v520 = vrcp.pop %v492
    %v521 = vrcp.pop %v498
    %v522 = vrcp.pop %v504
    %v523 = vrcp.pop %v510
    %v524 = vrcp.pop %v516
    %v525 = vmul.f32 %v454, %v517
    %v526 = vmul.f32 %v456, %v518
    %v527 = vmul.f32 %v458, %v519
    %v528 = vmul.f32 %v460, %v520
    %v529 = vmul.f32 %v462, %v521
    %v530 = vmul.f32 %v464, %v522
    %v531 = vmul.f32 %v466, %v523
    %v532 = vmul.f32 %v468, %v524
    %v533 = vld [vmem:[%s4] sm:$0x1]
    %v535 = vlaneseq
    %v536 = vshrl.u32 %v535, 7
    %v537 = vsub.s32 0, %v536
    %v538 = vrot.slane %v533, %v537
    %v540 = vmul.f32 %v525, %v538
    %v541 = vmul.f32 %v526, %v538
    %v542 = vmul.f32 %v527, %v538
    %v543 = vmul.f32 %v528, %v538
    %v544 = vmul.f32 %v529, %v538
    %v545 = vmul.f32 %v530, %v538
    %v546 = vmul.f32 %v531, %v538
    %v547 = vmul.f32 %v532, %v538
    %548 = vadd.xlane.f32.xlu0 %v540
    %v549 = vpop.xlane.xlu0 %548
    %550 = vadd.xlane.f32.xlu0 %v541
    %v551 = vpop.xlane.xlu0 %550
    %552 = vadd.xlane.f32.xlu0 %v542
    %v553 = vpop.xlane.xlu0 %552
    %554 = vadd.xlane.f32.xlu0 %v543
    %v555 = vpop.xlane.xlu0 %554
    %556 = vadd.xlane.f32.xlu0 %v544
    %v557 = vpop.xlane.xlu0 %556
    %558 = vadd.xlane.f32.xlu0 %v545
    %v559 = vpop.xlane.xlu0 %558
    %560 = vadd.xlane.f32.xlu0 %v546
    %v561 = vpop.xlane.xlu0 %560
    %562 = vadd.xlane.f32.xlu0 %v547
    %v563 = vpop.xlane.xlu0 %562
    %v564 = vmul.f32 %v549, %v115
    %v565 = vmul.f32 %v551, %v116
    %v566 = vmul.f32 %v553, %v117
    %v567 = vmul.f32 %v555, %v118
    %v568 = vmul.f32 %v557, %v119
    %v569 = vmul.f32 %v559, %v120
    %v570 = vmul.f32 %v561, %v121
    %v571 = vmul.f32 %v563, %v122
    %v572 = vsel %vm127, %v564, 0.0
    %v573 = vrot.slane %v572, 4
    %v574 = vadd.f32 %v572, %v573
    %v575 = vrot.slane %v574, 2
    %v576 = vadd.f32 %v574, %v575
    %v577 = vrot.slane %v576, 1
    %v578 = vadd.f32 %v576, %v577
    %v579 = vsel %vm127, %v565, 0.0
    %v580 = vrot.slane %v579, 4
    %v581 = vadd.f32 %v579, %v580
    %v582 = vrot.slane %v581, 2
    %v583 = vadd.f32 %v581, %v582
    %v584 = vrot.slane %v583, 1
    %v585 = vadd.f32 %v583, %v584
    %v586 = vsel %vm127, %v566, 0.0
    %v587 = vrot.slane %v586, 4
    %v588 = vadd.f32 %v586, %v587
    %v589 = vrot.slane %v588, 2
    %v590 = vadd.f32 %v588, %v589
    %v591 = vrot.slane %v590, 1
    %v592 = vadd.f32 %v590, %v591
    %v593 = vsel %vm127, %v567, 0.0
    %v594 = vrot.slane %v593, 4
    %v595 = vadd.f32 %v593, %v594
    %v596 = vrot.slane %v595, 2
    %v597 = vadd.f32 %v595, %v596
    %v598 = vrot.slane %v597, 1
    %v599 = vadd.f32 %v597, %v598
    %v600 = vsel %vm127, %v568, 0.0
    %v601 = vrot.slane %v600, 4
    %v602 = vadd.f32 %v600, %v601
    %v603 = vrot.slane %v602, 2
    %v604 = vadd.f32 %v602, %v603
    %v605 = vrot.slane %v604, 1
    %v606 = vadd.f32 %v604, %v605
    %v607 = vsel %vm127, %v569, 0.0
    %v608 = vrot.slane %v607, 4
    %v609 = vadd.f32 %v607, %v608
    %v610 = vrot.slane %v609, 2
    %v611 = vadd.f32 %v609, %v610
    %v612 = vrot.slane %v611, 1
    %v613 = vadd.f32 %v611, %v612
    %v614 = vsel %vm127, %v570, 0.0
    %v615 = vrot.slane %v614, 4
    %v616 = vadd.f32 %v614, %v615
    %v617 = vrot.slane %v616, 2
    %v618 = vadd.f32 %v616, %v617
    %v619 = vrot.slane %v618, 1
    %v620 = vadd.f32 %v618, %v619
    %v621 = vsel %vm127, %v571, 0.0
    %v622 = vrot.slane %v621, 4
    %v623 = vadd.f32 %v621, %v622
    %v624 = vrot.slane %v623, 2
    %v625 = vadd.f32 %v623, %v624
    %v626 = vrot.slane %v625, 1
    %v627 = vadd.f32 %v625, %v626
    %v628 = vld [vmem:[#allocation7] sm:$0xff]
    %v629 = vld [vmem:[#allocation7 + $0x8] sm:$0xff]
    %v630 = vld [vmem:[%s6] sm:$0xff]
    %v631 = vld [vmem:[%s6 + $0x8] sm:$0xff]
    %v632 = vld [vmem:[%s6 + $0x10] sm:$0xff]
    %v633 = vld [vmem:[%s6 + $0x18] sm:$0xff]
    %vm642 = vcmask 1041409
    %v643 = vsel %vm642, %v585, %v578
    %vm644 = vcmask 1042434
    %v645 = vsel %vm644, %v592, %v643
    %vm646 = vcmask 1043459
    %v647 = vsel %vm646, %v599, %v645
    %vm648 = vcmask 1044484
    %v649 = vsel %vm648, %v606, %v647
    %vm650 = vcmask 1045509
    %v651 = vsel %vm650, %v613, %v649
    %vm652 = vcmask 1046534
    %v653 = vsel %vm652, %v620, %v651
    %vm654 = vcmask 1047559
    %v655 = vsel %vm654, %v627, %v653
    %v656 = vsel %vm127, %v655, 0
    %658 = vmatprep.subr.mxu0 0.0
    %659 = vmatpush1.msra.mxu0 0.0
    %660 = vmatprep.subr.mxu0 0.0
    %661 = vmatpush1.msra.mxu0 0.0
    %662 = vmatprep.subr.mxu0 0.0
    %663 = vmatpush1.msra.mxu0 0.0
    %664 = vmatprep.subr.mxu0 0.0
    %665 = vmatpush1.msra.mxu0 0.0
    %666 = vmatprep.subr.mxu0 0.0
    %667 = vmatpush1.msra.mxu0 0.0
    %668 = vmatprep.subr.mxu0 0.0
    %669 = vmatpush1.msra.mxu0 0.0
    %670 = vmatprep.subr.mxu0 0.0
    %671 = vmatpush1.msra.mxu0 0.0
    %672 = vmatprep.subr.mxu0 0.0
    %673 = vmatpush1.msra.mxu0 0.0
    %674 = vmatprep.subr.mxu0 0.0
    %675 = vmatpush1.msra.mxu0 0.0
    %676 = vmatprep.subr.mxu0 0.0
    %677 = vmatpush1.msra.mxu0 0.0
    %678 = vmatprep.subr.mxu0 0.0
    %679 = vmatpush1.msra.mxu0 0.0
    %680 = vmatprep.subr.mxu0 0.0
    %681 = vmatpush1.msra.mxu0 0.0
    %682 = vmatprep.subr.mxu0 0.0
    %683 = vmatpush1.msra.mxu0 %v633
    %684 = vmatprep.subr.mxu0 0.0
    %685 = vmatpush1.msra.mxu0 %v632
    %686 = vmatprep.subr.mxu0 0.0
    %687 = vmatpush1.msra.mxu0 %v631
    %688 = vmatprep.subr.mxu0 0.0
    %689 = vmatpush1.msra.mxu0 %v630
    %690 = vmatprep.subr.mxu0 0.0
    %691 = vmatpush2.msra.mxu0 0.0
    %692 = vmatprep.subr.mxu0 0.0
    %693 = vmatpush2.msra.mxu0 0.0
    %694 = vmatprep.subr.mxu0 0.0
    %695 = vmatpush2.msra.mxu0 0.0
    %696 = vmatprep.subr.mxu0 0.0
    %697 = vmatpush2.msra.mxu0 0.0
    %698 = vmatprep.subr.mxu0 0.0
    %699 = vmatpush2.msra.mxu0 0.0
    %700 = vmatprep.subr.mxu0 0.0
    %701 = vmatpush2.msra.mxu0 0.0
    %702 = vmatprep.subr.mxu0 0.0
    %703 = vmatpush2.msra.mxu0 0.0
    %704 = vmatprep.subr.mxu0 0.0
    %705 = vmatpush2.msra.mxu0 0.0
    %706 = vmatprep.subr.mxu0 0.0
    %707 = vmatpush2.msra.mxu0 0.0
    %708 = vmatprep.subr.mxu0 0.0
    %709 = vmatpush2.msra.mxu0 0.0
    %710 = vmatprep.subr.mxu0 0.0
    %711 = vmatpush2.msra.mxu0 0.0
    %712 = vmatprep.subr.mxu0 0.0
    %713 = vmatpush2.msra.mxu0 0.0
    %714 = vmatprep.subr.mxu0 0.0
    %715 = vmatpush2.msra.mxu0 0.0
    %716 = vmatprep.subr.mxu0 0.0
    %717 = vmatpush2.msra.mxu0 0.0
    %718 = vmatprep.subr.mxu0 0.0
    %719 = vmatpush2.msra.mxu0 0.0
    %720 = vmatprep.subr.mxu0 0.0
    %721 = vmatpush2.msra.mxu0 0.0
    %722 = vmatprep.mubr.f32.mxu0 0.0
    %723 = vmatmul.mubr.f32.gmra.mxu0 %v656
    %v724 = vpop.f32.mrf.mxu0
    %v725 = vadd.f32 0.0, %v724
    %v726 = vpop.f32.mrf.mxu0
    %727 = vdwg.mxu0
    %v729 = vsel %vm267, %v114, 0
    %731 = vmatprep.subr.mxu0 0.0
    %732 = vmatpush1.msra.mxu0 0.0
    %733 = vmatprep.subr.mxu0 0.0
    %734 = vmatpush1.msra.mxu0 0.0
    %735 = vmatprep.subr.mxu0 0.0
    %736 = vmatpush1.msra.mxu0 0.0
    %737 = vmatprep.subr.mxu0 0.0
    %738 = vmatpush1.msra.mxu0 0.0
    %739 = vmatprep.subr.mxu0 0.0
    %740 = vmatpush1.msra.mxu0 0.0
    %741 = vmatprep.subr.mxu0 0.0
    %742 = vmatpush1.msra.mxu0 0.0
    %743 = vmatprep.subr.mxu0 0.0
    %744 = vmatpush1.msra.mxu0 0.0
    %745 = vmatprep.subr.mxu0 0.0
    %746 = vmatpush1.msra.mxu0 0.0
    %747 = vmatprep.subr.mxu0 0.0
    %748 = vmatpush1.msra.mxu0 0.0
    %749 = vmatprep.subr.mxu0 0.0
    %750 = vmatpush1.msra.mxu0 0.0
    %751 = vmatprep.subr.mxu0 0.0
    %752 = vmatpush1.msra.mxu0 0.0
    %753 = vmatprep.subr.mxu0 0.0
    %754 = vmatpush1.msra.mxu0 0.0
    %755 = vmatprep.subr.mxu0 0.0
    %756 = vmatpush1.msra.mxu0 0.0
    %757 = vmatprep.subr.mxu0 0.0
    %758 = vmatpush1.msra.mxu0 0.0
    %759 = vmatprep.subr.mxu0 0.0
    %760 = vmatpush1.msra.mxu0 %v629
    %761 = vmatprep.subr.mxu0 0.0
    %762 = vmatpush1.msra.mxu0 %v628
    %763 = vmatprep.subr.mxu0 0.0
    %764 = vmatpush2.msra.mxu0 0.0
    %765 = vmatprep.subr.mxu0 0.0
    %766 = vmatpush2.msra.mxu0 0.0
    %767 = vmatprep.subr.mxu0 0.0
    %768 = vmatpush2.msra.mxu0 0.0
    %769 = vmatprep.subr.mxu0 0.0
    %770 = vmatpush2.msra.mxu0 0.0
    %771 = vmatprep.subr.mxu0 0.0
    %772 = vmatpush2.msra.mxu0 0.0
    %773 = vmatprep.subr.mxu0 0.0
    %774 = vmatpush2.msra.mxu0 0.0
    %775 = vmatprep.subr.mxu0 0.0
    %776 = vmatpush2.msra.mxu0 0.0
    %777 = vmatprep.subr.mxu0 0.0
    %778 = vmatpush2.msra.mxu0 0.0
    %779 = vmatprep.subr.mxu0 0.0
    %780 = vmatpush2.msra.mxu0 0.0
    %781 = vmatprep.subr.mxu0 0.0
    %782 = vmatpush2.msra.mxu0 0.0
    %783 = vmatprep.subr.mxu0 0.0
    %784 = vmatpush2.msra.mxu0 0.0
    %785 = vmatprep.subr.mxu0 0.0
    %786 = vmatpush2.msra.mxu0 0.0
    %787 = vmatprep.subr.mxu0 0.0
    %788 = vmatpush2.msra.mxu0 0.0
    %789 = vmatprep.subr.mxu0 0.0
    %790 = vmatpush2.msra.mxu0 0.0
    %791 = vmatprep.subr.mxu0 0.0
    %792 = vmatpush2.msra.mxu0 0.0
    %793 = vmatprep.subr.mxu0 0.0
    %794 = vmatpush2.msra.mxu0 0.0
    %795 = vmatprep.mubr.f32.mxu0 0.0
    %796 = vmatmul.mubr.f32.gmra.mxu0 %v729
    %v797 = vpop.f32.mrf.mxu0
    %v798 = vadd.f32 %v725, %v797
    %v799 = vpop.f32.mrf.mxu0
    %800 = vdwg.mxu0
    %v801 = vld [vmem:[%s8] sm:$0x1]
    %v803 = vlaneseq
    %v804 = vshrl.u32 %v803, 7
    %v805 = vsub.s32 0, %v804
    %v806 = vrot.slane %v801, %v805
    %v808 = vadd.f32 %v798, %v806
    %v809 = vmax.f32 %v808, 0.0
    %v810 = vld [vmem:[#allocation8] sm:$0xff]
    %v811 = vld [vmem:[#allocation8 + $0x8] sm:$0xff]
    %v812 = vld [vmem:[#allocation8 + $0x10] sm:$0xff]
    %v813 = vld [vmem:[#allocation8 + $0x18] sm:$0xff]
    %v814 = vld [vmem:[%s10] sm:$0x1]
    %v816 = vlaneseq
    %v817 = vshrl.u32 %v816, 7
    %v818 = vsub.s32 0, %v817
    %v819 = vrot.slane %v814, %v818
    %v822 = vsel %vm127, %v809, 0
    %824 = vmatprep.subr.mxu0 0.0
    %825 = vmatpush1.msra.mxu0 0.0
    %826 = vmatprep.subr.mxu0 0.0
    %827 = vmatpush1.msra.mxu0 0.0
    %828 = vmatprep.subr.mxu0 0.0
    %829 = vmatpush1.msra.mxu0 0.0
    %830 = vmatprep.subr.mxu0 0.0
    %831 = vmatpush1.msra.mxu0 0.0
    %832 = vmatprep.subr.mxu0 0.0
    %833 = vmatpush1.msra.mxu0 0.0
    %834 = vmatprep.subr.mxu0 0.0
    %835 = vmatpush1.msra.mxu0 0.0
    %836 = vmatprep.subr.mxu0 0.0
    %837 = vmatpush1.msra.mxu0 0.0
    %838 = vmatprep.subr.mxu0 0.0
    %839 = vmatpush1.msra.mxu0 0.0
    %840 = vmatprep.subr.mxu0 0.0
    %841 = vmatpush1.msra.mxu0 0.0
    %842 = vmatprep.subr.mxu0 0.0
    %843 = vmatpush1.msra.mxu0 0.0
    %844 = vmatprep.subr.mxu0 0.0
    %845 = vmatpush1.msra.mxu0 0.0
    %846 = vmatprep.subr.mxu0 0.0
    %847 = vmatpush1.msra.mxu0 0.0
    %848 = vmatprep.subr.mxu0 0.0
    %849 = vmatpush1.msra.mxu0 %v813
    %850 = vmatprep.subr.mxu0 0.0
    %851 = vmatpush1.msra.mxu0 %v812
    %852 = vmatprep.subr.mxu0 0.0
    %853 = vmatpush1.msra.mxu0 %v811
    %854 = vmatprep.subr.mxu0 0.0
    %855 = vmatpush1.msra.mxu0 %v810
    %856 = vmatprep.subr.mxu0 0.0
    %857 = vmatpush2.msra.mxu0 0.0
    %858 = vmatprep.subr.mxu0 0.0
    %859 = vmatpush2.msra.mxu0 0.0
    %860 = vmatprep.subr.mxu0 0.0
    %861 = vmatpush2.msra.mxu0 0.0
    %862 = vmatprep.subr.mxu0 0.0
    %863 = vmatpush2.msra.mxu0 0.0
    %864 = vmatprep.subr.mxu0 0.0
    %865 = vmatpush2.msra.mxu0 0.0
    %866 = vmatprep.subr.mxu0 0.0
    %867 = vmatpush2.msra.mxu0 0.0
    %868 = vmatprep.subr.mxu0 0.0
    %869 = vmatpush2.msra.mxu0 0.0
    %870 = vmatprep.subr.mxu0 0.0
    %871 = vmatpush2.msra.mxu0 0.0
    %872 = vmatprep.subr.mxu0 0.0
    %873 = vmatpush2.msra.mxu0 0.0
    %874 = vmatprep.subr.mxu0 0.0
    %875 = vmatpush2.msra.mxu0 0.0
    %876 = vmatprep.subr.mxu0 0.0
    %877 = vmatpush2.msra.mxu0 0.0
    %878 = vmatprep.subr.mxu0 0.0
    %879 = vmatpush2.msra.mxu0 0.0
    %880 = vmatprep.subr.mxu0 0.0
    %881 = vmatpush2.msra.mxu0 0.0
    %882 = vmatprep.subr.mxu0 0.0
    %883 = vmatpush2.msra.mxu0 0.0
    %884 = vmatprep.subr.mxu0 0.0
    %885 = vmatpush2.msra.mxu0 0.0
    %886 = vmatprep.subr.mxu0 0.0
    %887 = vmatpush2.msra.mxu0 0.0
    %888 = vmatprep.mubr.f32.mxu0 0.0
    %889 = vmatmul.mubr.f32.gmra.mxu0 %v822
    %v890 = vpop.f32.mrf.mxu0
    %v891 = vadd.f32 %v819, %v890
    %v892 = vpop.f32.mrf.mxu0
    %893 = vdwg.mxu0
    %v894 = vmax.f32 %v891, 0.0
    %v895 = vld [vmem:[#allocation10] sm:$0xff]
    %v896 = vld [vmem:[#allocation10 + $0x8] sm:$0xff]
    %v897 = vld [vmem:[#allocation10 + $0x10] sm:$0xff]
    %v898 = vld [vmem:[#allocation10 + $0x18] sm:$0xff]
    %v899 = vld [vmem:[%s12] sm:$0x1]
    %v901 = vlaneseq
    %v902 = vshrl.u32 %v901, 7
    %v903 = vsub.s32 0, %v902
    %v904 = vrot.slane %v899, %v903
    %v907 = vsel %vm127, %v894, 0
    %909 = vmatprep.subr.mxu0 0.0
    %910 = vmatpush1.msra.mxu0 0.0
    %911 = vmatprep.subr.mxu0 0.0
    %912 = vmatpush1.msra.mxu0 0.0
    %913 = vmatprep.subr.mxu0 0.0
    %914 = vmatpush1.msra.mxu0 0.0
    %915 = vmatprep.subr.mxu0 0.0
    %916 = vmatpush1.msra.mxu0 0.0
    %917 = vmatprep.subr.mxu0 0.0
    %918 = vmatpush1.msra.mxu0 0.0
    %919 = vmatprep.subr.mxu0 0.0
    %920 = vmatpush1.msra.mxu0 0.0
    %921 = vmatprep.subr.mxu0 0.0
    %922 = vmatpush1.msra.mxu0 0.0
    %923 = vmatprep.subr.mxu0 0.0
    %924 = vmatpush1.msra.mxu0 0.0
    %925 = vmatprep.subr.mxu0 0.0
    %926 = vmatpush1.msra.mxu0 0.0
    %927 = vmatprep.subr.mxu0 0.0
    %928 = vmatpush1.msra.mxu0 0.0
    %929 = vmatprep.subr.mxu0 0.0
    %930 = vmatpush1.msra.mxu0 0.0
    %931 = vmatprep.subr.mxu0 0.0
    %932 = vmatpush1.msra.mxu0 0.0
    %933 = vmatprep.subr.mxu0 0.0
    %934 = vmatpush1.msra.mxu0 %v898
    %935 = vmatprep.subr.mxu0 0.0
    %936 = vmatpush1.msra.mxu0 %v897
    %937 = vmatprep.subr.mxu0 0.0
    %938 = vmatpush1.msra.mxu0 %v896
    %939 = vmatprep.subr.mxu0 0.0
    %940 = vmatpush1.msra.mxu0 %v895
    %941 = vmatprep.subr.mxu0 0.0
    %942 = vmatpush2.msra.mxu0 0.0
    %943 = vmatprep.subr.mxu0 0.0
    %944 = vmatpush2.msra.mxu0 0.0
    %945 = vmatprep.subr.mxu0 0.0
    %946 = vmatpush2.msra.mxu0 0.0
    %947 = vmatprep.subr.mxu0 0.0
    %948 = vmatpush2.msra.mxu0 0.0
    %949 = vmatprep.subr.mxu0 0.0
    %950 = vmatpush2.msra.mxu0 0.0
    %951 = vmatprep.subr.mxu0 0.0
    %952 = vmatpush2.msra.mxu0 0.0
    %953 = vmatprep.subr.mxu0 0.0
    %954 = vmatpush2.msra.mxu0 0.0
    %955 = vmatprep.subr.mxu0 0.0
    %956 = vmatpush2.msra.mxu0 0.0
    %957 = vmatprep.subr.mxu0 0.0
    %958 = vmatpush2.msra.mxu0 0.0
    %959 = vmatprep.subr.mxu0 0.0
    %960 = vmatpush2.msra.mxu0 0.0
    %961 = vmatprep.subr.mxu0 0.0
    %962 = vmatpush2.msra.mxu0 0.0
    %963 = vmatprep.subr.mxu0 0.0
    %964 = vmatpush2.msra.mxu0 0.0
    %965 = vmatprep.subr.mxu0 0.0
    %966 = vmatpush2.msra.mxu0 0.0
    %967 = vmatprep.subr.mxu0 0.0
    %968 = vmatpush2.msra.mxu0 0.0
    %969 = vmatprep.subr.mxu0 0.0
    %970 = vmatpush2.msra.mxu0 0.0
    %971 = vmatprep.subr.mxu0 0.0
    %972 = vmatpush2.msra.mxu0 0.0
    %973 = vmatprep.mubr.f32.mxu0 0.0
    %974 = vmatmul.mubr.f32.gmra.mxu0 %v907
    %v975 = vpop.f32.mrf.mxu0
    %v976 = vadd.f32 %v904, %v975
    %v977 = vpop.f32.mrf.mxu0
    %978 = vdwg.mxu0
    %v979 = vsub.f32 0.0, %v976
    %v980 = vmul.f32 %v979, 1.442695
    %v981 = vpow.pop %v980
    %v982 = vadd.f32 %v981, 1.0
    %v983 = vrcp.pop %v982
    %984 = vst [vmem:[#allocation11] sm:$0xff] %v983
    %s985 = scalar_lea.vmem %s2, 32
    %v986 = vld [vmem:[%s985] sm:$0xff]
    %v987 = vld [vmem:[%s985 + $0x8] sm:$0xff]
    %v988 = vld [vmem:[%s985 + $0x10] sm:$0xff]
    %v989 = vld [vmem:[%s985 + $0x18] sm:$0xff]
    %990 = vmatprep.subr.mxu0 0.0
    %991 = vmatpush1.msra.mxu0 0.0
    %992 = vmatprep.subr.mxu0 0.0
    %993 = vmatpush1.msra.mxu0 0.0
    %994 = vmatprep.subr.mxu0 0.0
    %995 = vmatpush1.msra.mxu0 0.0
    %996 = vmatprep.subr.mxu0 0.0
    %997 = vmatpush1.msra.mxu0 0.0
    %998 = vmatprep.subr.mxu0 0.0
    %999 = vmatpush1.msra.mxu0 0.0
    %1000 = vmatprep.subr.mxu0 0.0
    %1001 = vmatpush1.msra.mxu0 0.0
    %1002 = vmatprep.subr.mxu0 0.0
    %1003 = vmatpush1.msra.mxu0 0.0
    %1004 = vmatprep.subr.mxu0 0.0
    %1005 = vmatpush1.msra.mxu0 0.0
    %1006 = vmatprep.subr.mxu0 0.0
    %1007 = vmatpush1.msra.mxu0 0.0
    %1008 = vmatprep.subr.mxu0 0.0
    %1009 = vmatpush1.msra.mxu0 0.0
    %1010 = vmatprep.subr.mxu0 0.0
    %1011 = vmatpush1.msra.mxu0 0.0
    %1012 = vmatprep.subr.mxu0 0.0
    %1013 = vmatpush1.msra.mxu0 0.0
    %1014 = vmatprep.subr.mxu0 0.0
    %1015 = vmatpush1.msra.mxu0 %v989
    %1016 = vmatprep.subr.mxu0 0.0
    %1017 = vmatpush1.msra.mxu0 %v988
    %1018 = vmatprep.subr.mxu0 0.0
    %1019 = vmatpush1.msra.mxu0 %v987
    %1020 = vmatprep.subr.mxu0 0.0
    %1021 = vmatpush1.msra.mxu0 %v986
    %1022 = vmatprep.subr.mxu0 0.0
    %1023 = vmatpush2.msra.mxu0 0.0
    %1024 = vmatprep.subr.mxu0 0.0
    %1025 = vmatpush2.msra.mxu0 0.0
    %1026 = vmatprep.subr.mxu0 0.0
    %1027 = vmatpush2.msra.mxu0 0.0
    %1028 = vmatprep.subr.mxu0 0.0
    %1029 = vmatpush2.msra.mxu0 0.0
    %1030 = vmatprep.subr.mxu0 0.0
    %1031 = vmatpush2.msra.mxu0 0.0
    %1032 = vmatprep.subr.mxu0 0.0
    %1033 = vmatpush2.msra.mxu0 0.0
    %1034 = vmatprep.subr.mxu0 0.0
    %1035 = vmatpush2.msra.mxu0 0.0
    %1036 = vmatprep.subr.mxu0 0.0
    %1037 = vmatpush2.msra.mxu0 0.0
    %1038 = vmatprep.subr.mxu0 0.0
    %1039 = vmatpush2.msra.mxu0 0.0
    %1040 = vmatprep.subr.mxu0 0.0
    %1041 = vmatpush2.msra.mxu0 0.0
    %1042 = vmatprep.subr.mxu0 0.0
    %1043 = vmatpush2.msra.mxu0 0.0
    %1044 = vmatprep.subr.mxu0 0.0
    %1045 = vmatpush2.msra.mxu0 0.0
    %1046 = vmatprep.subr.mxu0 0.0
    %1047 = vmatpush2.msra.mxu0 0.0
    %1048 = vmatprep.subr.mxu0 0.0
    %1049 = vmatpush2.msra.mxu0 0.0
    %1050 = vmatprep.subr.mxu0 0.0
    %1051 = vmatpush2.msra.mxu0 0.0
    %1052 = vmatprep.subr.mxu0 0.0
    %1053 = vmatpush2.msra.mxu0 0.0
    %1054 = vmatprep.mubr.f32.mxu0 0.0
    %1055 = vmatmul.mubr.f32.gmra.mxu0 %v129
    %v1056 = vpop.f32.mrf.mxu0
    %v1057 = vadd.f32 0.0, %v1056
    %v1058 = vpop.f32.mrf.mxu0
    %1059 = vmatprep.mubr.f32.mxu0 0.0
    %1060 = vmatmul.mubr.f32.gmra.mxu0 %v132
    %v1061 = vpop.f32.mrf.mxu0
    %v1062 = vadd.f32 0.0, %v1061
    %v1063 = vpop.f32.mrf.mxu0
    %1064 = vmatprep.mubr.f32.mxu0 0.0
    %1065 = vmatmul.mubr.f32.gmra.mxu0 %v135
    %v1066 = vpop.f32.mrf.mxu0
    %v1067 = vadd.f32 0.0, %v1066
    %v1068 = vpop.f32.mrf.mxu0
    %1069 = vmatprep.mubr.f32.mxu0 0.0
    %1070 = vmatmul.mubr.f32.gmra.mxu0 %v138
    %v1071 = vpop.f32.mrf.mxu0
    %v1072 = vadd.f32 0.0, %v1071
    %v1073 = vpop.f32.mrf.mxu0
    %1074 = vmatprep.mubr.f32.mxu0 0.0
    %1075 = vmatmul.mubr.f32.gmra.mxu0 %v141
    %v1076 = vpop.f32.mrf.mxu0
    %v1077 = vadd.f32 0.0, %v1076
    %v1078 = vpop.f32.mrf.mxu0
    %1079 = vmatprep.mubr.f32.mxu0 0.0
    %1080 = vmatmul.mubr.f32.gmra.mxu0 %v144
    %v1081 = vpop.f32.mrf.mxu0
    %v1082 = vadd.f32 0.0, %v1081
    %v1083 = vpop.f32.mrf.mxu0
    %1084 = vmatprep.mubr.f32.mxu0 0.0
    %1085 = vmatmul.mubr.f32.gmra.mxu0 %v147
    %v1086 = vpop.f32.mrf.mxu0
    %v1087 = vadd.f32 0.0, %v1086
    %v1088 = vpop.f32.mrf.mxu0
    %1089 = vmatprep.mubr.f32.mxu0 0.0
    %1090 = vmatmul.mubr.f32.gmra.mxu0 %v150
    %v1091 = vpop.f32.mrf.mxu0
    %v1092 = vadd.f32 0.0, %v1091
    %v1093 = vpop.f32.mrf.mxu0
    %1094 = vdwg.mxu0
    %v1095 = vtanh.pop %v1057
    %v1096 = vtanh.pop %v1062
    %v1097 = vtanh.pop %v1067
    %v1098 = vtanh.pop %v1072
    %v1099 = vtanh.pop %v1077
    %v1100 = vtanh.pop %v1082
    %v1101 = vtanh.pop %v1087
    %v1102 = vtanh.pop %v1092
    %s1103 = scalar_lea.vmem [#allocation5], 16
    %v1104 = vld [vmem:[%s1103] sm:$0xff]
    %v1105 = vld [vmem:[%s1103 + $0x8] sm:$0xff]
    %v1107 = vsel %vm267, %v1095, 0
    %v1110 = vsel %vm267, %v1096, 0
    %v1113 = vsel %vm267, %v1097, 0
    %v1116 = vsel %vm267, %v1098, 0
    %v1119 = vsel %vm267, %v1099, 0
    %v1122 = vsel %vm267, %v1100, 0
    %v1125 = vsel %vm267, %v1101, 0
    %v1128 = vsel %vm267, %v1102, 0
    %1130 = vmatprep.subr.mxu0 0.0
    %1131 = vmatpush1.msra.mxu0 0.0
    %1132 = vmatprep.subr.mxu0 0.0
    %1133 = vmatpush1.msra.mxu0 0.0
    %1134 = vmatprep.subr.mxu0 0.0
    %1135 = vmatpush1.msra.mxu0 0.0
    %1136 = vmatprep.subr.mxu0 0.0
    %1137 = vmatpush1.msra.mxu0 0.0
    %1138 = vmatprep.subr.mxu0 0.0
    %1139 = vmatpush1.msra.mxu0 0.0
    %1140 = vmatprep.subr.mxu0 0.0
    %1141 = vmatpush1.msra.mxu0 0.0
    %1142 = vmatprep.subr.mxu0 0.0
    %1143 = vmatpush1.msra.mxu0 0.0
    %1144 = vmatprep.subr.mxu0 0.0
    %1145 = vmatpush1.msra.mxu0 0.0
    %1146 = vmatprep.subr.mxu0 0.0
    %1147 = vmatpush1.msra.mxu0 0.0
    %1148 = vmatprep.subr.mxu0 0.0
    %1149 = vmatpush1.msra.mxu0 0.0
    %1150 = vmatprep.subr.mxu0 0.0
    %1151 = vmatpush1.msra.mxu0 0.0
    %1152 = vmatprep.subr.mxu0 0.0
    %1153 = vmatpush1.msra.mxu0 0.0
    %1154 = vmatprep.subr.mxu0 0.0
    %1155 = vmatpush1.msra.mxu0 0.0
    %1156 = vmatprep.subr.mxu0 0.0
    %1157 = vmatpush1.msra.mxu0 0.0
    %1158 = vmatprep.subr.mxu0 0.0
    %1159 = vmatpush1.msra.mxu0 %v1105
    %1160 = vmatprep.subr.mxu0 0.0
    %1161 = vmatpush1.msra.mxu0 %v1104
    %1162 = vmatprep.subr.mxu0 0.0
    %1163 = vmatpush2.msra.mxu0 0.0
    %1164 = vmatprep.subr.mxu0 0.0
    %1165 = vmatpush2.msra.mxu0 0.0
    %1166 = vmatprep.subr.mxu0 0.0
    %1167 = vmatpush2.msra.mxu0 0.0
    %1168 = vmatprep.subr.mxu0 0.0
    %1169 = vmatpush2.msra.mxu0 0.0
    %1170 = vmatprep.subr.mxu0 0.0
    %1171 = vmatpush2.msra.mxu0 0.0
    %1172 = vmatprep.subr.mxu0 0.0
    %1173 = vmatpush2.msra.mxu0 0.0
    %1174 = vmatprep.subr.mxu0 0.0
    %1175 = vmatpush2.msra.mxu0 0.0
    %1176 = vmatprep.subr.mxu0 0.0
    %1177 = vmatpush2.msra.mxu0 0.0
    %1178 = vmatprep.subr.mxu0 0.0
    %1179 = vmatpush2.msra.mxu0 0.0
    %1180 = vmatprep.subr.mxu0 0.0
    %1181 = vmatpush2.msra.mxu0 0.0
    %1182 = vmatprep.subr.mxu0 0.0
    %1183 = vmatpush2.msra.mxu0 0.0
    %1184 = vmatprep.subr.mxu0 0.0
    %1185 = vmatpush2.msra.mxu0 0.0
    %1186 = vmatprep.subr.mxu0 0.0
    %1187 = vmatpush2.msra.mxu0 0.0
    %1188 = vmatprep.subr.mxu0 0.0
    %1189 = vmatpush2.msra.mxu0 0.0
    %1190 = vmatprep.subr.mxu0 0.0
    %1191 = vmatpush2.msra.mxu0 0.0
    %1192 = vmatprep.subr.mxu0 0.0
    %1193 = vmatpush2.msra.mxu0 0.0
    %1194 = vmatprep.mubr.f32.mxu0 0.0
    %1195 = vmatmul.mubr.f32.gmra.mxu0 %v1107
    %v1196 = vpop.f32.mrf.mxu0
    %v1197 = vadd.f32 0.0, %v1196
    %v1198 = vpop.f32.mrf.mxu0
    %1199 = vmatprep.mubr.f32.mxu0 0.0
    %1200 = vmatmul.mubr.f32.gmra.mxu0 %v1110
    %v1201 = vpop.f32.mrf.mxu0
    %v1202 = vadd.f32 0.0, %v1201
    %v1203 = vpop.f32.mrf.mxu0
    %1204 = vmatprep.mubr.f32.mxu0 0.0
    %1205 = vmatmul.mubr.f32.gmra.mxu0 %v1113
    %v1206 = vpop.f32.mrf.mxu0
    %v1207 = vadd.f32 0.0, %v1206
    %v1208 = vpop.f32.mrf.mxu0
    %1209 = vmatprep.mubr.f32.mxu0 0.0
    %1210 = vmatmul.mubr.f32.gmra.mxu0 %v1116
    %v1211 = vpop.f32.mrf.mxu0
    %v1212 = vadd.f32 0.0, %v1211
    %v1213 = vpop.f32.mrf.mxu0
    %1214 = vmatprep.mubr.f32.mxu0 0.0
    %1215 = vmatmul.mubr.f32.gmra.mxu0 %v1119
    %v1216 = vpop.f32.mrf.mxu0
    %v1217 = vadd.f32 0.0, %v1216
    %v1218 = vpop.f32.mrf.mxu0
    %1219 = vmatprep.mubr.f32.mxu0 0.0
    %1220 = vmatmul.mubr.f32.gmra.mxu0 %v1122
    %v1221 = vpop.f32.mrf.mxu0
    %v1222 = vadd.f32 0.0, %v1221
    %v1223 = vpop.f32.mrf.mxu0
    %1224 = vmatprep.mubr.f32.mxu0 0.0
    %1225 = vmatmul.mubr.f32.gmra.mxu0 %v1125
    %v1226 = vpop.f32.mrf.mxu0
    %v1227 = vadd.f32 0.0, %v1226
    %v1228 = vpop.f32.mrf.mxu0
    %1229 = vmatprep.mubr.f32.mxu0 0.0
    %1230 = vmatmul.mubr.f32.gmra.mxu0 %v1128
    %v1231 = vpop.f32.mrf.mxu0
    %v1232 = vadd.f32 0.0, %v1231
    %v1233 = vpop.f32.mrf.mxu0
    %1234 = vdwg.mxu0
    %v1235 = vrot.slane %v1197, 4
    %v1236 = vmax.f32 %v1197, %v1235
    %v1237 = vrot.slane %v1236, 2
    %v1238 = vmax.f32 %v1236, %v1237
    %v1239 = vrot.slane %v1238, 1
    %v1240 = vmax.f32 %v1238, %v1239
    %v1241 = vrot.slane %v1202, 4
    %v1242 = vmax.f32 %v1202, %v1241
    %v1243 = vrot.slane %v1242, 2
    %v1244 = vmax.f32 %v1242, %v1243
    %v1245 = vrot.slane %v1244, 1
    %v1246 = vmax.f32 %v1244, %v1245
    %v1247 = vrot.slane %v1207, 4
    %v1248 = vmax.f32 %v1207, %v1247
    %v1249 = vrot.slane %v1248, 2
    %v1250 = vmax.f32 %v1248, %v1249
    %v1251 = vrot.slane %v1250, 1
    %v1252 = vmax.f32 %v1250, %v1251
    %v1253 = vrot.slane %v1212, 4
    %v1254 = vmax.f32 %v1212, %v1253
    %v1255 = vrot.slane %v1254, 2
    %v1256 = vmax.f32 %v1254, %v1255
    %v1257 = vrot.slane %v1256, 1
    %v1258 = vmax.f32 %v1256, %v1257
    %v1259 = vrot.slane %v1217, 4
    %v1260 = vmax.f32 %v1217, %v1259
    %v1261 = vrot.slane %v1260, 2
    %v1262 = vmax.f32 %v1260, %v1261
    %v1263 = vrot.slane %v1262, 1
    %v1264 = vmax.f32 %v1262, %v1263
    %v1265 = vrot.slane %v1222, 4
    %v1266 = vmax.f32 %v1222, %v1265
    %v1267 = vrot.slane %v1266, 2
    %v1268 = vmax.f32 %v1266, %v1267
    %v1269 = vrot.slane %v1268, 1
    %v1270 = vmax.f32 %v1268, %v1269
    %v1271 = vrot.slane %v1227, 4
    %v1272 = vmax.f32 %v1227, %v1271
    %v1273 = vrot.slane %v1272, 2
    %v1274 = vmax.f32 %v1272, %v1273
    %v1275 = vrot.slane %v1274, 1
    %v1276 = vmax.f32 %v1274, %v1275
    %v1277 = vrot.slane %v1232, 4
    %v1278 = vmax.f32 %v1232, %v1277
    %v1279 = vrot.slane %v1278, 2
    %v1280 = vmax.f32 %v1278, %v1279
    %v1281 = vrot.slane %v1280, 1
    %v1282 = vmax.f32 %v1280, %v1281
    %v1283 = vsub.f32 %v1197, %v1240
    %v1284 = vsub.f32 %v1202, %v1246
    %v1285 = vsub.f32 %v1207, %v1252
    %v1286 = vsub.f32 %v1212, %v1258
    %v1287 = vsub.f32 %v1217, %v1264
    %v1288 = vsub.f32 %v1222, %v1270
    %v1289 = vsub.f32 %v1227, %v1276
    %v1290 = vsub.f32 %v1232, %v1282
    %v1291 = vmul.f32 %v1283, 1.442695
    %v1292 = vpow.pop %v1291
    %v1293 = vmul.f32 %v1284, 1.442695
    %v1294 = vpow.pop %v1293
    %v1295 = vmul.f32 %v1285, 1.442695
    %v1296 = vpow.pop %v1295
    %v1297 = vmul.f32 %v1286, 1.442695
    %v1298 = vpow.pop %v1297
    %v1299 = vmul.f32 %v1287, 1.442695
    %v1300 = vpow.pop %v1299
    %v1301 = vmul.f32 %v1288, 1.442695
    %v1302 = vpow.pop %v1301
    %v1303 = vmul.f32 %v1289, 1.442695
    %v1304 = vpow.pop %v1303
    %v1305 = vmul.f32 %v1290, 1.442695
    %v1306 = vpow.pop %v1305
    %v1307 = vrot.slane %v1292, 4
    %v1308 = vadd.f32 %v1292, %v1307
    %v1309 = vrot.slane %v1308, 2
    %v1310 = vadd.f32 %v1308, %v1309
    %v1311 = vrot.slane %v1310, 1
    %v1312 = vadd.f32 %v1310, %v1311
    %v1313 = vrot.slane %v1294, 4
    %v1314 = vadd.f32 %v1294, %v1313
    %v1315 = vrot.slane %v1314, 2
    %v1316 = vadd.f32 %v1314, %v1315
    %v1317 = vrot.slane %v1316, 1
    %v1318 = vadd.f32 %v1316, %v1317
    %v1319 = vrot.slane %v1296, 4
    %v1320 = vadd.f32 %v1296, %v1319
    %v1321 = vrot.slane %v1320, 2
    %v1322 = vadd.f32 %v1320, %v1321
    %v1323 = vrot.slane %v1322, 1
    %v1324 = vadd.f32 %v1322, %v1323
    %v1325 = vrot.slane %v1298, 4
    %v1326 = vadd.f32 %v1298, %v1325
    %v1327 = vrot.slane %v1326, 2
    %v1328 = vadd.f32 %v1326, %v1327
    %v1329 = vrot.slane %v1328, 1
    %v1330 = vadd.f32 %v1328, %v1329
    %v1331 = vrot.slane %v1300, 4
    %v1332 = vadd.f32 %v1300, %v1331
    %v1333 = vrot.slane %v1332, 2
    %v1334 = vadd.f32 %v1332, %v1333
    %v1335 = vrot.slane %v1334, 1
    %v1336 = vadd.f32 %v1334, %v1335
    %v1337 = vrot.slane %v1302, 4
    %v1338 = vadd.f32 %v1302, %v1337
    %v1339 = vrot.slane %v1338, 2
    %v1340 = vadd.f32 %v1338, %v1339
    %v1341 = vrot.slane %v1340, 1
    %v1342 = vadd.f32 %v1340, %v1341
    %v1343 = vrot.slane %v1304, 4
    %v1344 = vadd.f32 %v1304, %v1343
    %v1345 = vrot.slane %v1344, 2
    %v1346 = vadd.f32 %v1344, %v1345
    %v1347 = vrot.slane %v1346, 1
    %v1348 = vadd.f32 %v1346, %v1347
    %v1349 = vrot.slane %v1306, 4
    %v1350 = vadd.f32 %v1306, %v1349
    %v1351 = vrot.slane %v1350, 2
    %v1352 = vadd.f32 %v1350, %v1351
    %v1353 = vrot.slane %v1352, 1
    %v1354 = vadd.f32 %v1352, %v1353
    %v1355 = vrcp.pop %v1312
    %v1356 = vrcp.pop %v1318
    %v1357 = vrcp.pop %v1324
    %v1358 = vrcp.pop %v1330
    %v1359 = vrcp.pop %v1336
    %v1360 = vrcp.pop %v1342
    %v1361 = vrcp.pop %v1348
    %v1362 = vrcp.pop %v1354
    %v1363 = vmul.f32 %v1292, %v1355
    %v1364 = vmul.f32 %v1294, %v1356
    %v1365 = vmul.f32 %v1296, %v1357
    %v1366 = vmul.f32 %v1298, %v1358
    %v1367 = vmul.f32 %v1300, %v1359
    %v1368 = vmul.f32 %v1302, %v1360
    %v1369 = vmul.f32 %v1304, %v1361
    %v1370 = vmul.f32 %v1306, %v1362
    %s1371 = scalar_lea.vmem %s4, 1
    %v1372 = vld [vmem:[%s1371] sm:$0x1]
    %v1374 = vlaneseq
    %v1375 = vshrl.u32 %v1374, 7
    %v1376 = vsub.s32 0, %v1375
    %v1377 = vrot.slane %v1372, %v1376
    %v1379 = vmul.f32 %v1363, %v1377
    %v1380 = vmul.f32 %v1364, %v1377
    %v1381 = vmul.f32 %v1365, %v1377
    %v1382 = vmul.f32 %v1366, %v1377
    %v1383 = vmul.f32 %v1367, %v1377
    %v1384 = vmul.f32 %v1368, %v1377
    %v1385 = vmul.f32 %v1369, %v1377
    %v1386 = vmul.f32 %v1370, %v1377
    %1387 = vadd.xlane.f32.xlu0 %v1379
    %v1388 = vpop.xlane.xlu0 %1387
    %1389 = vadd.xlane.f32.xlu0 %v1380
    %v1390 = vpop.xlane.xlu0 %1389
    %1391 = vadd.xlane.f32.xlu0 %v1381
    %v1392 = vpop.xlane.xlu0 %1391
    %1393 = vadd.xlane.f32.xlu0 %v1382
    %v1394 = vpop.xlane.xlu0 %1393
    %1395 = vadd.xlane.f32.xlu0 %v1383
    %v1396 = vpop.xlane.xlu0 %1395
    %1397 = vadd.xlane.f32.xlu0 %v1384
    %v1398 = vpop.xlane.xlu0 %1397
    %1399 = vadd.xlane.f32.xlu0 %v1385
    %v1400 = vpop.xlane.xlu0 %1399
    %1401 = vadd.xlane.f32.xlu0 %v1386
    %v1402 = vpop.xlane.xlu0 %1401
    %v1403 = vmul.f32 %v1388, %v115
    %v1404 = vmul.f32 %v1390, %v116
    %v1405 = vmul.f32 %v1392, %v117
    %v1406 = vmul.f32 %v1394, %v118
    %v1407 = vmul.f32 %v1396, %v119
    %v1408 = vmul.f32 %v1398, %v120
    %v1409 = vmul.f32 %v1400, %v121
    %v1410 = vmul.f32 %v1402, %v122
    %v1411 = vsel %vm127, %v1403, 0.0
    %v1412 = vrot.slane %v1411, 4
    %v1413 = vadd.f32 %v1411, %v1412
    %v1414 = vrot.slane %v1413, 2
    %v1415 = vadd.f32 %v1413, %v1414
    %v1416 = vrot.slane %v1415, 1
    %v1417 = vadd.f32 %v1415, %v1416
    %v1418 = vsel %vm127, %v1404, 0.0
    %v1419 = vrot.slane %v1418, 4
    %v1420 = vadd.f32 %v1418, %v1419
    %v1421 = vrot.slane %v1420, 2
    %v1422 = vadd.f32 %v1420, %v1421
    %v1423 = vrot.slane %v1422, 1
    %v1424 = vadd.f32 %v1422, %v1423
    %v1425 = vsel %vm127, %v1405, 0.0
    %v1426 = vrot.slane %v1425, 4
    %v1427 = vadd.f32 %v1425, %v1426
    %v1428 = vrot.slane %v1427, 2
    %v1429 = vadd.f32 %v1427, %v1428
    %v1430 = vrot.slane %v1429, 1
    %v1431 = vadd.f32 %v1429, %v1430
    %v1432 = vsel %vm127, %v1406, 0.0
    %v1433 = vrot.slane %v1432, 4
    %v1434 = vadd.f32 %v1432, %v1433
    %v1435 = vrot.slane %v1434, 2
    %v1436 = vadd.f32 %v1434, %v1435
    %v1437 = vrot.slane %v1436, 1
    %v1438 = vadd.f32 %v1436, %v1437
    %v1439 = vsel %vm127, %v1407, 0.0
    %v1440 = vrot.slane %v1439, 4
    %v1441 = vadd.f32 %v1439, %v1440
    %v1442 = vrot.slane %v1441, 2
    %v1443 = vadd.f32 %v1441, %v1442
    %v1444 = vrot.slane %v1443, 1
    %v1445 = vadd.f32 %v1443, %v1444
    %v1446 = vsel %vm127, %v1408, 0.0
    %v1447 = vrot.slane %v1446, 4
    %v1448 = vadd.f32 %v1446, %v1447
    %v1449 = vrot.slane %v1448, 2
    %v1450 = vadd.f32 %v1448, %v1449
    %v1451 = vrot.slane %v1450, 1
    %v1452 = vadd.f32 %v1450, %v1451
    %v1453 = vsel %vm127, %v1409, 0.0
    %v1454 = vrot.slane %v1453, 4
    %v1455 = vadd.f32 %v1453, %v1454
    %v1456 = vrot.slane %v1455, 2
    %v1457 = vadd.f32 %v1455, %v1456
    %v1458 = vrot.slane %v1457, 1
    %v1459 = vadd.f32 %v1457, %v1458
    %v1460 = vsel %vm127, %v1410, 0.0
    %v1461 = vrot.slane %v1460, 4
    %v1462 = vadd.f32 %v1460, %v1461
    %v1463 = vrot.slane %v1462, 2
    %v1464 = vadd.f32 %v1462, %v1463
    %v1465 = vrot.slane %v1464, 1
    %v1466 = vadd.f32 %v1464, %v1465
    %s1467 = scalar_lea.vmem [#allocation7], 16
    %v1468 = vld [vmem:[%s1467] sm:$0xff]
    %v1469 = vld [vmem:[%s1467 + $0x8] sm:$0xff]
    %s1470 = scalar_lea.vmem %s6, 32
    %v1471 = vld [vmem:[%s1470] sm:$0xff]
    %v1472 = vld [vmem:[%s1470 + $0x8] sm:$0xff]
    %v1473 = vld [vmem:[%s1470 + $0x10] sm:$0xff]
    %v1474 = vld [vmem:[%s1470 + $0x18] sm:$0xff]
    %v1483 = vsel %vm642, %v1424, %v1417
    %v1484 = vsel %vm644, %v1431, %v1483
    %v1485 = vsel %vm646, %v1438, %v1484
    %v1486 = vsel %vm648, %v1445, %v1485
    %v1487 = vsel %vm650, %v1452, %v1486
    %v1488 = vsel %vm652, %v1459, %v1487
    %v1489 = vsel %vm654, %v1466, %v1488
    %v1490 = vsel %vm127, %v1489, 0
    %1492 = vmatprep.subr.mxu0 0.0
    %1493 = vmatpush1.msra.mxu0 0.0
    %1494 = vmatprep.subr.mxu0 0.0
    %1495 = vmatpush1.msra.mxu0 0.0
    %1496 = vmatprep.subr.mxu0 0.0
    %1497 = vmatpush1.msra.mxu0 0.0
    %1498 = vmatprep.subr.mxu0 0.0
    %1499 = vmatpush1.msra.mxu0 0.0
    %1500 = vmatprep.subr.mxu0 0.0
    %1501 = vmatpush1.msra.mxu0 0.0
    %1502 = vmatprep.subr.mxu0 0.0
    %1503 = vmatpush1.msra.mxu0 0.0
    %1504 = vmatprep.subr.mxu0 0.0
    %1505 = vmatpush1.msra.mxu0 0.0
    %1506 = vmatprep.subr.mxu0 0.0
    %1507 = vmatpush1.msra.mxu0 0.0
    %1508 = vmatprep.subr.mxu0 0.0
    %1509 = vmatpush1.msra.mxu0 0.0
    %1510 = vmatprep.subr.mxu0 0.0
    %1511 = vmatpush1.msra.mxu0 0.0
    %1512 = vmatprep.subr.mxu0 0.0
    %1513 = vmatpush1.msra.mxu0 0.0
    %1514 = vmatprep.subr.mxu0 0.0
    %1515 = vmatpush1.msra.mxu0 0.0
    %1516 = vmatprep.subr.mxu0 0.0
    %1517 = vmatpush1.msra.mxu0 %v1474
    %1518 = vmatprep.subr.mxu0 0.0
    %1519 = vmatpush1.msra.mxu0 %v1473
    %1520 = vmatprep.subr.mxu0 0.0
    %1521 = vmatpush1.msra.mxu0 %v1472
    %1522 = vmatprep.subr.mxu0 0.0
    %1523 = vmatpush1.msra.mxu0 %v1471
    %1524 = vmatprep.subr.mxu0 0.0
    %1525 = vmatpush2.msra.mxu0 0.0
    %1526 = vmatprep.subr.mxu0 0.0
    %1527 = vmatpush2.msra.mxu0 0.0
    %1528 = vmatprep.subr.mxu0 0.0
    %1529 = vmatpush2.msra.mxu0 0.0
    %1530 = vmatprep.subr.mxu0 0.0
    %1531 = vmatpush2.msra.mxu0 0.0
    %1532 = vmatprep.subr.mxu0 0.0
    %1533 = vmatpush2.msra.mxu0 0.0
    %1534 = vmatprep.subr.mxu0 0.0
    %1535 = vmatpush2.msra.mxu0 0.0
    %1536 = vmatprep.subr.mxu0 0.0
    %1537 = vmatpush2.msra.mxu0 0.0
    %1538 = vmatprep.subr.mxu0 0.0
    %1539 = vmatpush2.msra.mxu0 0.0
    %1540 = vmatprep.subr.mxu0 0.0
    %1541 = vmatpush2.msra.mxu0 0.0
    %1542 = vmatprep.subr.mxu0 0.0
    %1543 = vmatpush2.msra.mxu0 0.0
    %1544 = vmatprep.subr.mxu0 0.0
    %1545 = vmatpush2.msra.mxu0 0.0
    %1546 = vmatprep.subr.mxu0 0.0
    %1547 = vmatpush2.msra.mxu0 0.0
    %1548 = vmatprep.subr.mxu0 0.0
    %1549 = vmatpush2.msra.mxu0 0.0
    %1550 = vmatprep.subr.mxu0 0.0
    %1551 = vmatpush2.msra.mxu0 0.0
    %1552 = vmatprep.subr.mxu0 0.0
    %1553 = vmatpush2.msra.mxu0 0.0
    %1554 = vmatprep.subr.mxu0 0.0
    %1555 = vmatpush2.msra.mxu0 0.0
    %1556 = vmatprep.mubr.f32.mxu0 0.0
    %1557 = vmatmul.mubr.f32.gmra.mxu0 %v1490
    %v1558 = vpop.f32.mrf.mxu0
    %v1559 = vadd.f32 0.0, %v1558
    %v1560 = vpop.f32.mrf.mxu0
    %1561 = vdwg.mxu0
    %1562 = vmatprep.subr.mxu0 0.0
    %1563 = vmatpush1.msra.mxu0 0.0
    %1564 = vmatprep.subr.mxu0 0.0
    %1565 = vmatpush1.msra.mxu0 0.0
    %1566 = vmatprep.subr.mxu0 0.0
    %1567 = vmatpush1.msra.mxu0 0.0
    %1568 = vmatprep.subr.mxu0 0.0
    %1569 = vmatpush1.msra.mxu0 0.0
    %1570 = vmatprep.subr.mxu0 0.0
    %1571 = vmatpush1.msra.mxu0 0.0
    %1572 = vmatprep.subr.mxu0 0.0
    %1573 = vmatpush1.msra.mxu0 0.0
    %1574 = vmatprep.subr.mxu0 0.0
    %1575 = vmatpush1.msra.mxu0 0.0
    %1576 = vmatprep.subr.mxu0 0.0
    %1577 = vmatpush1.msra.mxu0 0.0
    %1578 = vmatprep.subr.mxu0 0.0
    %1579 = vmatpush1.msra.mxu0 0.0
    %1580 = vmatprep.subr.mxu0 0.0
    %1581 = vmatpush1.msra.mxu0 0.0
    %1582 = vmatprep.subr.mxu0 0.0
    %1583 = vmatpush1.msra.mxu0 0.0
    %1584 = vmatprep.subr.mxu0 0.0
    %1585 = vmatpush1.msra.mxu0 0.0
    %1586 = vmatprep.subr.mxu0 0.0
    %1587 = vmatpush1.msra.mxu0 0.0
    %1588 = vmatprep.subr.mxu0 0.0
    %1589 = vmatpush1.msra.mxu0 0.0
    %1590 = vmatprep.subr.mxu0 0.0
    %1591 = vmatpush1.msra.mxu0 %v1469
    %1592 = vmatprep.subr.mxu0 0.0
    %1593 = vmatpush1.msra.mxu0 %v1468
    %1594 = vmatprep.subr.mxu0 0.0
    %1595 = vmatpush2.msra.mxu0 0.0
    %1596 = vmatprep.subr.mxu0 0.0
    %1597 = vmatpush2.msra.mxu0 0.0
    %1598 = vmatprep.subr.mxu0 0.0
    %1599 = vmatpush2.msra.mxu0 0.0
    %1600 = vmatprep.subr.mxu0 0.0
    %1601 = vmatpush2.msra.mxu0 0.0
    %1602 = vmatprep.subr.mxu0 0.0
    %1603 = vmatpush2.msra.mxu0 0.0
    %1604 = vmatprep.subr.mxu0 0.0
    %1605 = vmatpush2.msra.mxu0 0.0
    %1606 = vmatprep.subr.mxu0 0.0
    %1607 = vmatpush2.msra.mxu0 0.0
    %1608 = vmatprep.subr.mxu0 0.0
    %1609 = vmatpush2.msra.mxu0 0.0
    %1610 = vmatprep.subr.mxu0 0.0
    %1611 = vmatpush2.msra.mxu0 0.0
    %1612 = vmatprep.subr.mxu0 0.0
    %1613 = vmatpush2.msra.mxu0 0.0
    %1614 = vmatprep.subr.mxu0 0.0
    %1615 = vmatpush2.msra.mxu0 0.0
    %1616 = vmatprep.subr.mxu0 0.0
    %1617 = vmatpush2.msra.mxu0 0.0
    %1618 = vmatprep.subr.mxu0 0.0
    %1619 = vmatpush2.msra.mxu0 0.0
    %1620 = vmatprep.subr.mxu0 0.0
    %1621 = vmatpush2.msra.mxu0 0.0
    %1622 = vmatprep.subr.mxu0 0.0
    %1623 = vmatpush2.msra.mxu0 0.0
    %1624 = vmatprep.subr.mxu0 0.0
    %1625 = vmatpush2.msra.mxu0 0.0
    %1626 = vmatprep.mubr.f32.mxu0 0.0
    %1627 = vmatmul.mubr.f32.gmra.mxu0 %v729
    %v1628 = vpop.f32.mrf.mxu0
    %v1629 = vadd.f32 %v1559, %v1628
    %v1630 = vpop.f32.mrf.mxu0
    %1631 = vdwg.mxu0
    %s1632 = scalar_lea.vmem %s8, 1
    %v1633 = vld [vmem:[%s1632] sm:$0x1]
    %v1635 = vlaneseq
    %v1636 = vshrl.u32 %v1635, 7
    %v1637 = vsub.s32 0, %v1636
    %v1638 = vrot.slane %v1633, %v1637
    %v1640 = vadd.f32 %v1629, %v1638
    %s1641 = scalar_lea.vmem %s7, 32
    %v1642 = vld [vmem:[%s1641] sm:$0xff]
    %v1643 = vld [vmem:[%s1641 + $0x8] sm:$0xff]
    %v1644 = vld [vmem:[%s1641 + $0x10] sm:$0xff]
    %v1645 = vld [vmem:[%s1641 + $0x18] sm:$0xff]
    %1646 = vmatprep.subr.mxu0 0.0
    %1647 = vmatpush1.msra.mxu0 0.0
    %1648 = vmatprep.subr.mxu0 0.0
    %1649 = vmatpush1.msra.mxu0 0.0
    %1650 = vmatprep.subr.mxu0 0.0
    %1651 = vmatpush1.msra.mxu0 0.0
    %1652 = vmatprep.subr.mxu0 0.0
    %1653 = vmatpush1.msra.mxu0 0.0
    %1654 = vmatprep.subr.mxu0 0.0
    %1655 = vmatpush1.msra.mxu0 0.0
    %1656 = vmatprep.subr.mxu0 0.0
    %1657 = vmatpush1.msra.mxu0 0.0
    %1658 = vmatprep.subr.mxu0 0.0
    %1659 = vmatpush1.msra.mxu0 0.0
    %1660 = vmatprep.subr.mxu0 0.0
    %1661 = vmatpush1.msra.mxu0 0.0
    %1662 = vmatprep.subr.mxu0 0.0
    %1663 = vmatpush1.msra.mxu0 0.0
    %1664 = vmatprep.subr.mxu0 0.0
    %1665 = vmatpush1.msra.mxu0 0.0
    %1666 = vmatprep.subr.mxu0 0.0
    %1667 = vmatpush1.msra.mxu0 0.0
    %1668 = vmatprep.subr.mxu0 0.0
    %1669 = vmatpush1.msra.mxu0 0.0
    %1670 = vmatprep.subr.mxu0 0.0
    %1671 = vmatpush1.msra.mxu0 %v1645
    %1672 = vmatprep.subr.mxu0 0.0
    %1673 = vmatpush1.msra.mxu0 %v1644
    %1674 = vmatprep.subr.mxu0 0.0
    %1675 = vmatpush1.msra.mxu0 %v1643
    %1676 = vmatprep.subr.mxu0 0.0
    %1677 = vmatpush1.msra.mxu0 %v1642
    %1678 = vmatprep.subr.mxu0 0.0
    %1679 = vmatpush2.msra.mxu0 0.0
    %1680 = vmatprep.subr.mxu0 0.0
    %1681 = vmatpush2.msra.mxu0 0.0
    %1682 = vmatprep.subr.mxu0 0.0
    %1683 = vmatpush2.msra.mxu0 0.0
    %1684 = vmatprep.subr.mxu0 0.0
    %1685 = vmatpush2.msra.mxu0 0.0
    %1686 = vmatprep.subr.mxu0 0.0
    %1687 = vmatpush2.msra.mxu0 0.0
    %1688 = vmatprep.subr.mxu0 0.0
    %1689 = vmatpush2.msra.mxu0 0.0
    %1690 = vmatprep.subr.mxu0 0.0
    %1691 = vmatpush2.msra.mxu0 0.0
    %1692 = vmatprep.subr.mxu0 0.0
    %1693 = vmatpush2.msra.mxu0 0.0
    %1694 = vmatprep.subr.mxu0 0.0
    %1695 = vmatpush2.msra.mxu0 0.0
    %1696 = vmatprep.subr.mxu0 0.0
    %1697 = vmatpush2.msra.mxu0 0.0
    %1698 = vmatprep.subr.mxu0 0.0
    %1699 = vmatpush2.msra.mxu0 0.0
    %1700 = vmatprep.subr.mxu0 0.0
    %1701 = vmatpush2.msra.mxu0 0.0
    %1702 = vmatprep.subr.mxu0 0.0
    %1703 = vmatpush2.msra.mxu0 0.0
    %1704 = vmatprep.subr.mxu0 0.0
    %1705 = vmatpush2.msra.mxu0 0.0
    %1706 = vmatprep.subr.mxu0 0.0
    %1707 = vmatpush2.msra.mxu0 0.0
    %1708 = vmatprep.subr.mxu0 0.0
    %1709 = vmatpush2.msra.mxu0 0.0
    %1710 = vmatprep.mubr.f32.mxu0 0.0
    %1711 = vmatmul.mubr.f32.gmra.mxu0 %v822
    %v1712 = vpop.f32.mrf.mxu0
    %v1713 = vadd.f32 0.0, %v1712
    %v1714 = vpop.f32.mrf.mxu0
    %1715 = vdwg.mxu0
    %v1716 = vadd.f32 %v1640, %v1713
    %v1717 = vmax.f32 %v1716, 0.0
    %s1718 = scalar_lea.vmem [#allocation8], 32
    %v1719 = vld [vmem:[%s1718] sm:$0xff]
    %v1720 = vld [vmem:[%s1718 + $0x8] sm:$0xff]
    %v1721 = vld [vmem:[%s1718 + $0x10] sm:$0xff]
    %v1722 = vld [vmem:[%s1718 + $0x18] sm:$0xff]
    %s1723 = scalar_lea.vmem %s10, 1
    %v1724 = vld [vmem:[%s1723] sm:$0x1]
    %v1726 = vlaneseq
    %v1727 = vshrl.u32 %v1726, 7
    %v1728 = vsub.s32 0, %v1727
    %v1729 = vrot.slane %v1724, %v1728
    %v1732 = vsel %vm127, %v1717, 0
    %1734 = vmatprep.subr.mxu0 0.0
    %1735 = vmatpush1.msra.mxu0 0.0
    %1736 = vmatprep.subr.mxu0 0.0
    %1737 = vmatpush1.msra.mxu0 0.0
    %1738 = vmatprep.subr.mxu0 0.0
    %1739 = vmatpush1.msra.mxu0 0.0
    %1740 = vmatprep.subr.mxu0 0.0
    %1741 = vmatpush1.msra.mxu0 0.0
    %1742 = vmatprep.subr.mxu0 0.0
    %1743 = vmatpush1.msra.mxu0 0.0
    %1744 = vmatprep.subr.mxu0 0.0
    %1745 = vmatpush1.msra.mxu0 0.0
    %1746 = vmatprep.subr.mxu0 0.0
    %1747 = vmatpush1.msra.mxu0 0.0
    %1748 = vmatprep.subr.mxu0 0.0
    %1749 = vmatpush1.msra.mxu0 0.0
    %1750 = vmatprep.subr.mxu0 0.0
    %1751 = vmatpush1.msra.mxu0 0.0
    %1752 = vmatprep.subr.mxu0 0.0
    %1753 = vmatpush1.msra.mxu0 0.0
    %1754 = vmatprep.subr.mxu0 0.0
    %1755 = vmatpush1.msra.mxu0 0.0
    %1756 = vmatprep.subr.mxu0 0.0
    %1757 = vmatpush1.msra.mxu0 0.0
    %1758 = vmatprep.subr.mxu0 0.0
    %1759 = vmatpush1.msra.mxu0 %v1722
    %1760 = vmatprep.subr.mxu0 0.0
    %1761 = vmatpush1.msra.mxu0 %v1721
    %1762 = vmatprep.subr.mxu0 0.0
    %1763 = vmatpush1.msra.mxu0 %v1720
    %1764 = vmatprep.subr.mxu0 0.0
    %1765 = vmatpush1.msra.mxu0 %v1719
    %1766 = vmatprep.subr.mxu0 0.0
    %1767 = vmatpush2.msra.mxu0 0.0
    %1768 = vmatprep.subr.mxu0 0.0
    %1769 = vmatpush2.msra.mxu0 0.0
    %1770 = vmatprep.subr.mxu0 0.0
    %1771 = vmatpush2.msra.mxu0 0.0
    %1772 = vmatprep.subr.mxu0 0.0
    %1773 = vmatpush2.msra.mxu0 0.0
    %1774 = vmatprep.subr.mxu0 0.0
    %1775 = vmatpush2.msra.mxu0 0.0
    %1776 = vmatprep.subr.mxu0 0.0
    %1777 = vmatpush2.msra.mxu0 0.0
    %1778 = vmatprep.subr.mxu0 0.0
    %1779 = vmatpush2.msra.mxu0 0.0
    %1780 = vmatprep.subr.mxu0 0.0
    %1781 = vmatpush2.msra.mxu0 0.0
    %1782 = vmatprep.subr.mxu0 0.0
    %1783 = vmatpush2.msra.mxu0 0.0
    %1784 = vmatprep.subr.mxu0 0.0
    %1785 = vmatpush2.msra.mxu0 0.0
    %1786 = vmatprep.subr.mxu0 0.0
    %1787 = vmatpush2.msra.mxu0 0.0
    %1788 = vmatprep.subr.mxu0 0.0
    %1789 = vmatpush2.msra.mxu0 0.0
    %1790 = vmatprep.subr.mxu0 0.0
    %1791 = vmatpush2.msra.mxu0 0.0
    %1792 = vmatprep.subr.mxu0 0.0
    %1793 = vmatpush2.msra.mxu0 0.0
    %1794 = vmatprep.subr.mxu0 0.0
    %1795 = vmatpush2.msra.mxu0 0.0
    %1796 = vmatprep.subr.mxu0 0.0
    %1797 = vmatpush2.msra.mxu0 0.0
    %1798 = vmatprep.mubr.f32.mxu0 0.0
    %1799 = vmatmul.mubr.f32.gmra.mxu0 %v1732
    %v1800 = vpop.f32.mrf.mxu0
    %v1801 = vadd.f32 %v1729, %v1800
    %v1802 = vpop.f32.mrf.mxu0
    %1803 = vdwg.mxu0
    %v1804 = vmax.f32 %v1801, 0.0
    %s1805 = scalar_lea.vmem [#allocation10], 32
    %v1806 = vld [vmem:[%s1805] sm:$0xff]
    %v1807 = vld [vmem:[%s1805 + $0x8] sm:$0xff]
    %v1808 = vld [vmem:[%s1805 + $0x10] sm:$0xff]
    %v1809 = vld [vmem:[%s1805 + $0x18] sm:$0xff]
    %s1810 = scalar_lea.vmem %s12, 1
    %v1811 = vld [vmem:[%s1810] sm:$0x1]
    %v1813 = vlaneseq
    %v1814 = vshrl.u32 %v1813, 7
    %v1815 = vsub.s32 0, %v1814
    %v1816 = vrot.slane %v1811, %v1815
    %v1819 = vsel %vm127, %v1804, 0
    %1821 = vmatprep.subr.mxu0 0.0
    %1822 = vmatpush1.msra.mxu0 0.0
    %1823 = vmatprep.subr.mxu0 0.0
    %1824 = vmatpush1.msra.mxu0 0.0
    %1825 = vmatprep.subr.mxu0 0.0
    %1826 = vmatpush1.msra.mxu0 0.0
    %1827 = vmatprep.subr.mxu0 0.0
    %1828 = vmatpush1.msra.mxu0 0.0
    %1829 = vmatprep.subr.mxu0 0.0
    %1830 = vmatpush1.msra.mxu0 0.0
    %1831 = vmatprep.subr.mxu0 0.0
    %1832 = vmatpush1.msra.mxu0 0.0
    %1833 = vmatprep.subr.mxu0 0.0
    %1834 = vmatpush1.msra.mxu0 0.0
    %1835 = vmatprep.subr.mxu0 0.0
    %1836 = vmatpush1.msra.mxu0 0.0
    %1837 = vmatprep.subr.mxu0 0.0
    %1838 = vmatpush1.msra.mxu0 0.0
    %1839 = vmatprep.subr.mxu0 0.0
    %1840 = vmatpush1.msra.mxu0 0.0
    %1841 = vmatprep.subr.mxu0 0.0
    %1842 = vmatpush1.msra.mxu0 0.0
    %1843 = vmatprep.subr.mxu0 0.0
    %1844 = vmatpush1.msra.mxu0 0.0
    %1845 = vmatprep.subr.mxu0 0.0
    %1846 = vmatpush1.msra.mxu0 %v1809
    %1847 = vmatprep.subr.mxu0 0.0
    %1848 = vmatpush1.msra.mxu0 %v1808
    %1849 = vmatprep.subr.mxu0 0.0
    %1850 = vmatpush1.msra.mxu0 %v1807
    %1851 = vmatprep.subr.mxu0 0.0
    %1852 = vmatpush1.msra.mxu0 %v1806
    %1853 = vmatprep.subr.mxu0 0.0
    %1854 = vmatpush2.msra.mxu0 0.0
    %1855 = vmatprep.subr.mxu0 0.0
    %1856 = vmatpush2.msra.mxu0 0.0
    %1857 = vmatprep.subr.mxu0 0.0
    %1858 = vmatpush2.msra.mxu0 0.0
    %1859 = vmatprep.subr.mxu0 0.0
    %1860 = vmatpush2.msra.mxu0 0.0
    %1861 = vmatprep.subr.mxu0 0.0
    %1862 = vmatpush2.msra.mxu0 0.0
    %1863 = vmatprep.subr.mxu0 0.0
    %1864 = vmatpush2.msra.mxu0 0.0
    %1865 = vmatprep.subr.mxu0 0.0
    %1866 = vmatpush2.msra.mxu0 0.0
    %1867 = vmatprep.subr.mxu0 0.0
    %1868 = vmatpush2.msra.mxu0 0.0
    %1869 = vmatprep.subr.mxu0 0.0
    %1870 = vmatpush2.msra.mxu0 0.0
    %1871 = vmatprep.subr.mxu0 0.0
    %1872 = vmatpush2.msra.mxu0 0.0
    %1873 = vmatprep.subr.mxu0 0.0
    %1874 = vmatpush2.msra.mxu0 0.0
    %1875 = vmatprep.subr.mxu0 0.0
    %1876 = vmatpush2.msra.mxu0 0.0
    %1877 = vmatprep.subr.mxu0 0.0
    %1878 = vmatpush2.msra.mxu0 0.0
    %1879 = vmatprep.subr.mxu0 0.0
    %1880 = vmatpush2.msra.mxu0 0.0
    %1881 = vmatprep.subr.mxu0 0.0
    %1882 = vmatpush2.msra.mxu0 0.0
    %1883 = vmatprep.subr.mxu0 0.0
    %1884 = vmatpush2.msra.mxu0 0.0
    %1885 = vmatprep.mubr.f32.mxu0 0.0
    %1886 = vmatmul.mubr.f32.gmra.mxu0 %v1819
    %v1887 = vpop.f32.mrf.mxu0
    %v1888 = vadd.f32 %v1816, %v1887
    %v1889 = vpop.f32.mrf.mxu0
    %1890 = vdwg.mxu0
    %v1891 = vsub.f32 0.0, %v1888
    %v1892 = vmul.f32 %v1891, 1.442695
    %v1893 = vpow.pop %v1892
    %v1894 = vadd.f32 %v1893, 1.0
    %v1895 = vrcp.pop %v1894
    %s1896 = scalar_lea.vmem [#allocation11], 8
    %1897 = vst [vmem:[%s1896] sm:$0xff] %v1895
    %s1898 = scalar_lea.vmem %s2, 64
    %v1899 = vld [vmem:[%s1898] sm:$0xff]
    %v1900 = vld [vmem:[%s1898 + $0x8] sm:$0xff]
    %v1901 = vld [vmem:[%s1898 + $0x10] sm:$0xff]
    %v1902 = vld [vmem:[%s1898 + $0x18] sm:$0xff]
    %1903 = vmatprep.subr.mxu0 0.0
    %1904 = vmatpush1.msra.mxu0 0.0
    %1905 = vmatprep.subr.mxu0 0.0
    %1906 = vmatpush1.msra.mxu0 0.0
    %1907 = vmatprep.subr.mxu0 0.0
    %1908 = vmatpush1.msra.mxu0 0.0
    %1909 = vmatprep.subr.mxu0 0.0
    %1910 = vmatpush1.msra.mxu0 0.0
    %1911 = vmatprep.subr.mxu0 0.0
    %1912 = vmatpush1.msra.mxu0 0.0
    %1913 = vmatprep.subr.mxu0 0.0
    %1914 = vmatpush1.msra.mxu0 0.0
    %1915 = vmatprep.subr.mxu0 0.0
    %1916 = vmatpush1.msra.mxu0 0.0
    %1917 = vmatprep.subr.mxu0 0.0
    %1918 = vmatpush1.msra.mxu0 0.0
    %1919 = vmatprep.subr.mxu0 0.0
    %1920 = vmatpush1.msra.mxu0 0.0
    %1921 = vmatprep.subr.mxu0 0.0
    %1922 = vmatpush1.msra.mxu0 0.0
    %1923 = vmatprep.subr.mxu0 0.0
    %1924 = vmatpush1.msra.mxu0 0.0
    %1925 = vmatprep.subr.mxu0 0.0
    %1926 = vmatpush1.msra.mxu0 0.0
    %1927 = vmatprep.subr.mxu0 0.0
    %1928 = vmatpush1.msra.mxu0 %v1902
    %1929 = vmatprep.subr.mxu0 0.0
    %1930 = vmatpush1.msra.mxu0 %v1901
    %1931 = vmatprep.subr.mxu0 0.0
    %1932 = vmatpush1.msra.mxu0 %v1900
    %1933 = vmatprep.subr.mxu0 0.0
    %1934 = vmatpush1.msra.mxu0 %v1899
    %1935 = vmatprep.subr.mxu0 0.0
    %1936 = vmatpush2.msra.mxu0 0.0
    %1937 = vmatprep.subr.mxu0 0.0
    %1938 = vmatpush2.msra.mxu0 0.0
    %1939 = vmatprep.subr.mxu0 0.0
    %1940 = vmatpush2.msra.mxu0 0.0
    %1941 = vmatprep.subr.mxu0 0.0
    %1942 = vmatpush2.msra.mxu0 0.0
    %1943 = vmatprep.subr.mxu0 0.0
    %1944 = vmatpush2.msra.mxu0 0.0
    %1945 = vmatprep.subr.mxu0 0.0
    %1946 = vmatpush2.msra.mxu0 0.0
    %1947 = vmatprep.subr.mxu0 0.0
    %1948 = vmatpush2.msra.mxu0 0.0
    %1949 = vmatprep.subr.mxu0 0.0
    %1950 = vmatpush2.msra.mxu0 0.0
    %1951 = vmatprep.subr.mxu0 0.0
    %1952 = vmatpush2.msra.mxu0 0.0
    %1953 = vmatprep.subr.mxu0 0.0
    %1954 = vmatpush2.msra.mxu0 0.0
    %1955 = vmatprep.subr.mxu0 0.0
    %1956 = vmatpush2.msra.mxu0 0.0
    %1957 = vmatprep.subr.mxu0 0.0
    %1958 = vmatpush2.msra.mxu0 0.0
    %1959 = vmatprep.subr.mxu0 0.0
    %1960 = vmatpush2.msra.mxu0 0.0
    %1961 = vmatprep.subr.mxu0 0.0
    %1962 = vmatpush2.msra.mxu0 0.0
    %1963 = vmatprep.subr.mxu0 0.0
    %1964 = vmatpush2.msra.mxu0 0.0
    %1965 = vmatprep.subr.mxu0 0.0
    %1966 = vmatpush2.msra.mxu0 0.0
    %1967 = vmatprep.mubr.f32.mxu0 0.0
    %1968 = vmatmul.mubr.f32.gmra.mxu0 %v129
    %v1969 = vpop.f32.mrf.mxu0
    %v1970 = vadd.f32 0.0, %v1969
    %v1971 = vpop.f32.mrf.mxu0
    %1972 = vmatprep.mubr.f32.mxu0 0.0
    %1973 = vmatmul.mubr.f32.gmra.mxu0 %v132
    %v1974 = vpop.f32.mrf.mxu0
    %v1975 = vadd.f32 0.0, %v1974
    %v1976 = vpop.f32.mrf.mxu0
    %1977 = vmatprep.mubr.f32.mxu0 0.0
    %1978 = vmatmul.mubr.f32.gmra.mxu0 %v135
    %v1979 = vpop.f32.mrf.mxu0
    %v1980 = vadd.f32 0.0, %v1979
    %v1981 = vpop.f32.mrf.mxu0
    %1982 = vmatprep.mubr.f32.mxu0 0.0
    %1983 = vmatmul.mubr.f32.gmra.mxu0 %v138
    %v1984 = vpop.f32.mrf.mxu0
    %v1985 = vadd.f32 0.0, %v1984
    %v1986 = vpop.f32.mrf.mxu0
    %1987 = vmatprep.mubr.f32.mxu0 0.0
    %1988 = vmatmul.mubr.f32.gmra.mxu0 %v141
    %v1989 = vpop.f32.mrf.mxu0
    %v1990 = vadd.f32 0.0, %v1989
    %v1991 = vpop.f32.mrf.mxu0
    %1992 = vmatprep.mubr.f32.mxu0 0.0
    %1993 = vmatmul.mubr.f32.gmra.mxu0 %v144
    %v1994 = vpop.f32.mrf.mxu0
    %v1995 = vadd.f32 0.0, %v1994
    %v1996 = vpop.f32.mrf.mxu0
    %1997 = vmatprep.mubr.f32.mxu0 0.0
    %1998 = vmatmul.mubr.f32.gmra.mxu0 %v147
    %v1999 = vpop.f32.mrf.mxu0
    %v2000 = vadd.f32 0.0, %v1999
    %v2001 = vpop.f32.mrf.mxu0
    %2002 = vmatprep.mubr.f32.mxu0 0.0
    %2003 = vmatmul.mubr.f32.gmra.mxu0 %v150
    %v2004 = vpop.f32.mrf.mxu0
    %v2005 = vadd.f32 0.0, %v2004
    %v2006 = vpop.f32.mrf.mxu0
    %2007 = vdwg.mxu0
    %v2008 = vtanh.pop %v1970
    %v2009 = vtanh.pop %v1975
    %v2010 = vtanh.pop %v1980
    %v2011 = vtanh.pop %v1985
    %v2012 = vtanh.pop %v1990
    %v2013 = vtanh.pop %v1995
    %v2014 = vtanh.pop %v2000
    %v2015 = vtanh.pop %v2005
    %s2016 = scalar_lea.vmem [#allocation5], 32
    %v2017 = vld [vmem:[%s2016] sm:$0xff]
    %v2018 = vld [vmem:[%s2016 + $0x8] sm:$0xff]
    %v2020 = vsel %vm267, %v2008, 0
    %v2023 = vsel %vm267, %v2009, 0
    %v2026 = vsel %vm267, %v2010, 0
    %v2029 = vsel %vm267, %v2011, 0
    %v2032 = vsel %vm267, %v2012, 0
    %v2035 = vsel %vm267, %v2013, 0
    %v2038 = vsel %vm267, %v2014, 0
    %v2041 = vsel %vm267, %v2015, 0
    %2043 = vmatprep.subr.mxu0 0.0
    %2044 = vmatpush1.msra.mxu0 0.0
    %2045 = vmatprep.subr.mxu0 0.0
    %2046 = vmatpush1.msra.mxu0 0.0
    %2047 = vmatprep.subr.mxu0 0.0
    %2048 = vmatpush1.msra.mxu0 0.0
    %2049 = vmatprep.subr.mxu0 0.0
    %2050 = vmatpush1.msra.mxu0 0.0
    %2051 = vmatprep.subr.mxu0 0.0
    %2052 = vmatpush1.msra.mxu0 0.0
    %2053 = vmatprep.subr.mxu0 0.0
    %2054 = vmatpush1.msra.mxu0 0.0
    %2055 = vmatprep.subr.mxu0 0.0
    %2056 = vmatpush1.msra.mxu0 0.0
    %2057 = vmatprep.subr.mxu0 0.0
    %2058 = vmatpush1.msra.mxu0 0.0
    %2059 = vmatprep.subr.mxu0 0.0
    %2060 = vmatpush1.msra.mxu0 0.0
    %2061 = vmatprep.subr.mxu0 0.0
    %2062 = vmatpush1.msra.mxu0 0.0
    %2063 = vmatprep.subr.mxu0 0.0
    %2064 = vmatpush1.msra.mxu0 0.0
    %2065 = vmatprep.subr.mxu0 0.0
    %2066 = vmatpush1.msra.mxu0 0.0
    %2067 = vmatprep.subr.mxu0 0.0
    %2068 = vmatpush1.msra.mxu0 0.0
    %2069 = vmatprep.subr.mxu0 0.0
    %2070 = vmatpush1.msra.mxu0 0.0
    %2071 = vmatprep.subr.mxu0 0.0
    %2072 = vmatpush1.msra.mxu0 %v2018
    %2073 = vmatprep.subr.mxu0 0.0
    %2074 = vmatpush1.msra.mxu0 %v2017
    %2075 = vmatprep.subr.mxu0 0.0
    %2076 = vmatpush2.msra.mxu0 0.0
    %2077 = vmatprep.subr.mxu0 0.0
    %2078 = vmatpush2.msra.mxu0 0.0
    %2079 = vmatprep.subr.mxu0 0.0
    %2080 = vmatpush2.msra.mxu0 0.0
    %2081 = vmatprep.subr.mxu0 0.0
    %2082 = vmatpush2.msra.mxu0 0.0
    %2083 = vmatprep.subr.mxu0 0.0
    %2084 = vmatpush2.msra.mxu0 0.0
    %2085 = vmatprep.subr.mxu0 0.0
    %2086 = vmatpush2.msra.mxu0 0.0
    %2087 = vmatprep.subr.mxu0 0.0
    %2088 = vmatpush2.msra.mxu0 0.0
    %2089 = vmatprep.subr.mxu0 0.0
    %2090 = vmatpush2.msra.mxu0 0.0
    %2091 = vmatprep.subr.mxu0 0.0
    %2092 = vmatpush2.msra.mxu0 0.0
    %2093 = vmatprep.subr.mxu0 0.0
    %2094 = vmatpush2.msra.mxu0 0.0
    %2095 = vmatprep.subr.mxu0 0.0
    %2096 = vmatpush2.msra.mxu0 0.0
    %2097 = vmatprep.subr.mxu0 0.0
    %2098 = vmatpush2.msra.mxu0 0.0
    %2099 = vmatprep.subr.mxu0 0.0
    %2100 = vmatpush2.msra.mxu0 0.0
    %2101 = vmatprep.subr.mxu0 0.0
    %2102 = vmatpush2.msra.mxu0 0.0
    %2103 = vmatprep.subr.mxu0 0.0
    %2104 = vmatpush2.msra.mxu0 0.0
    %2105 = vmatprep.subr.mxu0 0.0
    %2106 = vmatpush2.msra.mxu0 0.0
    %2107 = vmatprep.mubr.f32.mxu0 0.0
    %2108 = vmatmul.mubr.f32.gmra.mxu0 %v2020
    %v2109 = vpop.f32.mrf.mxu0
    %v2110 = vadd.f32 0.0, %v2109
    %v2111 = vpop.f32.mrf.mxu0
    %2112 = vmatprep.mubr.f32.mxu0 0.0
    %2113 = vmatmul.mubr.f32.gmra.mxu0 %v2023
    %v2114 = vpop.f32.mrf.mxu0
    %v2115 = vadd.f32 0.0, %v2114
    %v2116 = vpop.f32.mrf.mxu0
    %2117 = vmatprep.mubr.f32.mxu0 0.0
    %2118 = vmatmul.mubr.f32.gmra.mxu0 %v2026
    %v2119 = vpop.f32.mrf.mxu0
    %v2120 = vadd.f32 0.0, %v2119
    %v2121 = vpop.f32.mrf.mxu0
    %2122 = vmatprep.mubr.f32.mxu0 0.0
    %2123 = vmatmul.mubr.f32.gmra.mxu0 %v2029
    %v2124 = vpop.f32.mrf.mxu0
    %v2125 = vadd.f32 0.0, %v2124
    %v2126 = vpop.f32.mrf.mxu0
    %2127 = vmatprep.mubr.f32.mxu0 0.0
    %2128 = vmatmul.mubr.f32.gmra.mxu0 %v2032
    %v2129 = vpop.f32.mrf.mxu0
    %v2130 = vadd.f32 0.0, %v2129
    %v2131 = vpop.f32.mrf.mxu0
    %2132 = vmatprep.mubr.f32.mxu0 0.0
    %2133 = vmatmul.mubr.f32.gmra.mxu0 %v2035
    %v2134 = vpop.f32.mrf.mxu0
    %v2135 = vadd.f32 0.0, %v2134
    %v2136 = vpop.f32.mrf.mxu0
    %2137 = vmatprep.mubr.f32.mxu0 0.0
    %2138 = vmatmul.mubr.f32.gmra.mxu0 %v2038
    %v2139 = vpop.f32.mrf.mxu0
    %v2140 = vadd.f32 0.0, %v2139
    %v2141 = vpop.f32.mrf.mxu0
    %2142 = vmatprep.mubr.f32.mxu0 0.0
    %2143 = vmatmul.mubr.f32.gmra.mxu0 %v2041
    %v2144 = vpop.f32.mrf.mxu0
    %v2145 = vadd.f32 0.0, %v2144
    %v2146 = vpop.f32.mrf.mxu0
    %2147 = vdwg.mxu0
    %v2148 = vrot.slane %v2110, 4
    %v2149 = vmax.f32 %v2110, %v2148
    %v2150 = vrot.slane %v2149, 2
    %v2151 = vmax.f32 %v2149, %v2150
    %v2152 = vrot.slane %v2151, 1
    %v2153 = vmax.f32 %v2151, %v2152
    %v2154 = vrot.slane %v2115, 4
    %v2155 = vmax.f32 %v2115, %v2154
    %v2156 = vrot.slane %v2155, 2
    %v2157 = vmax.f32 %v2155, %v2156
    %v2158 = vrot.slane %v2157, 1
    %v2159 = vmax.f32 %v2157, %v2158
    %v2160 = vrot.slane %v2120, 4
    %v2161 = vmax.f32 %v2120, %v2160
    %v2162 = vrot.slane %v2161, 2
    %v2163 = vmax.f32 %v2161, %v2162
    %v2164 = vrot.slane %v2163, 1
    %v2165 = vmax.f32 %v2163, %v2164
    %v2166 = vrot.slane %v2125, 4
    %v2167 = vmax.f32 %v2125, %v2166
    %v2168 = vrot.slane %v2167, 2
    %v2169 = vmax.f32 %v2167, %v2168
    %v2170 = vrot.slane %v2169, 1
    %v2171 = vmax.f32 %v2169, %v2170
    %v2172 = vrot.slane %v2130, 4
    %v2173 = vmax.f32 %v2130, %v2172
    %v2174 = vrot.slane %v2173, 2
    %v2175 = vmax.f32 %v2173, %v2174
    %v2176 = vrot.slane %v2175, 1
    %v2177 = vmax.f32 %v2175, %v2176
    %v2178 = vrot.slane %v2135, 4
    %v2179 = vmax.f32 %v2135, %v2178
    %v2180 = vrot.slane %v2179, 2
    %v2181 = vmax.f32 %v2179, %v2180
    %v2182 = vrot.slane %v2181, 1
    %v2183 = vmax.f32 %v2181, %v2182
    %v2184 = vrot.slane %v2140, 4
    %v2185 = vmax.f32 %v2140, %v2184
    %v2186 = vrot.slane %v2185, 2
    %v2187 = vmax.f32 %v2185, %v2186
    %v2188 = vrot.slane %v2187, 1
    %v2189 = vmax.f32 %v2187, %v2188
    %v2190 = vrot.slane %v2145, 4
    %v2191 = vmax.f32 %v2145, %v2190
    %v2192 = vrot.slane %v2191, 2
    %v2193 = vmax.f32 %v2191, %v2192
    %v2194 = vrot.slane %v2193, 1
    %v2195 = vmax.f32 %v2193, %v2194
    %v2196 = vsub.f32 %v2110, %v2153
    %v2197 = vsub.f32 %v2115, %v2159
    %v2198 = vsub.f32 %v2120, %v2165
    %v2199 = vsub.f32 %v2125, %v2171
    %v2200 = vsub.f32 %v2130, %v2177
    %v2201 = vsub.f32 %v2135, %v2183
    %v2202 = vsub.f32 %v2140, %v2189
    %v2203 = vsub.f32 %v2145, %v2195
    %v2204 = vmul.f32 %v2196, 1.442695
    %v2205 = vpow.pop %v2204
    %v2206 = vmul.f32 %v2197, 1.442695
    %v2207 = vpow.pop %v2206
    %v2208 = vmul.f32 %v2198, 1.442695
    %v2209 = vpow.pop %v2208
    %v2210 = vmul.f32 %v2199, 1.442695
    %v2211 = vpow.pop %v2210
    %v2212 = vmul.f32 %v2200, 1.442695
    %v2213 = vpow.pop %v2212
    %v2214 = vmul.f32 %v2201, 1.442695
    %v2215 = vpow.pop %v2214
    %v2216 = vmul.f32 %v2202, 1.442695
    %v2217 = vpow.pop %v2216
    %v2218 = vmul.f32 %v2203, 1.442695
    %v2219 = vpow.pop %v2218
    %v2220 = vrot.slane %v2205, 4
    %v2221 = vadd.f32 %v2205, %v2220
    %v2222 = vrot.slane %v2221, 2
    %v2223 = vadd.f32 %v2221, %v2222
    %v2224 = vrot.slane %v2223, 1
    %v2225 = vadd.f32 %v2223, %v2224
    %v2226 = vrot.slane %v2207, 4
    %v2227 = vadd.f32 %v2207, %v2226
    %v2228 = vrot.slane %v2227, 2
    %v2229 = vadd.f32 %v2227, %v2228
    %v2230 = vrot.slane %v2229, 1
    %v2231 = vadd.f32 %v2229, %v2230
    %v2232 = vrot.slane %v2209, 4
    %v2233 = vadd.f32 %v2209, %v2232
    %v2234 = vrot.slane %v2233, 2
    %v2235 = vadd.f32 %v2233, %v2234
    %v2236 = vrot.slane %v2235, 1
    %v2237 = vadd.f32 %v2235, %v2236
    %v2238 = vrot.slane %v2211, 4
    %v2239 = vadd.f32 %v2211, %v2238
    %v2240 = vrot.slane %v2239, 2
    %v2241 = vadd.f32 %v2239, %v2240
    %v2242 = vrot.slane %v2241, 1
    %v2243 = vadd.f32 %v2241, %v2242
    %v2244 = vrot.slane %v2213, 4
    %v2245 = vadd.f32 %v2213, %v2244
    %v2246 = vrot.slane %v2245, 2
    %v2247 = vadd.f32 %v2245, %v2246
    %v2248 = vrot.slane %v2247, 1
    %v2249 = vadd.f32 %v2247, %v2248
    %v2250 = vrot.slane %v2215, 4
    %v2251 = vadd.f32 %v2215, %v2250
    %v2252 = vrot.slane %v2251, 2
    %v2253 = vadd.f32 %v2251, %v2252
    %v2254 = vrot.slane %v2253, 1
    %v2255 = vadd.f32 %v2253, %v2254
    %v2256 = vrot.slane %v2217, 4
    %v2257 = vadd.f32 %v2217, %v2256
    %v2258 = vrot.slane %v2257, 2
    %v2259 = vadd.f32 %v2257, %v2258
    %v2260 = vrot.slane %v2259, 1
    %v2261 = vadd.f32 %v2259, %v2260
    %v2262 = vrot.slane %v2219, 4
    %v2263 = vadd.f32 %v2219, %v2262
    %v2264 = vrot.slane %v2263, 2
    %v2265 = vadd.f32 %v2263, %v2264
    %v2266 = vrot.slane %v2265, 1
    %v2267 = vadd.f32 %v2265, %v2266
    %v2268 = vrcp.pop %v2225
    %v2269 = vrcp.pop %v2231
    %v2270 = vrcp.pop %v2237
    %v2271 = vrcp.pop %v2243
    %v2272 = vrcp.pop %v2249
    %v2273 = vrcp.pop %v2255
    %v2274 = vrcp.pop %v2261
    %v2275 = vrcp.pop %v2267
    %v2276 = vmul.f32 %v2205, %v2268
    %v2277 = vmul.f32 %v2207, %v2269
    %v2278 = vmul.f32 %v2209, %v2270
    %v2279 = vmul.f32 %v2211, %v2271
    %v2280 = vmul.f32 %v2213, %v2272
    %v2281 = vmul.f32 %v2215, %v2273
    %v2282 = vmul.f32 %v2217, %v2274
    %v2283 = vmul.f32 %v2219, %v2275
    %s2284 = scalar_lea.vmem %s4, 2
    %v2285 = vld [vmem:[%s2284] sm:$0x1]
    %v2287 = vlaneseq
    %v2288 = vshrl.u32 %v2287, 7
    %v2289 = vsub.s32 0, %v2288
    %v2290 = vrot.slane %v2285, %v2289
    %v2292 = vmul.f32 %v2276, %v2290
    %v2293 = vmul.f32 %v2277, %v2290
    %v2294 = vmul.f32 %v2278, %v2290
    %v2295 = vmul.f32 %v2279, %v2290
    %v2296 = vmul.f32 %v2280, %v2290
    %v2297 = vmul.f32 %v2281, %v2290
    %v2298 = vmul.f32 %v2282, %v2290
    %v2299 = vmul.f32 %v2283, %v2290
    %2300 = vadd.xlane.f32.xlu0 %v2292
    %v2301 = vpop.xlane.xlu0 %2300
    %2302 = vadd.xlane.f32.xlu0 %v2293
    %v2303 = vpop.xlane.xlu0 %2302
    %2304 = vadd.xlane.f32.xlu0 %v2294
    %v2305 = vpop.xlane.xlu0 %2304
    %2306 = vadd.xlane.f32.xlu0 %v2295
    %v2307 = vpop.xlane.xlu0 %2306
    %2308 = vadd.xlane.f32.xlu0 %v2296
    %v2309 = vpop.xlane.xlu0 %2308
    %2310 = vadd.xlane.f32.xlu0 %v2297
    %v2311 = vpop.xlane.xlu0 %2310
    %2312 = vadd.xlane.f32.xlu0 %v2298
    %v2313 = vpop.xlane.xlu0 %2312
    %2314 = vadd.xlane.f32.xlu0 %v2299
    %v2315 = vpop.xlane.xlu0 %2314
    %v2316 = vmul.f32 %v2301, %v115
    %v2317 = vmul.f32 %v2303, %v116
    %v2318 = vmul.f32 %v2305, %v117
    %v2319 = vmul.f32 %v2307, %v118
    %v2320 = vmul.f32 %v2309, %v119
    %v2321 = vmul.f32 %v2311, %v120
    %v2322 = vmul.f32 %v2313, %v121
    %v2323 = vmul.f32 %v2315, %v122
    %v2324 = vsel %vm127, %v2316, 0.0
    %v2325 = vrot.slane %v2324, 4
    %v2326 = vadd.f32 %v2324, %v2325
    %v2327 = vrot.slane %v2326, 2
    %v2328 = vadd.f32 %v2326, %v2327
    %v2329 = vrot.slane %v2328, 1
    %v2330 = vadd.f32 %v2328, %v2329
    %v2331 = vsel %vm127, %v2317, 0.0
    %v2332 = vrot.slane %v2331, 4
    %v2333 = vadd.f32 %v2331, %v2332
    %v2334 = vrot.slane %v2333, 2
    %v2335 = vadd.f32 %v2333, %v2334
    %v2336 = vrot.slane %v2335, 1
    %v2337 = vadd.f32 %v2335, %v2336
    %v2338 = vsel %vm127, %v2318, 0.0
    %v2339 = vrot.slane %v2338, 4
    %v2340 = vadd.f32 %v2338, %v2339
    %v2341 = vrot.slane %v2340, 2
    %v2342 = vadd.f32 %v2340, %v2341
    %v2343 = vrot.slane %v2342, 1
    %v2344 = vadd.f32 %v2342, %v2343
    %v2345 = vsel %vm127, %v2319, 0.0
    %v2346 = vrot.slane %v2345, 4
    %v2347 = vadd.f32 %v2345, %v2346
    %v2348 = vrot.slane %v2347, 2
    %v2349 = vadd.f32 %v2347, %v2348
    %v2350 = vrot.slane %v2349, 1
    %v2351 = vadd.f32 %v2349, %v2350
    %v2352 = vsel %vm127, %v2320, 0.0
    %v2353 = vrot.slane %v2352, 4
    %v2354 = vadd.f32 %v2352, %v2353
    %v2355 = vrot.slane %v2354, 2
    %v2356 = vadd.f32 %v2354, %v2355
    %v2357 = vrot.slane %v2356, 1
    %v2358 = vadd.f32 %v2356, %v2357
    %v2359 = vsel %vm127, %v2321, 0.0
    %v2360 = vrot.slane %v2359, 4
    %v2361 = vadd.f32 %v2359, %v2360
    %v2362 = vrot.slane %v2361, 2
    %v2363 = vadd.f32 %v2361, %v2362
    %v2364 = vrot.slane %v2363, 1
    %v2365 = vadd.f32 %v2363, %v2364
    %v2366 = vsel %vm127, %v2322, 0.0
    %v2367 = vrot.slane %v2366, 4
    %v2368 = vadd.f32 %v2366, %v2367
    %v2369 = vrot.slane %v2368, 2
    %v2370 = vadd.f32 %v2368, %v2369
    %v2371 = vrot.slane %v2370, 1
    %v2372 = vadd.f32 %v2370, %v2371
    %v2373 = vsel %vm127, %v2323, 0.0
    %v2374 = vrot.slane %v2373, 4
    %v2375 = vadd.f32 %v2373, %v2374
    %v2376 = vrot.slane %v2375, 2
    %v2377 = vadd.f32 %v2375, %v2376
    %v2378 = vrot.slane %v2377, 1
    %v2379 = vadd.f32 %v2377, %v2378
    %s2380 = scalar_lea.vmem [#allocation7], 32
    %v2381 = vld [vmem:[%s2380] sm:$0xff]
    %v2382 = vld [vmem:[%s2380 + $0x8] sm:$0xff]
    %s2383 = scalar_lea.vmem %s6, 64
    %v2384 = vld [vmem:[%s2383] sm:$0xff]
    %v2385 = vld [vmem:[%s2383 + $0x8] sm:$0xff]
    %v2386 = vld [vmem:[%s2383 + $0x10] sm:$0xff]
    %v2387 = vld [vmem:[%s2383 + $0x18] sm:$0xff]
    %v2396 = vsel %vm642, %v2337, %v2330
    %v2397 = vsel %vm644, %v2344, %v2396
    %v2398 = vsel %vm646, %v2351, %v2397
    %v2399 = vsel %vm648, %v2358, %v2398
    %v2400 = vsel %vm650, %v2365, %v2399
    %v2401 = vsel %vm652, %v2372, %v2400
    %v2402 = vsel %vm654, %v2379, %v2401
    %v2403 = vsel %vm127, %v2402, 0
    %2405 = vmatprep.subr.mxu0 0.0
    %2406 = vmatpush1.msra.mxu0 0.0
    %2407 = vmatprep.subr.mxu0 0.0
    %2408 = vmatpush1.msra.mxu0 0.0
    %2409 = vmatprep.subr.mxu0 0.0
    %2410 = vmatpush1.msra.mxu0 0.0
    %2411 = vmatprep.subr.mxu0 0.0
    %2412 = vmatpush1.msra.mxu0 0.0
    %2413 = vmatprep.subr.mxu0 0.0
    %2414 = vmatpush1.msra.mxu0 0.0
    %2415 = vmatprep.subr.mxu0 0.0
    %2416 = vmatpush1.msra.mxu0 0.0
    %2417 = vmatprep.subr.mxu0 0.0
    %2418 = vmatpush1.msra.mxu0 0.0
    %2419 = vmatprep.subr.mxu0 0.0
    %2420 = vmatpush1.msra.mxu0 0.0
    %2421 = vmatprep.subr.mxu0 0.0
    %2422 = vmatpush1.msra.mxu0 0.0
    %2423 = vmatprep.subr.mxu0 0.0
    %2424 = vmatpush1.msra.mxu0 0.0
    %2425 = vmatprep.subr.mxu0 0.0
    %2426 = vmatpush1.msra.mxu0 0.0
    %2427 = vmatprep.subr.mxu0 0.0
    %2428 = vmatpush1.msra.mxu0 0.0
    %2429 = vmatprep.subr.mxu0 0.0
    %2430 = vmatpush1.msra.mxu0 %v2387
    %2431 = vmatprep.subr.mxu0 0.0
    %2432 = vmatpush1.msra.mxu0 %v2386
    %2433 = vmatprep.subr.mxu0 0.0
    %2434 = vmatpush1.msra.mxu0 %v2385
    %2435 = vmatprep.subr.mxu0 0.0
    %2436 = vmatpush1.msra.mxu0 %v2384
    %2437 = vmatprep.subr.mxu0 0.0
    %2438 = vmatpush2.msra.mxu0 0.0
    %2439 = vmatprep.subr.mxu0 0.0
    %2440 = vmatpush2.msra.mxu0 0.0
    %2441 = vmatprep.subr.mxu0 0.0
    %2442 = vmatpush2.msra.mxu0 0.0
    %2443 = vmatprep.subr.mxu0 0.0
    %2444 = vmatpush2.msra.mxu0 0.0
    %2445 = vmatprep.subr.mxu0 0.0
    %2446 = vmatpush2.msra.mxu0 0.0
    %2447 = vmatprep.subr.mxu0 0.0
    %2448 = vmatpush2.msra.mxu0 0.0
    %2449 = vmatprep.subr.mxu0 0.0
    %2450 = vmatpush2.msra.mxu0 0.0
    %2451 = vmatprep.subr.mxu0 0.0
    %2452 = vmatpush2.msra.mxu0 0.0
    %2453 = vmatprep.subr.mxu0 0.0
    %2454 = vmatpush2.msra.mxu0 0.0
    %2455 = vmatprep.subr.mxu0 0.0
    %2456 = vmatpush2.msra.mxu0 0.0
    %2457 = vmatprep.subr.mxu0 0.0
    %2458 = vmatpush2.msra.mxu0 0.0
    %2459 = vmatprep.subr.mxu0 0.0
    %2460 = vmatpush2.msra.mxu0 0.0
    %2461 = vmatprep.subr.mxu0 0.0
    %2462 = vmatpush2.msra.mxu0 0.0
    %2463 = vmatprep.subr.mxu0 0.0
    %2464 = vmatpush2.msra.mxu0 0.0
    %2465 = vmatprep.subr.mxu0 0.0
    %2466 = vmatpush2.msra.mxu0 0.0
    %2467 = vmatprep.subr.mxu0 0.0
    %2468 = vmatpush2.msra.mxu0 0.0
    %2469 = vmatprep.mubr.f32.mxu0 0.0
    %2470 = vmatmul.mubr.f32.gmra.mxu0 %v2403
    %v2471 = vpop.f32.mrf.mxu0
    %v2472 = vadd.f32 0.0, %v2471
    %v2473 = vpop.f32.mrf.mxu0
    %2474 = vdwg.mxu0
    %2475 = vmatprep.subr.mxu0 0.0
    %2476 = vmatpush1.msra.mxu0 0.0
    %2477 = vmatprep.subr.mxu0 0.0
    %2478 = vmatpush1.msra.mxu0 0.0
    %2479 = vmatprep.subr.mxu0 0.0
    %2480 = vmatpush1.msra.mxu0 0.0
    %2481 = vmatprep.subr.mxu0 0.0
    %2482 = vmatpush1.msra.mxu0 0.0
    %2483 = vmatprep.subr.mxu0 0.0
    %2484 = vmatpush1.msra.mxu0 0.0
    %2485 = vmatprep.subr.mxu0 0.0
    %2486 = vmatpush1.msra.mxu0 0.0
    %2487 = vmatprep.subr.mxu0 0.0
    %2488 = vmatpush1.msra.mxu0 0.0
    %2489 = vmatprep.subr.mxu0 0.0
    %2490 = vmatpush1.msra.mxu0 0.0
    %2491 = vmatprep.subr.mxu0 0.0
    %2492 = vmatpush1.msra.mxu0 0.0
    %2493 = vmatprep.subr.mxu0 0.0
    %2494 = vmatpush1.msra.mxu0 0.0
    %2495 = vmatprep.subr.mxu0 0.0
    %2496 = vmatpush1.msra.mxu0 0.0
    %2497 = vmatprep.subr.mxu0 0.0
    %2498 = vmatpush1.msra.mxu0 0.0
    %2499 = vmatprep.subr.mxu0 0.0
    %2500 = vmatpush1.msra.mxu0 0.0
    %2501 = vmatprep.subr.mxu0 0.0
    %2502 = vmatpush1.msra.mxu0 0.0
    %2503 = vmatprep.subr.mxu0 0.0
    %2504 = vmatpush1.msra.mxu0 %v2382
    %2505 = vmatprep.subr.mxu0 0.0
    %2506 = vmatpush1.msra.mxu0 %v2381
    %2507 = vmatprep.subr.mxu0 0.0
    %2508 = vmatpush2.msra.mxu0 0.0
    %2509 = vmatprep.subr.mxu0 0.0
    %2510 = vmatpush2.msra.mxu0 0.0
    %2511 = vmatprep.subr.mxu0 0.0
    %2512 = vmatpush2.msra.mxu0 0.0
    %2513 = vmatprep.subr.mxu0 0.0
    %2514 = vmatpush2.msra.mxu0 0.0
    %2515 = vmatprep.subr.mxu0 0.0
    %2516 = vmatpush2.msra.mxu0 0.0
    %2517 = vmatprep.subr.mxu0 0.0
    %2518 = vmatpush2.msra.mxu0 0.0
    %2519 = vmatprep.subr.mxu0 0.0
    %2520 = vmatpush2.msra.mxu0 0.0
    %2521 = vmatprep.subr.mxu0 0.0
    %2522 = vmatpush2.msra.mxu0 0.0
    %2523 = vmatprep.subr.mxu0 0.0
    %2524 = vmatpush2.msra.mxu0 0.0
    %2525 = vmatprep.subr.mxu0 0.0
    %2526 = vmatpush2.msra.mxu0 0.0
    %2527 = vmatprep.subr.mxu0 0.0
    %2528 = vmatpush2.msra.mxu0 0.0
    %2529 = vmatprep.subr.mxu0 0.0
    %2530 = vmatpush2.msra.mxu0 0.0
    %2531 = vmatprep.subr.mxu0 0.0
    %2532 = vmatpush2.msra.mxu0 0.0
    %2533 = vmatprep.subr.mxu0 0.0
    %2534 = vmatpush2.msra.mxu0 0.0
    %2535 = vmatprep.subr.mxu0 0.0
    %2536 = vmatpush2.msra.mxu0 0.0
    %2537 = vmatprep.subr.mxu0 0.0
    %2538 = vmatpush2.msra.mxu0 0.0
    %2539 = vmatprep.mubr.f32.mxu0 0.0
    %2540 = vmatmul.mubr.f32.gmra.mxu0 %v729
    %v2541 = vpop.f32.mrf.mxu0
    %v2542 = vadd.f32 %v2472, %v2541
    %v2543 = vpop.f32.mrf.mxu0
    %2544 = vdwg.mxu0
    %s2545 = scalar_lea.vmem %s8, 2
    %v2546 = vld [vmem:[%s2545] sm:$0x1]
    %v2548 = vlaneseq
    %v2549 = vshrl.u32 %v2548, 7
    %v2550 = vsub.s32 0, %v2549
    %v2551 = vrot.slane %v2546, %v2550
    %v2553 = vadd.f32 %v2542, %v2551
    %s2554 = scalar_lea.vmem %s7, 64
    %v2555 = vld [vmem:[%s2554] sm:$0xff]
    %v2556 = vld [vmem:[%s2554 + $0x8] sm:$0xff]
    %v2557 = vld [vmem:[%s2554 + $0x10] sm:$0xff]
    %v2558 = vld [vmem:[%s2554 + $0x18] sm:$0xff]
    %2559 = vmatprep.subr.mxu0 0.0
    %2560 = vmatpush1.msra.mxu0 0.0
    %2561 = vmatprep.subr.mxu0 0.0
    %2562 = vmatpush1.msra.mxu0 0.0
    %2563 = vmatprep.subr.mxu0 0.0
    %2564 = vmatpush1.msra.mxu0 0.0
    %2565 = vmatprep.subr.mxu0 0.0
    %2566 = vmatpush1.msra.mxu0 0.0
    %2567 = vmatprep.subr.mxu0 0.0
    %2568 = vmatpush1.msra.mxu0 0.0
    %2569 = vmatprep.subr.mxu0 0.0
    %2570 = vmatpush1.msra.mxu0 0.0
    %2571 = vmatprep.subr.mxu0 0.0
    %2572 = vmatpush1.msra.mxu0 0.0
    %2573 = vmatprep.subr.mxu0 0.0
    %2574 = vmatpush1.msra.mxu0 0.0
    %2575 = vmatprep.subr.mxu0 0.0
    %2576 = vmatpush1.msra.mxu0 0.0
    %2577 = vmatprep.subr.mxu0 0.0
    %2578 = vmatpush1.msra.mxu0 0.0
    %2579 = vmatprep.subr.mxu0 0.0
    %2580 = vmatpush1.msra.mxu0 0.0
    %2581 = vmatprep.subr.mxu0 0.0
    %2582 = vmatpush1.msra.mxu0 0.0
    %2583 = vmatprep.subr.mxu0 0.0
    %2584 = vmatpush1.msra.mxu0 %v2558
    %2585 = vmatprep.subr.mxu0 0.0
    %2586 = vmatpush1.msra.mxu0 %v2557
    %2587 = vmatprep.subr.mxu0 0.0
    %2588 = vmatpush1.msra.mxu0 %v2556
    %2589 = vmatprep.subr.mxu0 0.0
    %2590 = vmatpush1.msra.mxu0 %v2555
    %2591 = vmatprep.subr.mxu0 0.0
    %2592 = vmatpush2.msra.mxu0 0.0
    %2593 = vmatprep.subr.mxu0 0.0
    %2594 = vmatpush2.msra.mxu0 0.0
    %2595 = vmatprep.subr.mxu0 0.0
    %2596 = vmatpush2.msra.mxu0 0.0
    %2597 = vmatprep.subr.mxu0 0.0
    %2598 = vmatpush2.msra.mxu0 0.0
    %2599 = vmatprep.subr.mxu0 0.0
    %2600 = vmatpush2.msra.mxu0 0.0
    %2601 = vmatprep.subr.mxu0 0.0
    %2602 = vmatpush2.msra.mxu0 0.0
    %2603 = vmatprep.subr.mxu0 0.0
    %2604 = vmatpush2.msra.mxu0 0.0
    %2605 = vmatprep.subr.mxu0 0.0
    %2606 = vmatpush2.msra.mxu0 0.0
    %2607 = vmatprep.subr.mxu0 0.0
    %2608 = vmatpush2.msra.mxu0 0.0
    %2609 = vmatprep.subr.mxu0 0.0
    %2610 = vmatpush2.msra.mxu0 0.0
    %2611 = vmatprep.subr.mxu0 0.0
    %2612 = vmatpush2.msra.mxu0 0.0
    %2613 = vmatprep.subr.mxu0 0.0
    %2614 = vmatpush2.msra.mxu0 0.0
    %2615 = vmatprep.subr.mxu0 0.0
    %2616 = vmatpush2.msra.mxu0 0.0
    %2617 = vmatprep.subr.mxu0 0.0
    %2618 = vmatpush2.msra.mxu0 0.0
    %2619 = vmatprep.subr.mxu0 0.0
    %2620 = vmatpush2.msra.mxu0 0.0
    %2621 = vmatprep.subr.mxu0 0.0
    %2622 = vmatpush2.msra.mxu0 0.0
    %2623 = vmatprep.mubr.f32.mxu0 0.0
    %2624 = vmatmul.mubr.f32.gmra.mxu0 %v1732
    %v2625 = vpop.f32.mrf.mxu0
    %v2626 = vadd.f32 0.0, %v2625
    %v2627 = vpop.f32.mrf.mxu0
    %2628 = vdwg.mxu0
    %v2629 = vadd.f32 %v2553, %v2626
    %v2630 = vmax.f32 %v2629, 0.0
    %s2631 = scalar_lea.vmem [#allocation8], 64
    %v2632 = vld [vmem:[%s2631] sm:$0xff]
    %v2633 = vld [vmem:[%s2631 + $0x8] sm:$0xff]
    %v2634 = vld [vmem:[%s2631 + $0x10] sm:$0xff]
    %v2635 = vld [vmem:[%s2631 + $0x18] sm:$0xff]
    %s2636 = scalar_lea.vmem %s10, 2
    %v2637 = vld [vmem:[%s2636] sm:$0x1]
    %v2639 = vlaneseq
    %v2640 = vshrl.u32 %v2639, 7
    %v2641 = vsub.s32 0, %v2640
    %v2642 = vrot.slane %v2637, %v2641
    %v2645 = vsel %vm127, %v2630, 0
    %2647 = vmatprep.subr.mxu0 0.0
    %2648 = vmatpush1.msra.mxu0 0.0
    %2649 = vmatprep.subr.mxu0 0.0
    %2650 = vmatpush1.msra.mxu0 0.0
    %2651 = vmatprep.subr.mxu0 0.0
    %2652 = vmatpush1.msra.mxu0 0.0
    %2653 = vmatprep.subr.mxu0 0.0
    %2654 = vmatpush1.msra.mxu0 0.0
    %2655 = vmatprep.subr.mxu0 0.0
    %2656 = vmatpush1.msra.mxu0 0.0
    %2657 = vmatprep.subr.mxu0 0.0
    %2658 = vmatpush1.msra.mxu0 0.0
    %2659 = vmatprep.subr.mxu0 0.0
    %2660 = vmatpush1.msra.mxu0 0.0
    %2661 = vmatprep.subr.mxu0 0.0
    %2662 = vmatpush1.msra.mxu0 0.0
    %2663 = vmatprep.subr.mxu0 0.0
    %2664 = vmatpush1.msra.mxu0 0.0
    %2665 = vmatprep.subr.mxu0 0.0
    %2666 = vmatpush1.msra.mxu0 0.0
    %2667 = vmatprep.subr.mxu0 0.0
    %2668 = vmatpush1.msra.mxu0 0.0
    %2669 = vmatprep.subr.mxu0 0.0
    %2670 = vmatpush1.msra.mxu0 0.0
    %2671 = vmatprep.subr.mxu0 0.0
    %2672 = vmatpush1.msra.mxu0 %v2635
    %2673 = vmatprep.subr.mxu0 0.0
    %2674 = vmatpush1.msra.mxu0 %v2634
    %2675 = vmatprep.subr.mxu0 0.0
    %2676 = vmatpush1.msra.mxu0 %v2633
    %2677 = vmatprep.subr.mxu0 0.0
    %2678 = vmatpush1.msra.mxu0 %v2632
    %2679 = vmatprep.subr.mxu0 0.0
    %2680 = vmatpush2.msra.mxu0 0.0
    %2681 = vmatprep.subr.mxu0 0.0
    %2682 = vmatpush2.msra.mxu0 0.0
    %2683 = vmatprep.subr.mxu0 0.0
    %2684 = vmatpush2.msra.mxu0 0.0
    %2685 = vmatprep.subr.mxu0 0.0
    %2686 = vmatpush2.msra.mxu0 0.0
    %2687 = vmatprep.subr.mxu0 0.0
    %2688 = vmatpush2.msra.mxu0 0.0
    %2689 = vmatprep.subr.mxu0 0.0
    %2690 = vmatpush2.msra.mxu0 0.0
    %2691 = vmatprep.subr.mxu0 0.0
    %2692 = vmatpush2.msra.mxu0 0.0
    %2693 = vmatprep.subr.mxu0 0.0
    %2694 = vmatpush2.msra.mxu0 0.0
    %2695 = vmatprep.subr.mxu0 0.0
    %2696 = vmatpush2.msra.mxu0 0.0
    %2697 = vmatprep.subr.mxu0 0.0
    %2698 = vmatpush2.msra.mxu0 0.0
    %2699 = vmatprep.subr.mxu0 0.0
    %2700 = vmatpush2.msra.mxu0 0.0
    %2701 = vmatprep.subr.mxu0 0.0
    %2702 = vmatpush2.msra.mxu0 0.0
    %2703 = vmatprep.subr.mxu0 0.0
    %2704 = vmatpush2.msra.mxu0 0.0
    %2705 = vmatprep.subr.mxu0 0.0
    %2706 = vmatpush2.msra.mxu0 0.0
    %2707 = vmatprep.subr.mxu0 0.0
    %2708 = vmatpush2.msra.mxu0 0.0
    %2709 = vmatprep.subr.mxu0 0.0
    %2710 = vmatpush2.msra.mxu0 0.0
    %2711 = vmatprep.mubr.f32.mxu0 0.0
    %2712 = vmatmul.mubr.f32.gmra.mxu0 %v2645
    %v2713 = vpop.f32.mrf.mxu0
    %v2714 = vadd.f32 %v2642, %v2713
    %v2715 = vpop.f32.mrf.mxu0
    %2716 = vdwg.mxu0
    %v2717 = vmax.f32 %v2714, 0.0
    %s2718 = scalar_lea.vmem [#allocation10], 64
    %v2719 = vld [vmem:[%s2718] sm:$0xff]
    %v2720 = vld [vmem:[%s2718 + $0x8] sm:$0xff]
    %v2721 = vld [vmem:[%s2718 + $0x10] sm:$0xff]
    %v2722 = vld [vmem:[%s2718 + $0x18] sm:$0xff]
    %s2723 = scalar_lea.vmem %s12, 2
    %v2724 = vld [vmem:[%s2723] sm:$0x1]
    %v2726 = vlaneseq
    %v2727 = vshrl.u32 %v2726, 7
    %v2728 = vsub.s32 0, %v2727
    %v2729 = vrot.slane %v2724, %v2728
    %v2732 = vsel %vm127, %v2717, 0
    %2734 = vmatprep.subr.mxu0 0.0
    %2735 = vmatpush1.msra.mxu0 0.0
    %2736 = vmatprep.subr.mxu0 0.0
    %2737 = vmatpush1.msra.mxu0 0.0
    %2738 = vmatprep.subr.mxu0 0.0
    %2739 = vmatpush1.msra.mxu0 0.0
    %2740 = vmatprep.subr.mxu0 0.0
    %2741 = vmatpush1.msra.mxu0 0.0
    %2742 = vmatprep.subr.mxu0 0.0
    %2743 = vmatpush1.msra.mxu0 0.0
    %2744 = vmatprep.subr.mxu0 0.0
    %2745 = vmatpush1.msra.mxu0 0.0
    %2746 = vmatprep.subr.mxu0 0.0
    %2747 = vmatpush1.msra.mxu0 0.0
    %2748 = vmatprep.subr.mxu0 0.0
    %2749 = vmatpush1.msra.mxu0 0.0
    %2750 = vmatprep.subr.mxu0 0.0
    %2751 = vmatpush1.msra.mxu0 0.0
    %2752 = vmatprep.subr.mxu0 0.0
    %2753 = vmatpush1.msra.mxu0 0.0
    %2754 = vmatprep.subr.mxu0 0.0
    %2755 = vmatpush1.msra.mxu0 0.0
    %2756 = vmatprep.subr.mxu0 0.0
    %2757 = vmatpush1.msra.mxu0 0.0
    %2758 = vmatprep.subr.mxu0 0.0
    %2759 = vmatpush1.msra.mxu0 %v2722
    %2760 = vmatprep.subr.mxu0 0.0
    %2761 = vmatpush1.msra.mxu0 %v2721
    %2762 = vmatprep.subr.mxu0 0.0
    %2763 = vmatpush1.msra.mxu0 %v2720
    %2764 = vmatprep.subr.mxu0 0.0
    %2765 = vmatpush1.msra.mxu0 %v2719
    %2766 = vmatprep.subr.mxu0 0.0
    %2767 = vmatpush2.msra.mxu0 0.0
    %2768 = vmatprep.subr.mxu0 0.0
    %2769 = vmatpush2.msra.mxu0 0.0
    %2770 = vmatprep.subr.mxu0 0.0
    %2771 = vmatpush2.msra.mxu0 0.0
    %2772 = vmatprep.subr.mxu0 0.0
    %2773 = vmatpush2.msra.mxu0 0.0
    %2774 = vmatprep.subr.mxu0 0.0
    %2775 = vmatpush2.msra.mxu0 0.0
    %2776 = vmatprep.subr.mxu0 0.0
    %2777 = vmatpush2.msra.mxu0 0.0
    %2778 = vmatprep.subr.mxu0 0.0
    %2779 = vmatpush2.msra.mxu0 0.0
    %2780 = vmatprep.subr.mxu0 0.0
    %2781 = vmatpush2.msra.mxu0 0.0
    %2782 = vmatprep.subr.mxu0 0.0
    %2783 = vmatpush2.msra.mxu0 0.0
    %2784 = vmatprep.subr.mxu0 0.0
    %2785 = vmatpush2.msra.mxu0 0.0
    %2786 = vmatprep.subr.mxu0 0.0
    %2787 = vmatpush2.msra.mxu0 0.0
    %2788 = vmatprep.subr.mxu0 0.0
    %2789 = vmatpush2.msra.mxu0 0.0
    %2790 = vmatprep.subr.mxu0 0.0
    %2791 = vmatpush2.msra.mxu0 0.0
    %2792 = vmatprep.subr.mxu0 0.0
    %2793 = vmatpush2.msra.mxu0 0.0
    %2794 = vmatprep.subr.mxu0 0.0
    %2795 = vmatpush2.msra.mxu0 0.0
    %2796 = vmatprep.subr.mxu0 0.0
    %2797 = vmatpush2.msra.mxu0 0.0
    %2798 = vmatprep.mubr.f32.mxu0 0.0
    %2799 = vmatmul.mubr.f32.gmra.mxu0 %v2732
    %v2800 = vpop.f32.mrf.mxu0
    %v2801 = vadd.f32 %v2729, %v2800
    %v2802 = vpop.f32.mrf.mxu0
    %2803 = vdwg.mxu0
    %v2804 = vsub.f32 0.0, %v2801
    %v2805 = vmul.f32 %v2804, 1.442695
    %v2806 = vpow.pop %v2805
    %v2807 = vadd.f32 %v2806, 1.0
    %v2808 = vrcp.pop %v2807
    %s2809 = scalar_lea.vmem [#allocation11], 16
    %2810 = vst [vmem:[%s2809] sm:$0xff] %v2808
    %2811 = vst.msk [vmem:[#allocation12] sm:$0xff] %vm127, %v2630
    // Predicated region
    $region74: #{tpu_custom_call.1} parent=1 // pred_check
      _
    $region75: #{tpu_custom_call.1} parent=1 // pred_check_branch
      %2813 = sbr.rel (0) target = $region77
    $region76: #{tpu_custom_call.1} parent=1 // pred_region
      %s2815 = ssub.s32 384, 384
      %2816 = vsyncadd [#allocation4], %s2815
      %s2817 = sshll.u32 [#allocation11], 4
      %s2818 = int_to_ptr.vmem [resolvable:$true] %s2817
      %2823 = dma.vmem_to_hbm [thread:$0]  %s2818, 384, %s13, [#allocation4], 128, 128, 8
    $region77: #{tpu_custom_call.1} parent=1 // pred_fallthru
      _
    // Predicated region
    $region78: #{tpu_custom_call.1} parent=1 // pred_check
      _
    $region79: #{tpu_custom_call.1} parent=1 // pred_check_branch
      %2825 = sbr.rel (0) target = $region81
    $region80: #{tpu_custom_call.1} parent=1 // pred_region
      %s2827 = ssub.s32 128, 128
      %2828 = vsyncadd [#allocation13], %s2827
      %s2830 = sshll.u32 [#allocation12], 4
      %s2831 = int_to_ptr.vmem [resolvable:$true] %s2830
      %2833 = dma.vmem_to_hbm [thread:$0]  %s2831, 128, %s14, [#allocation13]
    $region81: #{tpu_custom_call.1} parent=1 // pred_fallthru
      _
    // Predicated region
    $region82: #{tpu_custom_call.1} parent=1 // pred_check
      _
    $region83: #{tpu_custom_call.1} parent=1 // pred_check_branch
      %2835 = sbr.rel (0) target = $region85
    $region84: #{tpu_custom_call.1} parent=1 // pred_region
      %2836 = dma.done [#allocation4], 384
    $region85: #{tpu_custom_call.1} parent=1 // pred_fallthru
      _
    // Predicated region
    $region86: #{tpu_custom_call.1} parent=1 // pred_check
      _
    $region87: #{tpu_custom_call.1} parent=1 // pred_check_branch
      %2838 = sbr.rel (0) target = $region89
    $region88: #{tpu_custom_call.1} parent=1 // pred_region
      %2839 = dma.done [#allocation13], 128
    $region89: #{tpu_custom_call.1} parent=1 // pred_fallthru
      _
    %2840 = vsyncpa [#allocation3], 1
    %2841 = vsyncpa [#allocation6], 1
    %2842 = vsyncpa [#allocation9], 1
    %2843 = vsyncpa [#allocation4], 1
    %2844 = vsyncpa [#allocation13], 1

</llo_original>
